<compile_context>
chip_gen: v7x
topology: tpu7x:2x2x1
jax: 0.10.0
libtpu: 0.0.40
codegen_flags: <defaults>
</compile_context>

<pallas_src>
import functools

import jax
import jax.numpy as jnp
from jax import lax
from jax.experimental import pallas as pl
from jax.experimental.pallas import tpu as pltpu


# ----------------------------------------------------------------------------
# Fused kernel: conv1x1 + ReLU + ConvTranspose2d (output-phase decomposition)
# ----------------------------------------------------------------------------
def _decoder_block_kernel(x_ref, w1_ref, b1_ref, wf_ref, bt_ref, o_ref, xpad_ref,
                          *, H, W, HP, WP, PT, PL, need_bot, need_l, need_r,
                          row_offsets, dx_union):
    # x_ref : (Nb, Cin, H*W)            input block (NCHW, spatial flattened)
    # w1_ref: (Cin, Cmid)     bf16      1x1 conv weight
    # b1_ref: (1, Cmid)       f32       1x1 conv bias
    # wf_ref: (s, Kfold, s*Cout) bf16   pre-folded transposed-conv weights
    # bt_ref: (1, s*Cout)     f32       transposed-conv bias tiled per col phase
    # o_ref : (Nb, HP, s, WP, s*Cout)   phase-separated output block
    # xpad_ref: (Nb, Hpad, Wpad, Cmid)  bf16 VMEM scratch (padded intermediate)
    nb = x_ref.shape[0]
    cmid = w1_ref.shape[-1]
    s_cout = o_ref.shape[-1]
    hpad, wpad = xpad_ref.shape[1], xpad_ref.shape[2]
    cdt = xpad_ref.dtype

    # ---- zero only the halo strips that the transposed conv actually reads ---
    if PT > 0:
        xpad_ref[:, :PT, :, :] = jnp.zeros((nb, PT, wpad, cmid), cdt)
    if need_bot > 0:
        xpad_ref[:, PT + H:PT + H + need_bot, :, :] = jnp.zeros(
            (nb, need_bot, wpad, cmid), cdt)
    if need_l > 0:
        xpad_ref[:, :, PL - need_l:PL, :] = jnp.zeros((nb, hpad, need_l, cmid), cdt)
    if need_r > 0:
        xpad_ref[:, :, PL + W:PL + W + need_r, :] = jnp.zeros(
            (nb, hpad, need_r, cmid), cdt)

    # ---- 1x1 conv + bias + ReLU (contract over Cin; x stays NCHW) ------------
    b1 = b1_ref[...]                                   # (1, Cmid) f32
    w1 = w1_ref[...]                                   # (Cin, Cmid) bf16
    for n in range(nb):                                # small static unroll
        m = lax.dot_general(x_ref[n].astype(cdt), w1,
                            dimension_numbers=(((0,), (0,)), ((), ())),
                            preferred_element_type=jnp.float32)   # (H*W, Cmid)
        m = jnp.maximum(m + b1, 0.0)                   # bias + ReLU in f32
        xpad_ref[n, PT:PT + H, PL:PL + W, :] = m.reshape(H, W, cmid).astype(cdt)

    # ---- transposed conv: one folded-K, lane-dense (N = s*Cout) matmul per
    #      output-row parity, shared across all column phases and images -------
    bt = bt_ref[...]                                   # (1, s*Cout) f32
    for i, cys in enumerate(row_offsets):              # static unroll over s
        slabs = []
        for cy in cys:
            for dx in dx_union:
                slabs.append(xpad_ref[:, PT + cy:PT + cy + HP,
                                      PL + dx:PL + dx + WP, :])
        lhs = slabs[0] if len(slabs) == 1 else jnp.concatenate(slabs, axis=-1)
        lhs = lhs.reshape(nb * HP * WP, lhs.shape[-1])             # (M, Kfold)
        y = jnp.dot(lhs, wf_ref[i], preferred_element_type=jnp.float32) + bt
        o_ref[:, :, i, :, :] = y.reshape(nb, HP, WP, s_cout).astype(o_ref.dtype)


# ----------------------------------------------------------------------------
# Static planning helpers (pure Python, run at trace time)
# ----------------------------------------------------------------------------
def _round_up(v, m):
    return ((v + m - 1) // m) * m


def _make_plan(k, s, p, H, W, HP, WP):
    """Tap tables and halo geometry for the output-phase decomposition."""
    row_taps = [[(ky, (i + p - ky) // s) for ky in range(k) if (i + p - ky) % s == 0]
                for i in range(s)]
    col_taps = [[(kx, (j + p - kx) // s) for kx in range(k) if (j + p - kx) % s == 0]
                for j in range(s)]
    dx_union = sorted({dx for taps in col_taps for (_, dx) in taps}) or [0]
    t_row = max(1, max(len(rt) for rt in row_taps))
    row_offsets = []
    for rt in row_taps:
        offs = [cy for (_, cy) in rt]
        fill = offs[0] if offs else 0          # dummy slots pair with zero weights
        row_offsets.append(tuple(offs + [fill] * (t_row - len(offs))))
    all_cy = [cy for offs in row_offsets for cy in offs]
    PT = max(0, -min(all_cy))
    need_bot = max(0, max(all_cy) + HP - H)
    need_l = max(0, -min(dx_union))
    need_r = max(0, max(dx_union) + WP - W)
    PL = _round_up(need_l, 8) if need_l > 0 else 0   # sublane-align interior write
    Hpad = PT + H + need_bot
    Wpad = _round_up(PL + W + need_r, 8)
    return dict(row_taps=row_taps, dx_union=tuple(dx_union), t_row=t_row,
                row_offsets=tuple(row_offsets), PT=PT, need_bot=need_bot,
                need_l=need_l, need_r=need_r, PL=PL, Hpad=Hpad, Wpad=Wpad)


def _fold_weights(wt, plan, k, s, p, dtype):
    """Pre-fold ConvTranspose2d weights: one lane-dense (Kfold, s*Cout) matrix per
    output-row parity, zero where a (cy, dx) tap does not feed a column phase."""
    cmid, cout = wt.shape[2], wt.shape[3]
    dx_union = plan["dx_union"]
    t_col = len(dx_union)
    kfold = plan["t_row"] * t_col * cmid
    wf = jnp.zeros((s, kfold, s * cout), wt.dtype)
    for i, rt in enumerate(plan["row_taps"]):
        for r, (ky, _cy) in enumerate(rt):
            for d, dx in enumerate(dx_union):
                t = r * t_col + d
                for j in range(s):
                    kx = j + p - s * dx
                    if 0 <= kx < k:
                        wf = wf.at[i, t * cmid:(t + 1) * cmid,
                                   j * cout:(j + 1) * cout].set(wt[ky, kx])
    return wf.astype(dtype)


def _pick_batch_block(n, per_image_bytes, budget=8 * 1024 * 1024, max_nb=8):
    """Batch elements per grid step: amortize per-step overhead while keeping
    >= 2 grid steps (pipelining / both v7x TCs) inside a conservative VMEM cap."""
    cands = [nb for nb in range(1, min(n, max_nb) + 1)
             if n % nb == 0 and nb * per_image_bytes <= budget] or [1]
    multi = [nb for nb in cands if n // nb >= 2]
    return max(multi) if multi else max(cands)


# ----------------------------------------------------------------------------
# Wrapper (NCHW in / NCHW out, matching the PyTorch module)
# ----------------------------------------------------------------------------
def decoder_block_forward(params, x_nchw, *, k, s, p, op=0,
                          compute_dtype=jnp.bfloat16):
    w1, b1, wt, bt = params["w1"], params["b1"], params["wt"], params["bt"]
    N, Cin, H, W = x_nchw.shape
    Cmid = w1.shape[1]
    Cout = wt.shape[-1]

    Hout = (H - 1) * s - 2 * p + k + op
    Wout = (W - 1) * s - 2 * p + k + op
    if Hout % s or Wout % s:
        # TODO(synk): phases with unequal row/col counts (Hout % s != 0) need
        # per-phase output trimming; standard decoder configs never hit this.
        raise NotImplementedError("Hout/Wout must be divisible by the stride")
    HP, WP = Hout // s, Wout // s

    plan = _make_plan(k, s, p, H, W, HP, WP)
    wf = _fold_weights(wt, plan, k, s, p, compute_dtype)    # (s, Kfold, s*Cout)
    Kfold = wf.shape[1]

    itemsize = jnp.dtype(x_nchw.dtype).itemsize
    per_image = (2 * Cin * H * W * itemsize                  # input  (dbl-buffered)
                 + 2 * Hout * Wout * Cout * itemsize         # output (dbl-buffered)
                 + plan["Hpad"] * plan["Wpad"] * Cmid * jnp.dtype(compute_dtype).itemsize)
    Nb = _pick_batch_block(N, per_image)

    x3 = x_nchw.reshape(N, Cin, H * W)        # free reshape; no NCHW->NHWC HBM pass
    w1c = w1.astype(compute_dtype)
    b1_2d = b1.reshape(1, Cmid).astype(jnp.float32)
    bt_2d = jnp.tile(bt.reshape(1, Cout), (1, s)).astype(jnp.float32)  # (1, s*Cout)

    kernel = functools.partial(
        _decoder_block_kernel, H=H, W=W, HP=HP, WP=WP,
        PT=plan["PT"], PL=plan["PL"], need_bot=plan["need_bot"],
        need_l=plan["need_l"], need_r=plan["need_r"],
        row_offsets=plan["row_offsets"], dx_union=plan["dx_union"])

    # TODO(synk): for large spatial inputs add an output-row tile grid axis with
    # an input-row halo and re-size blocks against v7x's 64 MiB VMEM; decoder
    # blocks run on deep (small H/W) features so a per-batch-block fits easily.
    out5 = pl.pallas_call(
        kernel,
        out_shape=jax.ShapeDtypeStruct((N, HP, s, WP, s * Cout), x_nchw.dtype),
        grid=(N // Nb,),
        in_specs=[
            pl.BlockSpec((Nb, Cin, H * W), lambda n: (n, 0, 0)),
            pl.BlockSpec((Cin, Cmid), lambda n: (0, 0)),
            pl.BlockSpec((1, Cmid), lambda n: (0, 0)),
            pl.BlockSpec((s, Kfold, s * Cout), lambda n: (0, 0, 0)),
            pl.BlockSpec((1, s * Cout), lambda n: (0, 0)),
        ],
        out_specs=pl.BlockSpec((Nb, HP, s, WP, s * Cout),
                               lambda n: (n, 0, 0, 0, 0)),
        scratch_shapes=[
            pltpu.VMEM((Nb, plan["Hpad"], plan["Wpad"], Cmid), compute_dtype)],
        compiler_params=pltpu.CompilerParams(
            dimension_semantics=("parallel",),
            vmem_limit_bytes=64 * 1024 * 1024),
    )(x3, w1c, b1_2d, wf, bt_2d)

    # Free row-major reshape (oy = s*q + i, ox = s*u + j), then NHWC -> NCHW.
    y = out5.reshape(N, Hout, Wout, Cout)
    return jnp.transpose(y, (0, 3, 1, 2))


# ----------------------------------------------------------------------------
# Parameters & reference
# ----------------------------------------------------------------------------
def init_params(key, ch_in, ch_mid, ch_out, k):
    k1, k2, k3, k4 = jax.random.split(key, 4)
    w1 = (2.0 / ch_in) ** 0.5 * jax.random.normal(k1, (ch_in, ch_mid), jnp.float32)
    b1 = jax.random.uniform(k2, (ch_mid,), jnp.float32, -0.1, 0.1)
    # PyTorch ConvTranspose2d weight (ch_mid, ch_out, k, k), stored (k, k, ch_mid, ch_out).
    wt = (2.0 / (ch_mid * k * k)) ** 0.5 * jax.random.normal(
        k3, (k, k, ch_mid, ch_out), jnp.float32)
    bt = jax.random.uniform(k4, (ch_out,), jnp.float32, -0.1, 0.1)
    return {"w1": w1, "b1": b1, "wt": wt, "bt": bt}


def reference_forward(params, x_nchw, *, k, s, p, op=0):
    xh = jnp.transpose(x_nchw, (0, 2, 3, 1))
    mid = jnp.maximum(
        jnp.einsum("nhwc,cd->nhwd", xh, params["w1"],
                   precision=lax.Precision.HIGHEST) + params["b1"], 0.0)
    pad = ((k - 1 - p, k - 1 - p + op), (k - 1 - p, k - 1 - p + op))
    ref = lax.conv_general_dilated(
        mid, params["wt"][::-1, ::-1], window_strides=(1, 1), padding=pad,
        lhs_dilation=(s, s), rhs_dilation=(1, 1),
        dimension_numbers=("NHWC", "HWIO", "NHWC"),
        precision=lax.Precision.HIGHEST) + params["bt"]
    return jnp.transpose(ref, (0, 3, 1, 2))


if __name__ == "__main__":
    configs = [
        # (N, Cin, Cmid, Cout, H, W, k, s, p, op)
        (2, 128, 64, 64, 16, 16, 4, 2, 1, 0),   # standard 2x-upsampling block
        (4, 64, 32, 32, 16, 16, 4, 4, 0, 0),    # 4x non-overlapping upsample
    ]
    key = jax.random.PRNGKey(0)
    for cfg in configs:
        N, CIN, CMID, COUT, H, W, K, S, P, OP = cfg
        key, pkey, xkey = jax.random.split(key, 3)
        params = init_params(pkey, CIN, CMID, COUT, K)
        x = jax.random.normal(xkey, (N, CIN, H, W), jnp.float32)

        fwd = jax.jit(functools.partial(decoder_block_forward, k=K, s=S, p=P, op=OP))
        y = fwd(params, x)
        jax.block_until_ready(y)

        Hout = (H - 1) * S - 2 * P + K + OP
        Wout = (W - 1) * S - 2 * P + K + OP
        assert y.shape == (N, COUT, Hout, Wout), y.shape

        ref = reference_forward(params, x, k=K, s=S, p=P, op=OP)
        err = float(jnp.max(jnp.abs(y - ref)))
        assert err < 5e-2, f"config {cfg}: max abs err {err}"
    print("KERNEL_OK")
</pallas_src>

<mosaic_0001>
module attributes {stable_mosaic.version = 11 : i64} {
  func.func @_decoder_block_kernel(%arg0: i32, %arg1: memref<1x128x256xf32, #tpu.memory_space<vmem>>, %arg2: memref<128x64xbf16, #tpu.memory_space<vmem>>, %arg3: memref<1x64xf32, #tpu.memory_space<vmem>>, %arg4: memref<2x384x128xbf16, #tpu.memory_space<vmem>>, %arg5: memref<1x128xf32, #tpu.memory_space<vmem>>, %arg6: memref<1x16x2x16x128xf32, #tpu.memory_space<vmem>>, %arg7: memref<1x18x32x64xbf16, #tpu.memory_space<vmem>>) attributes {dimension_semantics = [#tpu.dimension_semantics<parallel>], iteration_bounds = array<i64: 2>, scalar_prefetch = 0 : i64, scratch_operands = 1 : i64, tpu.core_type = #tpu.core_type<tc>, window_params = [{transform_indices = @transform_0, window_bounds = array<i64: 1, 128, 256>}, {pipeline_mode = #tpu.pipeline_mode<synchronous>, transform_indices = @transform_1, window_bounds = array<i64: 128, 64>}, {pipeline_mode = #tpu.pipeline_mode<synchronous>, transform_indices = @transform_2, window_bounds = array<i64: 1, 64>}, {pipeline_mode = #tpu.pipeline_mode<synchronous>, transform_indices = @transform_3, window_bounds = array<i64: 2, 384, 128>}, {pipeline_mode = #tpu.pipeline_mode<synchronous>, transform_indices = @transform_4, window_bounds = array<i64: 1, 128>}, {transform_indices = @transform_5, window_bounds = array<i64: 1, 16, 2, 16, 128>}]} {
    %cst = arith.constant 0.000000e+00 : bf16
    %0 = vector.broadcast %cst : bf16 to vector<1x1x32x64xbf16>
    %c0 = arith.constant 0 : index
    %c0_0 = arith.constant 0 : index
    %c0_1 = arith.constant 0 : index
    %c0_2 = arith.constant 0 : index
    %1 = vector.load %arg7[%c0, %c0_0, %c0_1, %c0_2] : memref<1x18x32x64xbf16, #tpu.memory_space<vmem>>, vector<1x1x32x64xbf16>
    tpu.vector_store %arg7[%c0, %c0_0, %c0_1, %c0_2], %0 {strides = array<i32>} : memref<1x18x32x64xbf16, #tpu.memory_space<vmem>>, vector<1x1x32x64xbf16>,
    %cst_3 = arith.constant 0.000000e+00 : bf16
    %2 = vector.broadcast %cst_3 : bf16 to vector<1x1x32x64xbf16>
    %c0_4 = arith.constant 0 : index
    %c17 = arith.constant 17 : index
    %c0_5 = arith.constant 0 : index
    %c0_6 = arith.constant 0 : index
    %3 = vector.load %arg7[%c0_4, %c17, %c0_5, %c0_6] : memref<1x18x32x64xbf16, #tpu.memory_space<vmem>>, vector<1x1x32x64xbf16>
    tpu.vector_store %arg7[%c0_4, %c17, %c0_5, %c0_6], %2 {strides = array<i32>} : memref<1x18x32x64xbf16, #tpu.memory_space<vmem>>, vector<1x1x32x64xbf16>,
    %cst_7 = arith.constant 0.000000e+00 : bf16
    %4 = vector.broadcast %cst_7 : bf16 to vector<1x18x1x64xbf16>
    %c0_8 = arith.constant 0 : index
    %c0_9 = arith.constant 0 : index
    %c7 = arith.constant 7 : index
    %c0_10 = arith.constant 0 : index
    %5 = vector.load %arg7[%c0_8, %c0_9, %c7, %c0_10] : memref<1x18x32x64xbf16, #tpu.memory_space<vmem>>, vector<1x18x1x64xbf16>
    tpu.vector_store %arg7[%c0_8, %c0_9, %c7, %c0_10], %4 {strides = array<i32>} : memref<1x18x32x64xbf16, #tpu.memory_space<vmem>>, vector<1x18x1x64xbf16>,
    %cst_11 = arith.constant 0.000000e+00 : bf16
    %6 = vector.broadcast %cst_11 : bf16 to vector<1x18x1x64xbf16>
    %c0_12 = arith.constant 0 : index
    %c0_13 = arith.constant 0 : index
    %c24 = arith.constant 24 : index
    %c0_14 = arith.constant 0 : index
    %7 = vector.load %arg7[%c0_12, %c0_13, %c24, %c0_14] : memref<1x18x32x64xbf16, #tpu.memory_space<vmem>>, vector<1x18x1x64xbf16>
    tpu.vector_store %arg7[%c0_12, %c0_13, %c24, %c0_14], %6 {strides = array<i32>} : memref<1x18x32x64xbf16, #tpu.memory_space<vmem>>, vector<1x18x1x64xbf16>,
    %c0_15 = arith.constant 0 : index
    %c0_16 = arith.constant 0 : index
    %8 = vector.load %arg3[%c0_15, %c0_16] : memref<1x64xf32, #tpu.memory_space<vmem>>, vector<1x64xf32>
    %c0_17 = arith.constant 0 : index
    %c0_18 = arith.constant 0 : index
    %9 = vector.load %arg2[%c0_17, %c0_18] : memref<128x64xbf16, #tpu.memory_space<vmem>>, vector<128x64xbf16>
    %c0_19 = arith.constant 0 : index
    %c0_20 = arith.constant 0 : index
    %c0_21 = arith.constant 0 : index
    %10 = vector.load %arg1[%c0_19, %c0_20, %c0_21] : memref<1x128x256xf32, #tpu.memory_space<vmem>>, vector<1x128x256xf32>
    %11 = vector.shape_cast %10 : vector<1x128x256xf32> to vector<128x256xf32>
    %12 = arith.truncf %11 : vector<128x256xf32> to vector<128x256xbf16>
    %cst_22 = arith.constant dense<0.000000e+00> : vector<256x64xf32>
    %13 = tpu.matmul %12, %9, %cst_22 {dimension_numbers = #tpu.dot_dimension_numbers<[0], [0], [1], [1], [0, 1, 1, 1], [], []>} : vector<128x256xbf16>, vector<128x64xbf16>, vector<256x64xf32> -> vector<256x64xf32>
    %14 = vector.broadcast %8 : vector<1x64xf32> to vector<256x64xf32>
    %15 = arith.addf %13, %14 : vector<256x64xf32>
    %cst_23 = arith.constant 0.000000e+00 : f32
    %16 = vector.broadcast %cst_23 : f32 to vector<256x64xf32>
    %17 = arith.maximumf %15, %16 : vector<256x64xf32>
    %18 = vector.shape_cast %17 : vector<256x64xf32> to vector<16x16x64xf32>
    %19 = arith.truncf %18 : vector<16x16x64xf32> to vector<16x16x64xbf16>
    %c0_24 = arith.constant 0 : index
    %c1 = arith.constant 1 : index
    %c8 = arith.constant 8 : index
    %c0_25 = arith.constant 0 : index
    %20 = vector.load %arg7[%c0_24, %c1, %c8, %c0_25] : memref<1x18x32x64xbf16, #tpu.memory_space<vmem>>, vector<1x16x16x64xbf16>
    %21 = vector.shape_cast %20 : vector<1x16x16x64xbf16> to vector<16x16x64xbf16>
    %22 = vector.shape_cast %19 : vector<16x16x64xbf16> to vector<1x16x16x64xbf16>
    tpu.vector_store %arg7[%c0_24, %c1, %c8, %c0_25], %22 {strides = array<i32>} : memref<1x18x32x64xbf16, #tpu.memory_space<vmem>>, vector<1x16x16x64xbf16>,
    %c0_26 = arith.constant 0 : index
    %c0_27 = arith.constant 0 : index
    %23 = vector.load %arg5[%c0_26, %c0_27] : memref<1x128xf32, #tpu.memory_space<vmem>>, vector<1x128xf32>
    %c0_28 = arith.constant 0 : index
    %c1_29 = arith.constant 1 : index
    %c7_30 = arith.constant 7 : index
    %c0_31 = arith.constant 0 : index
    %24 = vector.load %arg7[%c0_28, %c1_29, %c7_30, %c0_31] : memref<1x18x32x64xbf16, #tpu.memory_space<vmem>>, vector<1x16x16x64xbf16>
    %c0_32 = arith.constant 0 : index
    %c1_33 = arith.constant 1 : index
    %c8_34 = arith.constant 8 : index
    %c0_35 = arith.constant 0 : index
    %25 = vector.load %arg7[%c0_32, %c1_33, %c8_34, %c0_35] : memref<1x18x32x64xbf16, #tpu.memory_space<vmem>>, vector<1x16x16x64xbf16>
    %c0_36 = arith.constant 0 : index
    %c1_37 = arith.constant 1 : index
    %c9 = arith.constant 9 : index
    %c0_38 = arith.constant 0 : index
    %26 = vector.load %arg7[%c0_36, %c1_37, %c9, %c0_38] : memref<1x18x32x64xbf16, #tpu.memory_space<vmem>>, vector<1x16x16x64xbf16>
    %c0_39 = arith.constant 0 : index
    %c0_40 = arith.constant 0 : index
    %c7_41 = arith.constant 7 : index
    %c0_42 = arith.constant 0 : index
    %27 = vector.load %arg7[%c0_39, %c0_40, %c7_41, %c0_42] : memref<1x18x32x64xbf16, #tpu.memory_space<vmem>>, vector<1x16x16x64xbf16>
    %c0_43 = arith.constant 0 : index
    %c0_44 = arith.constant 0 : index
    %c8_45 = arith.constant 8 : index
    %c0_46 = arith.constant 0 : index
    %28 = vector.load %arg7[%c0_43, %c0_44, %c8_45, %c0_46] : memref<1x18x32x64xbf16, #tpu.memory_space<vmem>>, vector<1x16x16x64xbf16>
    %c0_47 = arith.constant 0 : index
    %c0_48 = arith.constant 0 : index
    %c9_49 = arith.constant 9 : index
    %c0_50 = arith.constant 0 : index
    %29 = vector.load %arg7[%c0_47, %c0_48, %c9_49, %c0_50] : memref<1x18x32x64xbf16, #tpu.memory_space<vmem>>, vector<1x16x16x64xbf16>
    %30 = tpu.concatenate %24, %25, %26, %27, %28, %29 in 3 : vector<1x16x16x64xbf16>, vector<1x16x16x64xbf16>, vector<1x16x16x64xbf16>, vector<1x16x16x64xbf16>, vector<1x16x16x64xbf16>, vector<1x16x16x64xbf16> -> vector<1x16x16x384xbf16>
    %31 = vector.shape_cast %30 : vector<1x16x16x384xbf16> to vector<256x384xbf16>
    %c0_51 = arith.constant 0 : index
    %c0_52 = arith.constant 0 : index
    %c0_53 = arith.constant 0 : index
    %32 = vector.load %arg4[%c0_51, %c0_52, %c0_53] : memref<2x384x128xbf16, #tpu.memory_space<vmem>>, vector<1x384x128xbf16>
    %33 = vector.shape_cast %32 : vector<1x384x128xbf16> to vector<384x128xbf16>
    %cst_54 = arith.constant dense<0.000000e+00> : vector<256x128xf32>
    %34 = tpu.matmul %31, %33, %cst_54 {dimension_numbers = #tpu.dot_dimension_numbers<[1], [0], [0], [1], [0, 0, 1, 1], [], []>} : vector<256x384xbf16>, vector<384x128xbf16>, vector<256x128xf32> -> vector<256x128xf32>
    %35 = vector.broadcast %23 : vector<1x128xf32> to vector<256x128xf32>
    %36 = arith.addf %34, %35 : vector<256x128xf32>
    %37 = vector.shape_cast %36 : vector<256x128xf32> to vector<1x16x16x128xf32>
    %c0_55 = arith.constant 0 : index
    %c0_56 = arith.constant 0 : index
    %c0_57 = arith.constant 0 : index
    %c0_58 = arith.constant 0 : index
    %c0_59 = arith.constant 0 : index
    %38 = vector.load %arg6[%c0_55, %c0_56, %c0_57, %c0_58, %c0_59] : memref<1x16x2x16x128xf32, #tpu.memory_space<vmem>>, vector<1x16x1x16x128xf32>
    %39 = vector.shape_cast %38 : vector<1x16x1x16x128xf32> to vector<1x16x16x128xf32>
    %40 = vector.shape_cast %37 : vector<1x16x16x128xf32> to vector<1x16x1x16x128xf32>
    tpu.vector_store %arg6[%c0_55, %c0_56, %c0_57, %c0_58, %c0_59], %40 {strides = array<i32>} : memref<1x16x2x16x128xf32, #tpu.memory_space<vmem>>, vector<1x16x1x16x128xf32>,
    %c0_60 = arith.constant 0 : index
    %c2 = arith.constant 2 : index
    %c7_61 = arith.constant 7 : index
    %c0_62 = arith.constant 0 : index
    %41 = vector.load %arg7[%c0_60, %c2, %c7_61, %c0_62] : memref<1x18x32x64xbf16, #tpu.memory_space<vmem>>, vector<1x16x16x64xbf16>
    %c0_63 = arith.constant 0 : index
    %c2_64 = arith.constant 2 : index
    %c8_65 = arith.constant 8 : index
    %c0_66 = arith.constant 0 : index
    %42 = vector.load %arg7[%c0_63, %c2_64, %c8_65, %c0_66] : memref<1x18x32x64xbf16, #tpu.memory_space<vmem>>, vector<1x16x16x64xbf16>
    %c0_67 = arith.constant 0 : index
    %c2_68 = arith.constant 2 : index
    %c9_69 = arith.constant 9 : index
    %c0_70 = arith.constant 0 : index
    %43 = vector.load %arg7[%c0_67, %c2_68, %c9_69, %c0_70] : memref<1x18x32x64xbf16, #tpu.memory_space<vmem>>, vector<1x16x16x64xbf16>
    %c0_71 = arith.constant 0 : index
    %c1_72 = arith.constant 1 : index
    %c7_73 = arith.constant 7 : index
    %c0_74 = arith.constant 0 : index
    %44 = vector.load %arg7[%c0_71, %c1_72, %c7_73, %c0_74] : memref<1x18x32x64xbf16, #tpu.memory_space<vmem>>, vector<1x16x16x64xbf16>
    %c0_75 = arith.constant 0 : index
    %c1_76 = arith.constant 1 : index
    %c8_77 = arith.constant 8 : index
    %c0_78 = arith.constant 0 : index
    %45 = vector.load %arg7[%c0_75, %c1_76, %c8_77, %c0_78] : memref<1x18x32x64xbf16, #tpu.memory_space<vmem>>, vector<1x16x16x64xbf16>
    %c0_79 = arith.constant 0 : index
    %c1_80 = arith.constant 1 : index
    %c9_81 = arith.constant 9 : index
    %c0_82 = arith.constant 0 : index
    %46 = vector.load %arg7[%c0_79, %c1_80, %c9_81, %c0_82] : memref<1x18x32x64xbf16, #tpu.memory_space<vmem>>, vector<1x16x16x64xbf16>
    %47 = tpu.concatenate %41, %42, %43, %44, %45, %46 in 3 : vector<1x16x16x64xbf16>, vector<1x16x16x64xbf16>, vector<1x16x16x64xbf16>, vector<1x16x16x64xbf16>, vector<1x16x16x64xbf16>, vector<1x16x16x64xbf16> -> vector<1x16x16x384xbf16>
    %48 = vector.shape_cast %47 : vector<1x16x16x384xbf16> to vector<256x384xbf16>
    %c1_83 = arith.constant 1 : index
    %c0_84 = arith.constant 0 : index
    %c0_85 = arith.constant 0 : index
    %49 = vector.load %arg4[%c1_83, %c0_84, %c0_85] : memref<2x384x128xbf16, #tpu.memory_space<vmem>>, vector<1x384x128xbf16>
    %50 = vector.shape_cast %49 : vector<1x384x128xbf16> to vector<384x128xbf16>
    %cst_86 = arith.constant dense<0.000000e+00> : vector<256x128xf32>
    %51 = tpu.matmul %48, %50, %cst_86 {dimension_numbers = #tpu.dot_dimension_numbers<[1], [0], [0], [1], [0, 0, 1, 1], [], []>} : vector<256x384xbf16>, vector<384x128xbf16>, vector<256x128xf32> -> vector<256x128xf32>
    %52 = vector.broadcast %23 : vector<1x128xf32> to vector<256x128xf32>
    %53 = arith.addf %51, %52 : vector<256x128xf32>
    %54 = vector.shape_cast %53 : vector<256x128xf32> to vector<1x16x16x128xf32>
    %c0_87 = arith.constant 0 : index
    %c0_88 = arith.constant 0 : index
    %c1_89 = arith.constant 1 : index
    %c0_90 = arith.constant 0 : index
    %c0_91 = arith.constant 0 : index
    %55 = vector.load %arg6[%c0_87, %c0_88, %c1_89, %c0_90, %c0_91] : memref<1x16x2x16x128xf32, #tpu.memory_space<vmem>>, vector<1x16x1x16x128xf32>
    %56 = vector.shape_cast %55 : vector<1x16x1x16x128xf32> to vector<1x16x16x128xf32>
    %57 = vector.shape_cast %54 : vector<1x16x16x128xf32> to vector<1x16x1x16x128xf32>
    tpu.vector_store %arg6[%c0_87, %c0_88, %c1_89, %c0_90, %c0_91], %57 {strides = array<i32>} : memref<1x16x2x16x128xf32, #tpu.memory_space<vmem>>, vector<1x16x1x16x128xf32>,
    return
  }
  func.func @transform_0(%arg0: i32) -> (i32, i32, i32) {
    %c0_i32 = arith.constant 0 : i32
    %c0_i32_0 = arith.constant 0 : i32
    %c0_i32_1 = arith.constant 0 : i32
    return %arg0, %c0_i32, %c0_i32_0 : i32, i32, i32
  }
  func.func @transform_1(%arg0: i32) -> (i32, i32) {
    %c0_i32 = arith.constant 0 : i32
    %c0_i32_0 = arith.constant 0 : i32
    %c0_i32_1 = arith.constant 0 : i32
    return %c0_i32, %c0_i32_0 : i32, i32
  }
  func.func @transform_2(%arg0: i32) -> (i32, i32) {
    %c0_i32 = arith.constant 0 : i32
    %c0_i32_0 = arith.constant 0 : i32
    %c0_i32_1 = arith.constant 0 : i32
    return %c0_i32, %c0_i32_0 : i32, i32
  }
  func.func @transform_3(%arg0: i32) -> (i32, i32, i32) {
    %c0_i32 = arith.constant 0 : i32
    %c0_i32_0 = arith.constant 0 : i32
    %c0_i32_1 = arith.constant 0 : i32
    %c0_i32_2 = arith.constant 0 : i32
    return %c0_i32, %c0_i32_0, %c0_i32_1 : i32, i32, i32
  }
  func.func @transform_4(%arg0: i32) -> (i32, i32) {
    %c0_i32 = arith.constant 0 : i32
    %c0_i32_0 = arith.constant 0 : i32
    %c0_i32_1 = arith.constant 0 : i32
    return %c0_i32, %c0_i32_0 : i32, i32
  }
  func.func @transform_5(%arg0: i32) -> (i32, i32, i32, i32, i32) {
    %c0_i32 = arith.constant 0 : i32
    %c0_i32_0 = arith.constant 0 : i32
    %c0_i32_1 = arith.constant 0 : i32
    %c0_i32_2 = arith.constant 0 : i32
    %c0_i32_3 = arith.constant 0 : i32
    return %arg0, %c0_i32, %c0_i32_0, %c0_i32_1, %c0_i32_2 : i32, i32, i32, i32, i32
  }
}

</mosaic_0001>

<llo_original>
// kernel: decoder_block_forward.1
$region0: #{decoder_block_forward.1}
  #allocation0 [shape = 'u32[]', space=smem, size = 0x4, offset = 0x4, fixed_abs, tag = 'smem constant byte address 0x4 - core index']
  #allocation1 [shape = 'u32[144,128]{1,0:T(1,128)}', space=vmem, size = 0x12000, scoped, tag = 'internal scratch']
  #allocation2 [shape = 'bf16[1,18,32,64]{3,2,1,0:T(16,128)(2,1)}', space=vmem, size = 0x24000, scoped, tag = 'scratch operand']
  %s0 = inlined_call_operand.hbm [shape: f32[2,128,256], index: 0, kind: input, shape index: {}]
  %s1 = inlined_call_operand.hbm [shape: bf16[128,64], index: 1, kind: input, shape index: {}]
  %s2 = inlined_call_operand.hbm [shape: f32[1,64], index: 2, kind: input, shape index: {}]
  %s3 = inlined_call_operand.hbm [shape: bf16[2,384,128], index: 3, kind: input, shape index: {}]
  %s4 = inlined_call_operand.hbm [shape: f32[1,128], index: 4, kind: input, shape index: {}]
  %s5 = inlined_call_operand.hbm [shape: f32[2,16,2,16,128], index: 5, kind: output, shape index: {}]
  %s6 = sld [smem:[#allocation0]]
  $region73: #{decoder_block_forward.1} parent=0
    _
  %s8 = ssub.s32 1, %s6
  %s9 = scalar_select 0, %s8, %s6
  $region1: #{decoder_block_forward.1} parent=0
    #allocation3 [shape = 'u8[262144]{0}', space=vmem, size = 0x40000, scoped, tag = 'input window, operand 0']
    #allocation4 [shape = 's32[2]{0}', space=sflag, size = 0x8, scoped, tag = 'scoped memory for decoder_block_forward.1']
    #allocation5 [shape = 's32[2]{0}', space=sflag, size = 0x8, scoped, tag = 'scoped memory for decoder_block_forward.1']
    #allocation6 [shape = 'u8[32768]{0}', space=vmem, size = 0x8000, scoped, tag = 'input window, operand 1, single buffered']
    #allocation7 [shape = 's32[1]{0}', space=sflag, size = 0x4, scoped, tag = 'scoped memory for decoder_block_forward.1']
    #allocation8 [shape = 'u8[512]{0}', space=vmem, size = 0x400, scoped, tag = 'input window, operand 2, single buffered']
    #allocation9 [shape = 'u8[196608]{0}', space=vmem, size = 0x30000, scoped, tag = 'input window, operand 3, single buffered']
    #allocation10 [shape = 's32[1]{0}', space=sflag, size = 0x4, scoped, tag = 'scoped memory for decoder_block_forward.1']
    #allocation11 [shape = 'u8[512]{0}', space=vmem, size = 0x400, scoped, tag = 'input window, operand 4, single buffered']
    #allocation12 [shape = 'u8[524288]{0}', space=vmem, size = 0x80000, scoped, tag = 'output window, operand 0']
    %10 = vsyncpa [#allocation4], 0
    %s11 = scalar_lea.sflag [#allocation4], 1
    %12 = vsyncpa %s11, 0
    %13 = vsyncpa [#allocation7], 0
    %14 = vsyncpa [#allocation10], 0
    %15 = vsyncpa [#allocation5], 0
    %s16 = scalar_lea.sflag [#allocation5], 1
    %17 = vsyncpa %s16, 0
    loop: start=0, step=1, limit=4
    $region2: #{decoder_block_forward.1} parent=1 // loop_pre_header
      _
    $region3: #{decoder_block_forward.1} parent=1 // loop_header
      %s19 = sphi 0, %s23
      %p20 = scmp.ge.s32.totalorder %s19, 4
      %s29 = sphi 0, %s31
      %s32 = sphi 0, %s29
      %s33 = sphi 0, %s32
      %s49 = sphi 0, %s33
      %s53 = sphi 0, %s53
      %s55 = sphi 0, %s53
      %s56 = sphi 0, %s55
      %s70 = sphi 0, %s56
      %s74 = sphi 0, %s74
      %s76 = sphi 0, %s74
      %s77 = sphi 0, %s76
      %s91 = sphi 0, %s77
      %s95 = sphi 0, %s95
      %s97 = sphi 0, %s95
      %s98 = sphi 0, %s97
      %s112 = sphi 0, %s98
      %s116 = sphi 0, %s116
      %s118 = sphi 0, %s116
      %s119 = sphi 0, %s118
      %s133 = sphi 0, %s119
      %s139 = sphi 0, %s141
      %s142 = sphi 0, %s139
      %s143 = sphi 0, %s142
      %s159 = sphi 0, %s143
    $region4: #{decoder_block_forward.1} parent=1 // loop_header_branch
      %22 = sbr.rel (%p20) target = $region8
    $region5: #{decoder_block_forward.1} parent=1 // loop_body
      %s24 = ssub.s32 %s19, 1
      %s25 = ssub.s32 %s19, 2
      %s26 = sadd.s32 %s19, 1
      %s27 = ssub.s32 %s19, %s26
      %p28 = scmp.eq.s32.totalorder %s27, 0
      %s30 = sadd.s32 %s29, 1
      %s31 = scalar_select %p28, %s29, %s30
      %p34 = pneg %p28
      %p35 = scmp.eq.s32.totalorder %s19, 1
      %p36 = por %p34, %p35
      %p37 = scmp.ne.s32.totalorder %s29, %s32
      %p38 = scmp.eq.s32.totalorder %s19, 0
      %p39 = por %p37, %p38
      %p40 = scmp.ne.s32.totalorder %s29, %s32
      %p41 = scmp.eq.s32.totalorder %s24, 1
      %p42 = por %p40, %p41
      %p43 = scmp.ne.s32.totalorder %s32, %s33
      %p44 = scmp.eq.s32.totalorder %s24, 0
      %p45 = por %p43, %p44
      %p46 = scmp.ne.s32.totalorder %s32, %s33
      %p47 = scmp.eq.s32.totalorder %s25, 1
      %p48 = por %p46, %p47
      %p50 = scmp.ne.s32.totalorder %s33, %s49
      %p51 = scmp.eq.s32.totalorder %s25, 0
      %p52 = por %p50, %p51
      %s54 = sadd.s32 %s53, 1
      %p57 = scmp.eq.s32.totalorder %s19, 1
      %p58 = scmp.ne.s32.totalorder %s53, %s55
      %p59 = scmp.eq.s32.totalorder %s19, 0
      %p60 = por %p58, %p59
      %p61 = scmp.ne.s32.totalorder %s53, %s55
      %p62 = scmp.eq.s32.totalorder %s24, 1
      %p63 = por %p61, %p62
      %p64 = scmp.ne.s32.totalorder %s55, %s56
      %p65 = scmp.eq.s32.totalorder %s24, 0
      %p66 = por %p64, %p65
      %p67 = scmp.ne.s32.totalorder %s55, %s56
      %p68 = scmp.eq.s32.totalorder %s25, 1
      %p69 = por %p67, %p68
      %p71 = scmp.ne.s32.totalorder %s56, %s70
      %p72 = scmp.eq.s32.totalorder %s25, 0
      %p73 = por %p71, %p72
      %s75 = sadd.s32 %s74, 1
      %p78 = scmp.eq.s32.totalorder %s19, 1
      %p79 = scmp.ne.s32.totalorder %s74, %s76
      %p80 = scmp.eq.s32.totalorder %s19, 0
      %p81 = por %p79, %p80
      %p82 = scmp.ne.s32.totalorder %s74, %s76
      %p83 = scmp.eq.s32.totalorder %s24, 1
      %p84 = por %p82, %p83
      %p85 = scmp.ne.s32.totalorder %s76, %s77
      %p86 = scmp.eq.s32.totalorder %s24, 0
      %p87 = por %p85, %p86
      %p88 = scmp.ne.s32.totalorder %s76, %s77
      %p89 = scmp.eq.s32.totalorder %s25, 1
      %p90 = por %p88, %p89
      %p92 = scmp.ne.s32.totalorder %s77, %s91
      %p93 = scmp.eq.s32.totalorder %s25, 0
      %p94 = por %p92, %p93
      %s96 = sadd.s32 %s95, 1
      %p99 = scmp.eq.s32.totalorder %s19, 1
      %p100 = scmp.ne.s32.totalorder %s95, %s97
      %p101 = scmp.eq.s32.totalorder %s19, 0
      %p102 = por %p100, %p101
      %p103 = scmp.ne.s32.totalorder %s95, %s97
      %p104 = scmp.eq.s32.totalorder %s24, 1
      %p105 = por %p103, %p104
      %p106 = scmp.ne.s32.totalorder %s97, %s98
      %p107 = scmp.eq.s32.totalorder %s24, 0
      %p108 = por %p106, %p107
      %p109 = scmp.ne.s32.totalorder %s97, %s98
      %p110 = scmp.eq.s32.totalorder %s25, 1
      %p111 = por %p109, %p110
      %p113 = scmp.ne.s32.totalorder %s98, %s112
      %p114 = scmp.eq.s32.totalorder %s25, 0
      %p115 = por %p113, %p114
      %s117 = sadd.s32 %s116, 1
      %p120 = scmp.eq.s32.totalorder %s19, 1
      %p121 = scmp.ne.s32.totalorder %s116, %s118
      %p122 = scmp.eq.s32.totalorder %s19, 0
      %p123 = por %p121, %p122
      %p124 = scmp.ne.s32.totalorder %s116, %s118
      %p125 = scmp.eq.s32.totalorder %s24, 1
      %p126 = por %p124, %p125
      %p127 = scmp.ne.s32.totalorder %s118, %s119
      %p128 = scmp.eq.s32.totalorder %s24, 0
      %p129 = por %p127, %p128
      %p130 = scmp.ne.s32.totalorder %s118, %s119
      %p131 = scmp.eq.s32.totalorder %s25, 1
      %p132 = por %p130, %p131
      %p134 = scmp.ne.s32.totalorder %s119, %s133
      %p135 = scmp.eq.s32.totalorder %s25, 0
      %p136 = por %p134, %p135
      %s137 = ssub.s32 %s19, %s26
      %p138 = scmp.eq.s32.totalorder %s137, 0
      %s140 = sadd.s32 %s139, 1
      %s141 = scalar_select %p138, %s139, %s140
      %p144 = pneg %p138
      %p145 = scmp.eq.s32.totalorder %s19, 1
      %p146 = por %p144, %p145
      %p147 = scmp.ne.s32.totalorder %s139, %s142
      %p148 = scmp.eq.s32.totalorder %s19, 0
      %p149 = por %p147, %p148
      %p150 = scmp.ne.s32.totalorder %s139, %s142
      %p151 = scmp.eq.s32.totalorder %s24, 1
      %p152 = por %p150, %p151
      %p153 = scmp.ne.s32.totalorder %s142, %s143
      %p154 = scmp.eq.s32.totalorder %s24, 0
      %p155 = por %p153, %p154
      %p156 = scmp.ne.s32.totalorder %s142, %s143
      %p157 = scmp.eq.s32.totalorder %s25, 1
      %p158 = por %p156, %p157
      %p160 = scmp.ne.s32.totalorder %s143, %s159
      %p161 = scmp.eq.s32.totalorder %s25, 0
      %p162 = por %p160, %p161
      %p163 = scmp.le.s32.totalorder 1, %s19
      %p164 = scmp.lt.s32.totalorder %s19, 3
      %p165 = pnand %p163, %p164
      %p166 = pneg %p165
      // Predicated region
      $region9: #{decoder_block_forward.1} parent=5 // pred_check
        _
      $region10: #{decoder_block_forward.1} parent=5 // pred_check_branch
        %168 = sbr.rel (%p165) target = $region12
      $region11: #{decoder_block_forward.1} parent=5 // pred_region
        %s169 = ssub.s32 %s19, 1
        // Predicated region
        $region13: #{decoder_block_forward.1} parent=11 // pred_check
          %p170 = pneg %p66
        $region14: #{decoder_block_forward.1} parent=11 // pred_check_branch
          %172 = sbr.rel (%p170) target = $region16
        $region15: #{decoder_block_forward.1} parent=11 // pred_region
          %s174 = ssub.s32 1024, 1024
          %175 = vsyncadd [#allocation7], %s174
          %s176 = sshll.u32 [#allocation6], 4
          %s177 = int_to_ptr.vmem [resolvable:$true] %s176
          %182 = dma.hbm_to_vmem [thread:$0]  %s1, 1024, %s177, [#allocation7], 64, 64, 4
        $region16: #{decoder_block_forward.1} parent=11 // pred_fallthru
          _
        // Predicated region
        $region17: #{decoder_block_forward.1} parent=11 // pred_check
          %p183 = pneg %p87
        $region18: #{decoder_block_forward.1} parent=11 // pred_check_branch
          %185 = sbr.rel (%p183) target = $region20
        $region19: #{decoder_block_forward.1} parent=11 // pred_region
          %s187 = ssub.s32 16, 16
          %188 = vsyncadd [#allocation7], %s187
          %s190 = sshll.u32 [#allocation8], 4
          %s191 = int_to_ptr.vmem [resolvable:$true] %s190
          %193 = dma.hbm_to_vmem [thread:$0]  %s2, 16, %s191, [#allocation7]
        $region20: #{decoder_block_forward.1} parent=11 // pred_fallthru
          _
        // Predicated region
        $region21: #{decoder_block_forward.1} parent=11 // pred_check
          %p194 = pneg %p108
        $region22: #{decoder_block_forward.1} parent=11 // pred_check_branch
          %196 = sbr.rel (%p194) target = $region24
        $region23: #{decoder_block_forward.1} parent=11 // pred_region
          %s198 = ssub.s32 6144, 6144
          %199 = vsyncadd [#allocation10], %s198
          %s200 = sshll.u32 [#allocation9], 4
          %s201 = int_to_ptr.vmem [resolvable:$true] %s200
          %206 = dma.hbm_to_vmem [thread:$0]  %s3, 6144, %s201, [#allocation10], 64, 64, 4
        $region24: #{decoder_block_forward.1} parent=11 // pred_fallthru
          _
        // Predicated region
        $region25: #{decoder_block_forward.1} parent=11 // pred_check
          %p207 = pneg %p129
        $region26: #{decoder_block_forward.1} parent=11 // pred_check_branch
          %209 = sbr.rel (%p207) target = $region28
        $region27: #{decoder_block_forward.1} parent=11 // pred_region
          %s211 = ssub.s32 16, 16
          %212 = vsyncadd [#allocation10], %s211
          %s214 = sshll.u32 [#allocation11], 4
          %s215 = int_to_ptr.vmem [resolvable:$true] %s214
          %217 = dma.hbm_to_vmem [thread:$0]  %s4, 16, %s215, [#allocation10]
        $region28: #{decoder_block_forward.1} parent=11 // pred_fallthru
          _
      $region12: #{decoder_block_forward.1} parent=5 // pred_fallthru
        _
      %p218 = scmp.lt.s32.totalorder %s19, 2
      // Predicated region
      $region29: #{decoder_block_forward.1} parent=5 // pred_check
        %p219 = pneg %p218
      $region30: #{decoder_block_forward.1} parent=5 // pred_check_branch
        %221 = sbr.rel (%p219) target = $region32
      $region31: #{decoder_block_forward.1} parent=5 // pred_region
        // Predicated region
        $region33: #{decoder_block_forward.1} parent=31 // pred_check
          %p222 = pneg %p39
        $region34: #{decoder_block_forward.1} parent=31 // pred_check_branch
          %224 = sbr.rel (%p222) target = $region36
        $region35: #{decoder_block_forward.1} parent=31 // pred_region
          %s225 = sand.u32 %s29, 1
          %s226 = scalar_lea.sflag [#allocation4], %s225
          %s227 = sand.u32 %s29, 1
          %s228 = smul.addr %s227, 256
          %s229 = scalar_lea.vmem [#allocation3], %s228
          %s231 = ssub.s32 4096, 4096
          %232 = vsyncadd %s226, %s231
          %s233 = smul.addr %s19, 32
          %s234 = smul.addr %s233, 128
          %s235 = scalar_lea.hbm %s0, %s234
          %s236 = sshll.u32 %s229, 4
          %s237 = int_to_ptr.vmem [resolvable:$true] %s236
          %242 = dma.hbm_to_vmem [thread:$0]  %s235, 4096, %s237, %s226, 256, 256, 16
        $region36: #{decoder_block_forward.1} parent=31 // pred_fallthru
          _
      $region32: #{decoder_block_forward.1} parent=5 // pred_fallthru
        _
      %p243 = scmp.le.s32.totalorder 1, %s19
      %p244 = scmp.lt.s32.totalorder %s19, 3
      %p245 = pnand %p243, %p244
      %p246 = pneg %p245
      // Predicated region
      $region37: #{decoder_block_forward.1} parent=5 // pred_check
        _
      $region38: #{decoder_block_forward.1} parent=5 // pred_check_branch
        %248 = sbr.rel (%p245) target = $region40
      $region39: #{decoder_block_forward.1} parent=5 // pred_region
        %s249 = ssub.s32 %s19, 1
        %s250 = sand.u32 %s32, 1
        %s251 = scalar_lea.sflag [#allocation4], %s250
        %s252 = sand.u32 %s32, 1
        %s253 = smul.addr %s252, 256
        %s254 = scalar_lea.vmem [#allocation3], %s253
        // Predicated region
        $region41: #{decoder_block_forward.1} parent=39 // pred_check
          %p255 = pneg %p45
        $region42: #{decoder_block_forward.1} parent=39 // pred_check_branch
          %257 = sbr.rel (%p255) target = $region44
        $region43: #{decoder_block_forward.1} parent=39 // pred_region
          %258 = dma.done %s251, 4096
        $region44: #{decoder_block_forward.1} parent=39 // pred_fallthru
          _
        // Predicated region
        $region45: #{decoder_block_forward.1} parent=39 // pred_check
          %p259 = pneg %p66
        $region46: #{decoder_block_forward.1} parent=39 // pred_check_branch
          %261 = sbr.rel (%p259) target = $region48
        $region47: #{decoder_block_forward.1} parent=39 // pred_region
          %262 = dma.done [#allocation7], 1024
        $region48: #{decoder_block_forward.1} parent=39 // pred_fallthru
          _
        // Predicated region
        $region49: #{decoder_block_forward.1} parent=39 // pred_check
          %p263 = pneg %p87
        $region50: #{decoder_block_forward.1} parent=39 // pred_check_branch
          %265 = sbr.rel (%p263) target = $region52
        $region51: #{decoder_block_forward.1} parent=39 // pred_region
          %266 = dma.done [#allocation7], 16
        $region52: #{decoder_block_forward.1} parent=39 // pred_fallthru
          _
        // Predicated region
        $region53: #{decoder_block_forward.1} parent=39 // pred_check
          %p267 = pneg %p108
        $region54: #{decoder_block_forward.1} parent=39 // pred_check_branch
          %269 = sbr.rel (%p267) target = $region56
        $region55: #{decoder_block_forward.1} parent=39 // pred_region
          %270 = dma.done [#allocation10], 6144
        $region56: #{decoder_block_forward.1} parent=39 // pred_fallthru
          _
        // Predicated region
        $region57: #{decoder_block_forward.1} parent=39 // pred_check
          %p271 = pneg %p129
        $region58: #{decoder_block_forward.1} parent=39 // pred_check_branch
          %273 = sbr.rel (%p271) target = $region60
        $region59: #{decoder_block_forward.1} parent=39 // pred_region
          %274 = dma.done [#allocation10], 16
        $region60: #{decoder_block_forward.1} parent=39 // pred_fallthru
          _
        %s275 = sand.u32 %s32, 1
        %s276 = scalar_lea.sflag [#allocation4], %s275
        %s277 = sand.u32 %s32, 1
        %s278 = smul.addr %s277, 256
        %s279 = scalar_lea.vmem [#allocation3], %s278
        %p280 = pneg %p45
        %p281 = pneg %p42
        %p282 = pneg %p66
        %p283 = pneg %p63
        %p284 = pneg %p87
        %p285 = pneg %p84
        %p286 = pneg %p108
        %p287 = pneg %p105
        %p288 = pneg %p129
        %p289 = pneg %p126
        %p290 = pneg %p155
        %p291 = pneg %p152
        %s292 = sand.u32 %s142, 1
        %s293 = scalar_lea.sflag [#allocation5], %s292
        %s294 = sand.u32 %s142, 1
        %s295 = smul.addr %s294, 512
        %s296 = scalar_lea.vmem [#allocation12], %s295
        %vm298 = vcmask 523264
        %299 = vst.msk [vmem:[#allocation2] sm:$0xff] %vm298, 0
        %300 = vst.msk [vmem:[#allocation2 + $0x8] sm:$0xff] %vm298, 0
        %s301 = scalar_lea.vmem [#allocation2], 272
        %302 = vst.msk [vmem:[%s301] sm:$0xff] %vm298, 0
        %303 = vst.msk [vmem:[%s301 + $0x8] sm:$0xff] %vm298, 0
        %vm304 = vcmask 519171
        %vm305 = vsmask.f32 7950
        %vm306 = vmand %vm304, %vm305
        %v307 = vld [vmem:[#allocation2] sm:$0x8]
        %v308 = vsel %vm306, 0, %v307
        %309 = vst [vmem:[#allocation2] sm:$0x8] %v308
        %v310 = vld [vmem:[#allocation2 + $0x10] sm:$0x8]
        %v311 = vsel %vm306, 0, %v310
        %312 = vst [vmem:[#allocation2 + $0x10] sm:$0x8] %v311
        %v313 = vld [vmem:[#allocation2 + $0x20] sm:$0x8]
        %v314 = vsel %vm306, 0, %v313
        %315 = vst [vmem:[#allocation2 + $0x20] sm:$0x8] %v314
        %v316 = vld [vmem:[#allocation2 + $0x30] sm:$0x8]
        %v317 = vsel %vm306, 0, %v316
        %318 = vst [vmem:[#allocation2 + $0x30] sm:$0x8] %v317
        %v319 = vld [vmem:[#allocation2 + $0x40] sm:$0x8]
        %v320 = vsel %vm306, 0, %v319
        %321 = vst [vmem:[#allocation2 + $0x40] sm:$0x8] %v320
        %v322 = vld [vmem:[#allocation2 + $0x50] sm:$0x8]
        %v323 = vsel %vm306, 0, %v322
        %324 = vst [vmem:[#allocation2 + $0x50] sm:$0x8] %v323
        %v325 = vld [vmem:[#allocation2 + $0x60] sm:$0x8]
        %v326 = vsel %vm306, 0, %v325
        %327 = vst [vmem:[#allocation2 + $0x60] sm:$0x8] %v326
        %v328 = vld [vmem:[#allocation2 + $0x70] sm:$0x8]
        %v329 = vsel %vm306, 0, %v328
        %330 = vst [vmem:[#allocation2 + $0x70] sm:$0x8] %v329
        %v331 = vld [vmem:[#allocation2 + $0x80] sm:$0x8]
        %v332 = vsel %vm306, 0, %v331
        %333 = vst [vmem:[#allocation2 + $0x80] sm:$0x8] %v332
        %v334 = vld [vmem:[#allocation2 + $0x90] sm:$0x8]
        %v335 = vsel %vm306, 0, %v334
        %336 = vst [vmem:[#allocation2 + $0x90] sm:$0x8] %v335
        %v337 = vld [vmem:[#allocation2 + $0xa0] sm:$0x8]
        %v338 = vsel %vm306, 0, %v337
        %339 = vst [vmem:[#allocation2 + $0xa0] sm:$0x8] %v338
        %v340 = vld [vmem:[#allocation2 + $0xb0] sm:$0x8]
        %v341 = vsel %vm306, 0, %v340
        %342 = vst [vmem:[#allocation2 + $0xb0] sm:$0x8] %v341
        %v343 = vld [vmem:[#allocation2 + $0xc0] sm:$0x8]
        %v344 = vsel %vm306, 0, %v343
        %345 = vst [vmem:[#allocation2 + $0xc0] sm:$0x8] %v344
        %v346 = vld [vmem:[#allocation2 + $0xd0] sm:$0x8]
        %v347 = vsel %vm306, 0, %v346
        %348 = vst [vmem:[#allocation2 + $0xd0] sm:$0x8] %v347
        %v349 = vld [vmem:[#allocation2 + $0xe0] sm:$0x8]
        %v350 = vsel %vm306, 0, %v349
        %351 = vst [vmem:[#allocation2 + $0xe0] sm:$0x8] %v350
        %v352 = vld [vmem:[#allocation2 + $0xf0] sm:$0x8]
        %v353 = vsel %vm306, 0, %v352
        %354 = vst [vmem:[#allocation2 + $0xf0] sm:$0x8] %v353
        %v355 = vld [vmem:[#allocation2 + $0x100] sm:$0x8]
        %v356 = vsel %vm306, 0, %v355
        %357 = vst [vmem:[#allocation2 + $0x100] sm:$0x8] %v356
        %v358 = vld [vmem:[#allocation2 + $0x110] sm:$0x8]
        %v359 = vsel %vm306, 0, %v358
        %360 = vst [vmem:[#allocation2 + $0x110] sm:$0x8] %v359
        %vm361 = vcmask 520196
        %vm362 = vsmask.f32 4352
        %vm363 = vmand %vm361, %vm362
        %v364 = vld [vmem:[#allocation2 + $0x8] sm:$0x10]
        %v365 = vsel %vm363, 0, %v364
        %366 = vst [vmem:[#allocation2 + $0x8] sm:$0x10] %v365
        %v367 = vld [vmem:[#allocation2 + $0x18] sm:$0x10]
        %v368 = vsel %vm363, 0, %v367
        %369 = vst [vmem:[#allocation2 + $0x18] sm:$0x10] %v368
        %v370 = vld [vmem:[#allocation2 + $0x28] sm:$0x10]
        %v371 = vsel %vm363, 0, %v370
        %372 = vst [vmem:[#allocation2 + $0x28] sm:$0x10] %v371
        %v373 = vld [vmem:[#allocation2 + $0x38] sm:$0x10]
        %v374 = vsel %vm363, 0, %v373
        %375 = vst [vmem:[#allocation2 + $0x38] sm:$0x10] %v374
        %v376 = vld [vmem:[#allocation2 + $0x48] sm:$0x10]
        %v377 = vsel %vm363, 0, %v376
        %378 = vst [vmem:[#allocation2 + $0x48] sm:$0x10] %v377
        %v379 = vld [vmem:[#allocation2 + $0x58] sm:$0x10]
        %v380 = vsel %vm363, 0, %v379
        %381 = vst [vmem:[#allocation2 + $0x58] sm:$0x10] %v380
        %v382 = vld [vmem:[#allocation2 + $0x68] sm:$0x10]
        %v383 = vsel %vm363, 0, %v382
        %384 = vst [vmem:[#allocation2 + $0x68] sm:$0x10] %v383
        %v385 = vld [vmem:[#allocation2 + $0x78] sm:$0x10]
        %v386 = vsel %vm363, 0, %v385
        %387 = vst [vmem:[#allocation2 + $0x78] sm:$0x10] %v386
        %v388 = vld [vmem:[#allocation2 + $0x88] sm:$0x10]
        %v389 = vsel %vm363, 0, %v388
        %390 = vst [vmem:[#allocation2 + $0x88] sm:$0x10] %v389
        %v391 = vld [vmem:[#allocation2 + $0x98] sm:$0x10]
        %v392 = vsel %vm363, 0, %v391
        %393 = vst [vmem:[#allocation2 + $0x98] sm:$0x10] %v392
        %v394 = vld [vmem:[#allocation2 + $0xa8] sm:$0x10]
        %v395 = vsel %vm363, 0, %v394
        %396 = vst [vmem:[#allocation2 + $0xa8] sm:$0x10] %v395
        %v397 = vld [vmem:[#allocation2 + $0xb8] sm:$0x10]
        %v398 = vsel %vm363, 0, %v397
        %399 = vst [vmem:[#allocation2 + $0xb8] sm:$0x10] %v398
        %v400 = vld [vmem:[#allocation2 + $0xc8] sm:$0x10]
        %v401 = vsel %vm363, 0, %v400
        %402 = vst [vmem:[#allocation2 + $0xc8] sm:$0x10] %v401
        %v403 = vld [vmem:[#allocation2 + $0xd8] sm:$0x10]
        %v404 = vsel %vm363, 0, %v403
        %405 = vst [vmem:[#allocation2 + $0xd8] sm:$0x10] %v404
        %v406 = vld [vmem:[#allocation2 + $0xe8] sm:$0x10]
        %v407 = vsel %vm363, 0, %v406
        %408 = vst [vmem:[#allocation2 + $0xe8] sm:$0x10] %v407
        %v409 = vld [vmem:[#allocation2 + $0xf8] sm:$0x10]
        %v410 = vsel %vm363, 0, %v409
        %411 = vst [vmem:[#allocation2 + $0xf8] sm:$0x10] %v410
        %v412 = vld [vmem:[#allocation2 + $0x108] sm:$0x10]
        %v413 = vsel %vm363, 0, %v412
        %414 = vst [vmem:[#allocation2 + $0x108] sm:$0x10] %v413
        %v415 = vld [vmem:[#allocation2 + $0x118] sm:$0x10]
        %v416 = vsel %vm363, 0, %v415
        %417 = vst [vmem:[#allocation2 + $0x118] sm:$0x10] %v416
        %v418 = vld [vmem:[#allocation8] sm:$0x1]
        %v419 = vld [vmem:[#allocation6] sm:$0xf]
        %v420 = vld [vmem:[#allocation6 + $0x4] sm:$0xf]
        %v421 = vld [vmem:[#allocation6 + $0x8] sm:$0xf]
        %v422 = vld [vmem:[#allocation6 + $0xc] sm:$0xf]
        %v423 = vld [vmem:[#allocation6 + $0x10] sm:$0xf]
        %v424 = vld [vmem:[#allocation6 + $0x14] sm:$0xf]
        %v425 = vld [vmem:[#allocation6 + $0x18] sm:$0xf]
        %v426 = vld [vmem:[#allocation6 + $0x1c] sm:$0xf]
        %v427 = vld [vmem:[#allocation6 + $0x20] sm:$0xf]
        %v428 = vld [vmem:[#allocation6 + $0x24] sm:$0xf]
        %v429 = vld [vmem:[#allocation6 + $0x28] sm:$0xf]
        %v430 = vld [vmem:[#allocation6 + $0x2c] sm:$0xf]
        %v431 = vld [vmem:[#allocation6 + $0x30] sm:$0xf]
        %v432 = vld [vmem:[#allocation6 + $0x34] sm:$0xf]
        %v433 = vld [vmem:[#allocation6 + $0x38] sm:$0xf]
        %v434 = vld [vmem:[#allocation6 + $0x3c] sm:$0xf]
        %v435 = vld [vmem:[%s254] sm:$0xff]
        %v436 = vld [vmem:[%s254 + $0x8] sm:$0xff]
        %v437 = vld [vmem:[%s254 + $0x10] sm:$0xff]
        %v438 = vld [vmem:[%s254 + $0x18] sm:$0xff]
        %v439 = vld [vmem:[%s254 + $0x20] sm:$0xff]
        %v440 = vld [vmem:[%s254 + $0x28] sm:$0xff]
        %v441 = vld [vmem:[%s254 + $0x30] sm:$0xff]
        %v442 = vld [vmem:[%s254 + $0x38] sm:$0xff]
        %v443 = vld [vmem:[%s254 + $0x40] sm:$0xff]
        %v444 = vld [vmem:[%s254 + $0x48] sm:$0xff]
        %v445 = vld [vmem:[%s254 + $0x50] sm:$0xff]
        %v446 = vld [vmem:[%s254 + $0x58] sm:$0xff]
        %v447 = vld [vmem:[%s254 + $0x60] sm:$0xff]
        %v448 = vld [vmem:[%s254 + $0x68] sm:$0xff]
        %v449 = vld [vmem:[%s254 + $0x70] sm:$0xff]
        %v450 = vld [vmem:[%s254 + $0x78] sm:$0xff]
        %v451 = vld [vmem:[%s254 + $0x80] sm:$0xff]
        %v452 = vld [vmem:[%s254 + $0x88] sm:$0xff]
        %v453 = vld [vmem:[%s254 + $0x90] sm:$0xff]
        %v454 = vld [vmem:[%s254 + $0x98] sm:$0xff]
        %v455 = vld [vmem:[%s254 + $0xa0] sm:$0xff]
        %v456 = vld [vmem:[%s254 + $0xa8] sm:$0xff]
        %v457 = vld [vmem:[%s254 + $0xb0] sm:$0xff]
        %v458 = vld [vmem:[%s254 + $0xb8] sm:$0xff]
        %v459 = vld [vmem:[%s254 + $0xc0] sm:$0xff]
        %v460 = vld [vmem:[%s254 + $0xc8] sm:$0xff]
        %v461 = vld [vmem:[%s254 + $0xd0] sm:$0xff]
        %v462 = vld [vmem:[%s254 + $0xd8] sm:$0xff]
        %v463 = vld [vmem:[%s254 + $0xe0] sm:$0xff]
        %v464 = vld [vmem:[%s254 + $0xe8] sm:$0xff]
        %v465 = vld [vmem:[%s254 + $0xf0] sm:$0xff]
        %v466 = vld [vmem:[%s254 + $0xf8] sm:$0xff]
        %v467 = vpack.c.bf16 %v437, %v435
        %v468 = vpack.c.bf16 %v438, %v436
        %v469 = vpack.c.bf16 %v441, %v439
        %v470 = vpack.c.bf16 %v442, %v440
        %v471 = vpack.c.bf16 %v445, %v443
        %v472 = vpack.c.bf16 %v446, %v444
        %v473 = vpack.c.bf16 %v449, %v447
        %v474 = vpack.c.bf16 %v450, %v448
        %v475 = vpack.c.bf16 %v453, %v451
        %v476 = vpack.c.bf16 %v454, %v452
        %v477 = vpack.c.bf16 %v457, %v455
        %v478 = vpack.c.bf16 %v458, %v456
        %v479 = vpack.c.bf16 %v461, %v459
        %v480 = vpack.c.bf16 %v462, %v460
        %v481 = vpack.c.bf16 %v465, %v463
        %v482 = vpack.c.bf16 %v466, %v464
        %v484 = vlaneseq
        %v485 = vshrl.u32 %v484, 7
        %v486 = vsub.s32 0, %v485
        %v487 = vrot.slane %v418, %v486
        %489 = vxpose.xlu0.c.b16.start [1/8] %v467, 128
        %490 = vxpose.xlu0.c.b16.cont [2/8] %v469, 128
        %491 = vxpose.xlu0.c.b16.cont [3/8] %v471, 128
        %492 = vxpose.xlu0.c.b16.cont [4/8] %v473, 128
        %493 = vxpose.xlu0.c.b16.cont [5/8] %v475, 128
        %494 = vxpose.xlu0.c.b16.cont [6/8] %v477, 128
        %495 = vxpose.xlu0.c.b16.cont [7/8] %v479, 128
        %496 = vxpose.xlu0.c.b16.end [8/8] %v481, 128
        %v497 = vpop.trf.xlu0
        %v498 = vpop.trf.xlu0
        %v499 = vpop.trf.xlu0
        %v500 = vpop.trf.xlu0
        %v501 = vpop.trf.xlu0
        %v502 = vpop.trf.xlu0
        %v503 = vpop.trf.xlu0
        %v504 = vpop.trf.xlu0
        %505 = vxpose.xlu0.c.b16.start [1/8] %v468, 128
        %506 = vxpose.xlu0.c.b16.cont [2/8] %v470, 128
        %507 = vxpose.xlu0.c.b16.cont [3/8] %v472, 128
        %508 = vxpose.xlu0.c.b16.cont [4/8] %v474, 128
        %509 = vxpose.xlu0.c.b16.cont [5/8] %v476, 128
        %510 = vxpose.xlu0.c.b16.cont [6/8] %v478, 128
        %511 = vxpose.xlu0.c.b16.cont [7/8] %v480, 128
        %512 = vxpose.xlu0.c.b16.end [8/8] %v482, 128
        %v513 = vpop.trf.xlu0
        %v514 = vpop.trf.xlu0
        %v515 = vpop.trf.xlu0
        %v516 = vpop.trf.xlu0
        %v517 = vpop.trf.xlu0
        %v518 = vpop.trf.xlu0
        %v519 = vpop.trf.xlu0
        %v520 = vpop.trf.xlu0
        %v537 = vunpack.c.l.b16 %v419
        %v538 = vunpack.c.l.b16 %v420
        %v539 = vunpack.c.l.b16 %v421
        %v540 = vunpack.c.l.b16 %v422
        %v541 = vunpack.c.l.b16 %v423
        %v542 = vunpack.c.l.b16 %v424
        %v543 = vunpack.c.l.b16 %v425
        %v544 = vunpack.c.l.b16 %v426
        %v545 = vunpack.c.l.b16 %v427
        %v546 = vunpack.c.l.b16 %v428
        %v547 = vunpack.c.l.b16 %v429
        %v548 = vunpack.c.l.b16 %v430
        %v549 = vunpack.c.l.b16 %v431
        %v550 = vunpack.c.l.b16 %v432
        %v551 = vunpack.c.l.b16 %v433
        %v552 = vunpack.c.l.b16 %v434
        %v553 = vpack.c.b16 %v538, %v537
        %v554 = vpack.c.b16 %v540, %v539
        %v555 = vpack.c.b16 %v542, %v541
        %v556 = vpack.c.b16 %v544, %v543
        %v557 = vpack.c.b16 %v546, %v545
        %v558 = vpack.c.b16 %v548, %v547
        %v559 = vpack.c.b16 %v550, %v549
        %v560 = vpack.c.b16 %v552, %v551
        %569 = vmatprep.subr.bf16.mxu0 0
        %570 = vmatpush1.bf16.msra.mxu0 %v553
        %571 = vmatprep.subr.bf16.mxu0 0
        %572 = vmatpush1.bf16.msra.mxu0 %v554
        %573 = vmatprep.subr.bf16.mxu0 0
        %574 = vmatpush1.bf16.msra.mxu0 %v555
        %575 = vmatprep.subr.bf16.mxu0 0
        %576 = vmatpush1.bf16.msra.mxu0 %v556
        %577 = vmatprep.subr.bf16.mxu0 0
        %578 = vmatpush1.bf16.msra.mxu0 %v557
        %579 = vmatprep.subr.bf16.mxu0 0
        %580 = vmatpush1.bf16.msra.mxu0 %v558
        %581 = vmatprep.subr.bf16.mxu0 0
        %582 = vmatpush1.bf16.msra.mxu0 %v559
        %583 = vmatprep.subr.bf16.mxu0 0
        %584 = vmatpush1.bf16.msra.mxu0 %v560
        %585 = vmatprep.subr.bf16.mxu0 0
        %586 = vmatpush1.bf16.msra.mxu0 0
        %587 = vmatprep.subr.bf16.mxu0 0
        %588 = vmatpush1.bf16.msra.mxu0 0
        %589 = vmatprep.subr.bf16.mxu0 0
        %590 = vmatpush1.bf16.msra.mxu0 0
        %591 = vmatprep.subr.bf16.mxu0 0
        %592 = vmatpush1.bf16.msra.mxu0 0
        %593 = vmatprep.subr.bf16.mxu0 0
        %594 = vmatpush1.bf16.msra.mxu0 0
        %595 = vmatprep.subr.bf16.mxu0 0
        %596 = vmatpush1.bf16.msra.mxu0 0
        %597 = vmatprep.subr.bf16.mxu0 0
        %598 = vmatpush1.bf16.msra.mxu0 0
        %599 = vmatprep.subr.bf16.mxu0 0
        %600 = vmatpush1.bf16.msra.mxu0 0
        %601 = vmatprep.mubr.bf16.mxu0 0
        %602 = vmatmul.mubr.bf16.gmra.mrb[0].mxu0 %v497
        %v603 = vpop.f32.mrb[0].mxu0
        %v604 = vadd.f32 %v487, %v603
        %v605 = vpop.f32.mrb[0].mxu0
        %v606 = vpop.f32.mrb[0].mxu0
        %v607 = vadd.f32 %v487, %v606
        %v608 = vpop.f32.mrb[0].mxu0
        %609 = vmatprep.mubr.bf16.mxu0 0
        %610 = vmatmul.mubr.bf16.gmra.mrb[0].mxu0 %v498
        %v611 = vpop.f32.mrb[0].mxu0
        %v612 = vadd.f32 %v487, %v611
        %v613 = vpop.f32.mrb[0].mxu0
        %v614 = vpop.f32.mrb[0].mxu0
        %v615 = vadd.f32 %v487, %v614
        %v616 = vpop.f32.mrb[0].mxu0
        %617 = vmatprep.mubr.bf16.mxu0 0
        %618 = vmatmul.mubr.bf16.gmra.mrb[0].mxu0 %v499
        %v619 = vpop.f32.mrb[0].mxu0
        %v620 = vadd.f32 %v487, %v619
        %v621 = vpop.f32.mrb[0].mxu0
        %v622 = vpop.f32.mrb[0].mxu0
        %v623 = vadd.f32 %v487, %v622
        %v624 = vpop.f32.mrb[0].mxu0
        %625 = vmatprep.mubr.bf16.mxu0 0
        %626 = vmatmul.mubr.bf16.gmra.mrb[0].mxu0 %v500
        %v627 = vpop.f32.mrb[0].mxu0
        %v628 = vadd.f32 %v487, %v627
        %v629 = vpop.f32.mrb[0].mxu0
        %v630 = vpop.f32.mrb[0].mxu0
        %v631 = vadd.f32 %v487, %v630
        %v632 = vpop.f32.mrb[0].mxu0
        %633 = vmatprep.mubr.bf16.mxu0 0
        %634 = vmatmul.mubr.bf16.gmra.mrb[0].mxu0 %v501
        %v635 = vpop.f32.mrb[0].mxu0
        %v636 = vadd.f32 %v487, %v635
        %v637 = vpop.f32.mrb[0].mxu0
        %v638 = vpop.f32.mrb[0].mxu0
        %v639 = vadd.f32 %v487, %v638
        %v640 = vpop.f32.mrb[0].mxu0
        %641 = vmatprep.mubr.bf16.mxu0 0
        %642 = vmatmul.mubr.bf16.gmra.mrb[0].mxu0 %v502
        %v643 = vpop.f32.mrb[0].mxu0
        %v644 = vadd.f32 %v487, %v643
        %v645 = vpop.f32.mrb[0].mxu0
        %v646 = vpop.f32.mrb[0].mxu0
        %v647 = vadd.f32 %v487, %v646
        %v648 = vpop.f32.mrb[0].mxu0
        %649 = vmatprep.mubr.bf16.mxu0 0
        %650 = vmatmul.mubr.bf16.gmra.mrb[0].mxu0 %v503
        %v651 = vpop.f32.mrb[0].mxu0
        %v652 = vadd.f32 %v487, %v651
        %v653 = vpop.f32.mrb[0].mxu0
        %v654 = vpop.f32.mrb[0].mxu0
        %v655 = vadd.f32 %v487, %v654
        %v656 = vpop.f32.mrb[0].mxu0
        %657 = vmatprep.mubr.bf16.mxu0 0
        %658 = vmatmul.mubr.bf16.gmra.mrb[0].mxu0 %v504
        %v659 = vpop.f32.mrb[0].mxu0
        %v660 = vadd.f32 %v487, %v659
        %v661 = vpop.f32.mrb[0].mxu0
        %v662 = vpop.f32.mrb[0].mxu0
        %v663 = vadd.f32 %v487, %v662
        %v664 = vpop.f32.mrb[0].mxu0
        %665 = vmatprep.mubr.bf16.mxu0 0
        %666 = vmatmul.mubr.bf16.gmra.mrb[0].mxu0 %v513
        %v667 = vpop.f32.mrb[0].mxu0
        %v668 = vadd.f32 %v487, %v667
        %v669 = vpop.f32.mrb[0].mxu0
        %v670 = vpop.f32.mrb[0].mxu0
        %v671 = vadd.f32 %v487, %v670
        %v672 = vpop.f32.mrb[0].mxu0
        %673 = vmatprep.mubr.bf16.mxu0 0
        %674 = vmatmul.mubr.bf16.gmra.mrb[0].mxu0 %v514
        %v675 = vpop.f32.mrb[0].mxu0
        %v676 = vadd.f32 %v487, %v675
        %v677 = vpop.f32.mrb[0].mxu0
        %v678 = vpop.f32.mrb[0].mxu0
        %v679 = vadd.f32 %v487, %v678
        %v680 = vpop.f32.mrb[0].mxu0
        %681 = vmatprep.mubr.bf16.mxu0 0
        %682 = vmatmul.mubr.bf16.gmra.mrb[0].mxu0 %v515
        %v683 = vpop.f32.mrb[0].mxu0
        %v684 = vadd.f32 %v487, %v683
        %v685 = vpop.f32.mrb[0].mxu0
        %v686 = vpop.f32.mrb[0].mxu0
        %v687 = vadd.f32 %v487, %v686
        %v688 = vpop.f32.mrb[0].mxu0
        %689 = vmatprep.mubr.bf16.mxu0 0
        %690 = vmatmul.mubr.bf16.gmra.mrb[0].mxu0 %v516
        %v691 = vpop.f32.mrb[0].mxu0
        %v692 = vadd.f32 %v487, %v691
        %v693 = vpop.f32.mrb[0].mxu0
        %v694 = vpop.f32.mrb[0].mxu0
        %v695 = vadd.f32 %v487, %v694
        %v696 = vpop.f32.mrb[0].mxu0
        %697 = vmatprep.mubr.bf16.mxu0 0
        %698 = vmatmul.mubr.bf16.gmra.mrb[0].mxu0 %v517
        %v699 = vpop.f32.mrb[0].mxu0
        %v700 = vadd.f32 %v487, %v699
        %v701 = vpop.f32.mrb[0].mxu0
        %v702 = vpop.f32.mrb[0].mxu0
        %v703 = vadd.f32 %v487, %v702
        %v704 = vpop.f32.mrb[0].mxu0
        %705 = vmatprep.mubr.bf16.mxu0 0
        %706 = vmatmul.mubr.bf16.gmra.mrb[0].mxu0 %v518
        %v707 = vpop.f32.mrb[0].mxu0
        %v708 = vadd.f32 %v487, %v707
        %v709 = vpop.f32.mrb[0].mxu0
        %v710 = vpop.f32.mrb[0].mxu0
        %v711 = vadd.f32 %v487, %v710
        %v712 = vpop.f32.mrb[0].mxu0
        %713 = vmatprep.mubr.bf16.mxu0 0
        %714 = vmatmul.mubr.bf16.gmra.mrb[0].mxu0 %v519
        %v715 = vpop.f32.mrb[0].mxu0
        %v716 = vadd.f32 %v487, %v715
        %v717 = vpop.f32.mrb[0].mxu0
        %v718 = vpop.f32.mrb[0].mxu0
        %v719 = vadd.f32 %v487, %v718
        %v720 = vpop.f32.mrb[0].mxu0
        %721 = vmatprep.mubr.bf16.mxu0 0
        %722 = vmatmul.mubr.bf16.gmra.mrb[0].mxu0 %v520
        %v723 = vpop.f32.mrb[0].mxu0
        %v724 = vadd.f32 %v487, %v723
        %v725 = vpop.f32.mrb[0].mxu0
        %v726 = vpop.f32.mrb[0].mxu0
        %v727 = vadd.f32 %v487, %v726
        %v728 = vpop.f32.mrb[0].mxu0
        %729 = vdwg.mxu0
        %v730 = vmax.f32 %v604, 0.0
        %v731 = vmax.f32 %v607, 0.0
        %v732 = vmax.f32 %v612, 0.0
        %v733 = vmax.f32 %v615, 0.0
        %v734 = vmax.f32 %v620, 0.0
        %v735 = vmax.f32 %v623, 0.0
        %v736 = vmax.f32 %v628, 0.0
        %v737 = vmax.f32 %v631, 0.0
        %v738 = vmax.f32 %v636, 0.0
        %v739 = vmax.f32 %v639, 0.0
        %v740 = vmax.f32 %v644, 0.0
        %v741 = vmax.f32 %v647, 0.0
        %v742 = vmax.f32 %v652, 0.0
        %v743 = vmax.f32 %v655, 0.0
        %v744 = vmax.f32 %v660, 0.0
        %v745 = vmax.f32 %v663, 0.0
        %v746 = vmax.f32 %v668, 0.0
        %v747 = vmax.f32 %v671, 0.0
        %v748 = vmax.f32 %v676, 0.0
        %v749 = vmax.f32 %v679, 0.0
        %v750 = vmax.f32 %v684, 0.0
        %v751 = vmax.f32 %v687, 0.0
        %v752 = vmax.f32 %v692, 0.0
        %v753 = vmax.f32 %v695, 0.0
        %v754 = vmax.f32 %v700, 0.0
        %v755 = vmax.f32 %v703, 0.0
        %v756 = vmax.f32 %v708, 0.0
        %v757 = vmax.f32 %v711, 0.0
        %v758 = vmax.f32 %v716, 0.0
        %v759 = vmax.f32 %v719, 0.0
        %v760 = vmax.f32 %v724, 0.0
        %v761 = vmax.f32 %v727, 0.0
        %v762 = vpack.c.bf16 %v731, %v730
        %v763 = vpack.c.bf16 %v733, %v732
        %v764 = vpack.c.bf16 %v735, %v734
        %v765 = vpack.c.bf16 %v737, %v736
        %v766 = vpack.c.bf16 %v739, %v738
        %v767 = vpack.c.bf16 %v741, %v740
        %v768 = vpack.c.bf16 %v743, %v742
        %v769 = vpack.c.bf16 %v745, %v744
        %v770 = vpack.c.bf16 %v747, %v746
        %v771 = vpack.c.bf16 %v749, %v748
        %v772 = vpack.c.bf16 %v751, %v750
        %v773 = vpack.c.bf16 %v753, %v752
        %v774 = vpack.c.bf16 %v755, %v754
        %v775 = vpack.c.bf16 %v757, %v756
        %v776 = vpack.c.bf16 %v759, %v758
        %v777 = vpack.c.bf16 %v761, %v760
        %v794 = vrot.slane %v762, 4
        %v795 = vrot.slane %v763, 4
        %v796 = vrot.slane %v764, 4
        %v797 = vrot.slane %v765, 4
        %v798 = vrot.slane %v766, 4
        %v799 = vrot.slane %v767, 4
        %v800 = vrot.slane %v768, 4
        %v801 = vrot.slane %v769, 4
        %v802 = vrot.slane %v770, 4
        %v803 = vrot.slane %v771, 4
        %v804 = vrot.slane %v772, 4
        %v805 = vrot.slane %v773, 4
        %v806 = vrot.slane %v774, 4
        %v807 = vrot.slane %v775, 4
        %v808 = vrot.slane %v776, 4
        %v809 = vrot.slane %v777, 4
        %s826 = scalar_lea.vmem [#allocation2], 16
        %vm827 = vcmask 523268
        %828 = vst.msk [vmem:[%s826] sm:$0xf0] %vm827, %v794
        %vm829 = vcmask 519168
        %830 = vst.msk [vmem:[%s826 + $0x8] sm:$0xf] %vm829, %v794
        %831 = vst.msk [vmem:[%s826 + $0x10] sm:$0xf0] %vm827, %v795
        %832 = vst.msk [vmem:[%s826 + $0x18] sm:$0xf] %vm829, %v795
        %833 = vst.msk [vmem:[%s826 + $0x20] sm:$0xf0] %vm827, %v796
        %834 = vst.msk [vmem:[%s826 + $0x28] sm:$0xf] %vm829, %v796
        %835 = vst.msk [vmem:[%s826 + $0x30] sm:$0xf0] %vm827, %v797
        %836 = vst.msk [vmem:[%s826 + $0x38] sm:$0xf] %vm829, %v797
        %837 = vst.msk [vmem:[%s826 + $0x40] sm:$0xf0] %vm827, %v798
        %838 = vst.msk [vmem:[%s826 + $0x48] sm:$0xf] %vm829, %v798
        %839 = vst.msk [vmem:[%s826 + $0x50] sm:$0xf0] %vm827, %v799
        %840 = vst.msk [vmem:[%s826 + $0x58] sm:$0xf] %vm829, %v799
        %841 = vst.msk [vmem:[%s826 + $0x60] sm:$0xf0] %vm827, %v800
        %842 = vst.msk [vmem:[%s826 + $0x68] sm:$0xf] %vm829, %v800
        %843 = vst.msk [vmem:[%s826 + $0x70] sm:$0xf0] %vm827, %v801
        %844 = vst.msk [vmem:[%s826 + $0x78] sm:$0xf] %vm829, %v801
        %845 = vst.msk [vmem:[%s826 + $0x80] sm:$0xf0] %vm827, %v802
        %846 = vst.msk [vmem:[%s826 + $0x88] sm:$0xf] %vm829, %v802
        %847 = vst.msk [vmem:[%s826 + $0x90] sm:$0xf0] %vm827, %v803
        %848 = vst.msk [vmem:[%s826 + $0x98] sm:$0xf] %vm829, %v803
        %849 = vst.msk [vmem:[%s826 + $0xa0] sm:$0xf0] %vm827, %v804
        %850 = vst.msk [vmem:[%s826 + $0xa8] sm:$0xf] %vm829, %v804
        %851 = vst.msk [vmem:[%s826 + $0xb0] sm:$0xf0] %vm827, %v805
        %852 = vst.msk [vmem:[%s826 + $0xb8] sm:$0xf] %vm829, %v805
        %853 = vst.msk [vmem:[%s826 + $0xc0] sm:$0xf0] %vm827, %v806
        %854 = vst.msk [vmem:[%s826 + $0xc8] sm:$0xf] %vm829, %v806
        %855 = vst.msk [vmem:[%s826 + $0xd0] sm:$0xf0] %vm827, %v807
        %856 = vst.msk [vmem:[%s826 + $0xd8] sm:$0xf] %vm829, %v807
        %857 = vst.msk [vmem:[%s826 + $0xe0] sm:$0xf0] %vm827, %v808
        %858 = vst.msk [vmem:[%s826 + $0xe8] sm:$0xf] %vm829, %v808
        %859 = vst.msk [vmem:[%s826 + $0xf0] sm:$0xf0] %vm827, %v809
        %860 = vst.msk [vmem:[%s826 + $0xf8] sm:$0xf] %vm829, %v809
        %v861 = vld [vmem:[#allocation11] sm:$0x1]
        %v862 = vld [vmem:[%s826] sm:$0xf8]
        %v863 = vld [vmem:[%s826 + $0x8] sm:$0xf]
        %v864 = vld [vmem:[%s826 + $0x10] sm:$0xf8]
        %v865 = vld [vmem:[%s826 + $0x18] sm:$0xf]
        %v866 = vld [vmem:[%s826 + $0x20] sm:$0xf8]
        %v867 = vld [vmem:[%s826 + $0x28] sm:$0xf]
        %v868 = vld [vmem:[%s826 + $0x30] sm:$0xf8]
        %v869 = vld [vmem:[%s826 + $0x38] sm:$0xf]
        %v870 = vld [vmem:[%s826 + $0x40] sm:$0xf8]
        %v871 = vld [vmem:[%s826 + $0x48] sm:$0xf]
        %v872 = vld [vmem:[%s826 + $0x50] sm:$0xf8]
        %v873 = vld [vmem:[%s826 + $0x58] sm:$0xf]
        %v874 = vld [vmem:[%s826 + $0x60] sm:$0xf8]
        %v875 = vld [vmem:[%s826 + $0x68] sm:$0xf]
        %v876 = vld [vmem:[%s826 + $0x70] sm:$0xf8]
        %v877 = vld [vmem:[%s826 + $0x78] sm:$0xf]
        %v878 = vld [vmem:[%s826 + $0x80] sm:$0xf8]
        %v879 = vld [vmem:[%s826 + $0x88] sm:$0xf]
        %v880 = vld [vmem:[%s826 + $0x90] sm:$0xf8]
        %v881 = vld [vmem:[%s826 + $0x98] sm:$0xf]
        %v882 = vld [vmem:[%s826 + $0xa0] sm:$0xf8]
        %v883 = vld [vmem:[%s826 + $0xa8] sm:$0xf]
        %v884 = vld [vmem:[%s826 + $0xb0] sm:$0xf8]
        %v885 = vld [vmem:[%s826 + $0xb8] sm:$0xf]
        %v886 = vld [vmem:[%s826 + $0xc0] sm:$0xf8]
        %v887 = vld [vmem:[%s826 + $0xc8] sm:$0xf]
        %v888 = vld [vmem:[%s826 + $0xd0] sm:$0xf8]
        %v889 = vld [vmem:[%s826 + $0xd8] sm:$0xf]
        %v890 = vld [vmem:[%s826 + $0xe0] sm:$0xf8]
        %v891 = vld [vmem:[%s826 + $0xe8] sm:$0xf]
        %v892 = vld [vmem:[%s826 + $0xf0] sm:$0xf8]
        %v893 = vld [vmem:[%s826 + $0xf8] sm:$0xf]
        %v894 = vld [vmem:[%s826] sm:$0xf0]
        %v895 = vld [vmem:[%s826 + $0x10] sm:$0xf0]
        %v896 = vld [vmem:[%s826 + $0x20] sm:$0xf0]
        %v897 = vld [vmem:[%s826 + $0x30] sm:$0xf0]
        %v898 = vld [vmem:[%s826 + $0x40] sm:$0xf0]
        %v899 = vld [vmem:[%s826 + $0x50] sm:$0xf0]
        %v900 = vld [vmem:[%s826 + $0x60] sm:$0xf0]
        %v901 = vld [vmem:[%s826 + $0x70] sm:$0xf0]
        %v902 = vld [vmem:[%s826 + $0x80] sm:$0xf0]
        %v903 = vld [vmem:[%s826 + $0x90] sm:$0xf0]
        %v904 = vld [vmem:[%s826 + $0xa0] sm:$0xf0]
        %v905 = vld [vmem:[%s826 + $0xb0] sm:$0xf0]
        %v906 = vld [vmem:[%s826 + $0xc0] sm:$0xf0]
        %v907 = vld [vmem:[%s826 + $0xd0] sm:$0xf0]
        %v908 = vld [vmem:[%s826 + $0xe0] sm:$0xf0]
        %v909 = vld [vmem:[%s826 + $0xf0] sm:$0xf0]
        %v910 = vld [vmem:[%s826 + $0x8] sm:$0x1f]
        %v911 = vld [vmem:[%s826 + $0x18] sm:$0x1f]
        %v912 = vld [vmem:[%s826 + $0x28] sm:$0x1f]
        %v913 = vld [vmem:[%s826 + $0x38] sm:$0x1f]
        %v914 = vld [vmem:[%s826 + $0x48] sm:$0x1f]
        %v915 = vld [vmem:[%s826 + $0x58] sm:$0x1f]
        %v916 = vld [vmem:[%s826 + $0x68] sm:$0x1f]
        %v917 = vld [vmem:[%s826 + $0x78] sm:$0x1f]
        %v918 = vld [vmem:[%s826 + $0x88] sm:$0x1f]
        %v919 = vld [vmem:[%s826 + $0x98] sm:$0x1f]
        %v920 = vld [vmem:[%s826 + $0xa8] sm:$0x1f]
        %v921 = vld [vmem:[%s826 + $0xb8] sm:$0x1f]
        %v922 = vld [vmem:[%s826 + $0xc8] sm:$0x1f]
        %v923 = vld [vmem:[%s826 + $0xd8] sm:$0x1f]
        %v924 = vld [vmem:[%s826 + $0xe8] sm:$0x1f]
        %v925 = vld [vmem:[%s826 + $0xf8] sm:$0x1f]
        %v926 = vld [vmem:[#allocation2] sm:$0xf8]
        %v927 = vld [vmem:[#allocation2 + $0x8] sm:$0xf]
        %v928 = vld [vmem:[#allocation2 + $0x10] sm:$0xf8]
        %v929 = vld [vmem:[#allocation2 + $0x18] sm:$0xf]
        %v930 = vld [vmem:[#allocation2 + $0x20] sm:$0xf8]
        %v931 = vld [vmem:[#allocation2 + $0x28] sm:$0xf]
        %v932 = vld [vmem:[#allocation2 + $0x30] sm:$0xf8]
        %v933 = vld [vmem:[#allocation2 + $0x38] sm:$0xf]
        %v934 = vld [vmem:[#allocation2 + $0x40] sm:$0xf8]
        %v935 = vld [vmem:[#allocation2 + $0x48] sm:$0xf]
        %v936 = vld [vmem:[#allocation2 + $0x50] sm:$0xf8]
        %v937 = vld [vmem:[#allocation2 + $0x58] sm:$0xf]
        %v938 = vld [vmem:[#allocation2 + $0x60] sm:$0xf8]
        %v939 = vld [vmem:[#allocation2 + $0x68] sm:$0xf]
        %v940 = vld [vmem:[#allocation2 + $0x70] sm:$0xf8]
        %v941 = vld [vmem:[#allocation2 + $0x78] sm:$0xf]
        %v942 = vld [vmem:[#allocation2 + $0x80] sm:$0xf8]
        %v943 = vld [vmem:[#allocation2 + $0x88] sm:$0xf]
        %v944 = vld [vmem:[#allocation2 + $0x90] sm:$0xf8]
        %v945 = vld [vmem:[#allocation2 + $0x98] sm:$0xf]
        %v946 = vld [vmem:[#allocation2 + $0xa0] sm:$0xf8]
        %v947 = vld [vmem:[#allocation2 + $0xa8] sm:$0xf]
        %v948 = vld [vmem:[#allocation2 + $0xb0] sm:$0xf8]
        %v949 = vld [vmem:[#allocation2 + $0xb8] sm:$0xf]
        %v950 = vld [vmem:[#allocation2 + $0xc0] sm:$0xf8]
        %v951 = vld [vmem:[#allocation2 + $0xc8] sm:$0xf]
        %v952 = vld [vmem:[#allocation2 + $0xd0] sm:$0xf8]
        %v953 = vld [vmem:[#allocation2 + $0xd8] sm:$0xf]
        %v954 = vld [vmem:[#allocation2 + $0xe0] sm:$0xf8]
        %v955 = vld [vmem:[#allocation2 + $0xe8] sm:$0xf]
        %v956 = vld [vmem:[#allocation2 + $0xf0] sm:$0xf8]
        %v957 = vld [vmem:[#allocation2 + $0xf8] sm:$0xf]
        %v958 = vld [vmem:[#allocation2] sm:$0xf0]
        %v959 = vld [vmem:[#allocation2 + $0x10] sm:$0xf0]
        %v960 = vld [vmem:[#allocation2 + $0x20] sm:$0xf0]
        %v961 = vld [vmem:[#allocation2 + $0x30] sm:$0xf0]
        %v962 = vld [vmem:[#allocation2 + $0x40] sm:$0xf0]
        %v963 = vld [vmem:[#allocation2 + $0x50] sm:$0xf0]
        %v964 = vld [vmem:[#allocation2 + $0x60] sm:$0xf0]
        %v965 = vld [vmem:[#allocation2 + $0x70] sm:$0xf0]
        %v966 = vld [vmem:[#allocation2 + $0x80] sm:$0xf0]
        %v967 = vld [vmem:[#allocation2 + $0x90] sm:$0xf0]
        %v968 = vld [vmem:[#allocation2 + $0xa0] sm:$0xf0]
        %v969 = vld [vmem:[#allocation2 + $0xb0] sm:$0xf0]
        %v970 = vld [vmem:[#allocation2 + $0xc0] sm:$0xf0]
        %v971 = vld [vmem:[#allocation2 + $0xd0] sm:$0xf0]
        %v972 = vld [vmem:[#allocation2 + $0xe0] sm:$0xf0]
        %v973 = vld [vmem:[#allocation2 + $0xf0] sm:$0xf0]
        %v974 = vld [vmem:[#allocation2 + $0x8] sm:$0x1f]
        %v975 = vld [vmem:[#allocation2 + $0x18] sm:$0x1f]
        %v976 = vld [vmem:[#allocation2 + $0x28] sm:$0x1f]
        %v977 = vld [vmem:[#allocation2 + $0x38] sm:$0x1f]
        %v978 = vld [vmem:[#allocation2 + $0x48] sm:$0x1f]
        %v979 = vld [vmem:[#allocation2 + $0x58] sm:$0x1f]
        %v980 = vld [vmem:[#allocation2 + $0x68] sm:$0x1f]
        %v981 = vld [vmem:[#allocation2 + $0x78] sm:$0x1f]
        %v982 = vld [vmem:[#allocation2 + $0x88] sm:$0x1f]
        %v983 = vld [vmem:[#allocation2 + $0x98] sm:$0x1f]
        %v984 = vld [vmem:[#allocation2 + $0xa8] sm:$0x1f]
        %v985 = vld [vmem:[#allocation2 + $0xb8] sm:$0x1f]
        %v986 = vld [vmem:[#allocation2 + $0xc8] sm:$0x1f]
        %v987 = vld [vmem:[#allocation2 + $0xd8] sm:$0x1f]
        %v988 = vld [vmem:[#allocation2 + $0xe8] sm:$0x1f]
        %v989 = vld [vmem:[#allocation2 + $0xf8] sm:$0x1f]
        %vm990 = vsmask.f32 7424
        %v992 = vshrl.u32 %v894, 16
        %v994 = vshll.u32 %v894, 16
        %v996 = vrot.slane %v994, 1
        %v997 = vor.u32 %v992, %v996
        %v999 = vshll.u32 %v863, 16
        %v1001 = vrot.slane %v999, 1
        %v1002 = vsel %vm990, %v997, %v1001
        %v1003 = vshrl.u32 %v863, 16
        %v1005 = vor.u32 %v1003, %v1001
        %v1007 = vshrl.u32 %v895, 16
        %v1009 = vshll.u32 %v895, 16
        %v1011 = vrot.slane %v1009, 1
        %v1012 = vor.u32 %v1007, %v1011
        %v1014 = vshll.u32 %v865, 16
        %v1016 = vrot.slane %v1014, 1
        %v1017 = vsel %vm990, %v1012, %v1016
        %v1018 = vshrl.u32 %v865, 16
        %v1020 = vor.u32 %v1018, %v1016
        %v1022 = vshrl.u32 %v896, 16
        %v1024 = vshll.u32 %v896, 16
        %v1026 = vrot.slane %v1024, 1
        %v1027 = vor.u32 %v1022, %v1026
        %v1029 = vshll.u32 %v867, 16
        %v1031 = vrot.slane %v1029, 1
        %v1032 = vsel %vm990, %v1027, %v1031
        %v1033 = vshrl.u32 %v867, 16
        %v1035 = vor.u32 %v1033, %v1031
        %v1037 = vshrl.u32 %v897, 16
        %v1039 = vshll.u32 %v897, 16
        %v1041 = vrot.slane %v1039, 1
        %v1042 = vor.u32 %v1037, %v1041
        %v1044 = vshll.u32 %v869, 16
        %v1046 = vrot.slane %v1044, 1
        %v1047 = vsel %vm990, %v1042, %v1046
        %v1048 = vshrl.u32 %v869, 16
        %v1050 = vor.u32 %v1048, %v1046
        %v1052 = vshrl.u32 %v898, 16
        %v1054 = vshll.u32 %v898, 16
        %v1056 = vrot.slane %v1054, 1
        %v1057 = vor.u32 %v1052, %v1056
        %v1059 = vshll.u32 %v871, 16
        %v1061 = vrot.slane %v1059, 1
        %v1062 = vsel %vm990, %v1057, %v1061
        %v1063 = vshrl.u32 %v871, 16
        %v1065 = vor.u32 %v1063, %v1061
        %v1067 = vshrl.u32 %v899, 16
        %v1069 = vshll.u32 %v899, 16
        %v1071 = vrot.slane %v1069, 1
        %v1072 = vor.u32 %v1067, %v1071
        %v1074 = vshll.u32 %v873, 16
        %v1076 = vrot.slane %v1074, 1
        %v1077 = vsel %vm990, %v1072, %v1076
        %v1078 = vshrl.u32 %v873, 16
        %v1080 = vor.u32 %v1078, %v1076
        %v1082 = vshrl.u32 %v900, 16
        %v1084 = vshll.u32 %v900, 16
        %v1086 = vrot.slane %v1084, 1
        %v1087 = vor.u32 %v1082, %v1086
        %v1089 = vshll.u32 %v875, 16
        %v1091 = vrot.slane %v1089, 1
        %v1092 = vsel %vm990, %v1087, %v1091
        %v1093 = vshrl.u32 %v875, 16
        %v1095 = vor.u32 %v1093, %v1091
        %v1097 = vshrl.u32 %v901, 16
        %v1099 = vshll.u32 %v901, 16
        %v1101 = vrot.slane %v1099, 1
        %v1102 = vor.u32 %v1097, %v1101
        %v1104 = vshll.u32 %v877, 16
        %v1106 = vrot.slane %v1104, 1
        %v1107 = vsel %vm990, %v1102, %v1106
        %v1108 = vshrl.u32 %v877, 16
        %v1110 = vor.u32 %v1108, %v1106
        %v1112 = vshrl.u32 %v902, 16
        %v1114 = vshll.u32 %v902, 16
        %v1116 = vrot.slane %v1114, 1
        %v1117 = vor.u32 %v1112, %v1116
        %v1119 = vshll.u32 %v879, 16
        %v1121 = vrot.slane %v1119, 1
        %v1122 = vsel %vm990, %v1117, %v1121
        %v1123 = vshrl.u32 %v879, 16
        %v1125 = vor.u32 %v1123, %v1121
        %v1127 = vshrl.u32 %v903, 16
        %v1129 = vshll.u32 %v903, 16
        %v1131 = vrot.slane %v1129, 1
        %v1132 = vor.u32 %v1127, %v1131
        %v1134 = vshll.u32 %v881, 16
        %v1136 = vrot.slane %v1134, 1
        %v1137 = vsel %vm990, %v1132, %v1136
        %v1138 = vshrl.u32 %v881, 16
        %v1140 = vor.u32 %v1138, %v1136
        %v1142 = vshrl.u32 %v904, 16
        %v1144 = vshll.u32 %v904, 16
        %v1146 = vrot.slane %v1144, 1
        %v1147 = vor.u32 %v1142, %v1146
        %v1149 = vshll.u32 %v883, 16
        %v1151 = vrot.slane %v1149, 1
        %v1152 = vsel %vm990, %v1147, %v1151
        %v1153 = vshrl.u32 %v883, 16
        %v1155 = vor.u32 %v1153, %v1151
        %v1157 = vshrl.u32 %v905, 16
        %v1159 = vshll.u32 %v905, 16
        %v1161 = vrot.slane %v1159, 1
        %v1162 = vor.u32 %v1157, %v1161
        %v1164 = vshll.u32 %v885, 16
        %v1166 = vrot.slane %v1164, 1
        %v1167 = vsel %vm990, %v1162, %v1166
        %v1168 = vshrl.u32 %v885, 16
        %v1170 = vor.u32 %v1168, %v1166
        %v1172 = vshrl.u32 %v906, 16
        %v1174 = vshll.u32 %v906, 16
        %v1176 = vrot.slane %v1174, 1
        %v1177 = vor.u32 %v1172, %v1176
        %v1179 = vshll.u32 %v887, 16
        %v1181 = vrot.slane %v1179, 1
        %v1182 = vsel %vm990, %v1177, %v1181
        %v1183 = vshrl.u32 %v887, 16
        %v1185 = vor.u32 %v1183, %v1181
        %v1187 = vshrl.u32 %v907, 16
        %v1189 = vshll.u32 %v907, 16
        %v1191 = vrot.slane %v1189, 1
        %v1192 = vor.u32 %v1187, %v1191
        %v1194 = vshll.u32 %v889, 16
        %v1196 = vrot.slane %v1194, 1
        %v1197 = vsel %vm990, %v1192, %v1196
        %v1198 = vshrl.u32 %v889, 16
        %v1200 = vor.u32 %v1198, %v1196
        %v1202 = vshrl.u32 %v908, 16
        %v1204 = vshll.u32 %v908, 16
        %v1206 = vrot.slane %v1204, 1
        %v1207 = vor.u32 %v1202, %v1206
        %v1209 = vshll.u32 %v891, 16
        %v1211 = vrot.slane %v1209, 1
        %v1212 = vsel %vm990, %v1207, %v1211
        %v1213 = vshrl.u32 %v891, 16
        %v1215 = vor.u32 %v1213, %v1211
        %v1217 = vshrl.u32 %v909, 16
        %v1219 = vshll.u32 %v909, 16
        %v1221 = vrot.slane %v1219, 1
        %v1222 = vor.u32 %v1217, %v1221
        %v1224 = vshll.u32 %v893, 16
        %v1226 = vrot.slane %v1224, 1
        %v1227 = vsel %vm990, %v1222, %v1226
        %v1228 = vshrl.u32 %v893, 16
        %v1230 = vor.u32 %v1228, %v1226
        %1231 = vrot.lane.b32.xlu0 %v1002, 64
        %v1232 = vpop.permute.xlu0 %1231
        %1233 = vrot.lane.b32.xlu0 %v1005, 64
        %v1234 = vpop.permute.xlu0 %1233
        %1235 = vrot.lane.b32.xlu0 %v1017, 64
        %v1236 = vpop.permute.xlu0 %1235
        %1237 = vrot.lane.b32.xlu0 %v1020, 64
        %v1238 = vpop.permute.xlu0 %1237
        %1239 = vrot.lane.b32.xlu0 %v1032, 64
        %v1240 = vpop.permute.xlu0 %1239
        %1241 = vrot.lane.b32.xlu0 %v1035, 64
        %v1242 = vpop.permute.xlu0 %1241
        %1243 = vrot.lane.b32.xlu0 %v1047, 64
        %v1244 = vpop.permute.xlu0 %1243
        %1245 = vrot.lane.b32.xlu0 %v1050, 64
        %v1246 = vpop.permute.xlu0 %1245
        %1247 = vrot.lane.b32.xlu0 %v1062, 64
        %v1248 = vpop.permute.xlu0 %1247
        %1249 = vrot.lane.b32.xlu0 %v1065, 64
        %v1250 = vpop.permute.xlu0 %1249
        %1251 = vrot.lane.b32.xlu0 %v1077, 64
        %v1252 = vpop.permute.xlu0 %1251
        %1253 = vrot.lane.b32.xlu0 %v1080, 64
        %v1254 = vpop.permute.xlu0 %1253
        %1255 = vrot.lane.b32.xlu0 %v1092, 64
        %v1256 = vpop.permute.xlu0 %1255
        %1257 = vrot.lane.b32.xlu0 %v1095, 64
        %v1258 = vpop.permute.xlu0 %1257
        %1259 = vrot.lane.b32.xlu0 %v1107, 64
        %v1260 = vpop.permute.xlu0 %1259
        %1261 = vrot.lane.b32.xlu0 %v1110, 64
        %v1262 = vpop.permute.xlu0 %1261
        %1263 = vrot.lane.b32.xlu0 %v1122, 64
        %v1264 = vpop.permute.xlu0 %1263
        %1265 = vrot.lane.b32.xlu0 %v1125, 64
        %v1266 = vpop.permute.xlu0 %1265
        %1267 = vrot.lane.b32.xlu0 %v1137, 64
        %v1268 = vpop.permute.xlu0 %1267
        %1269 = vrot.lane.b32.xlu0 %v1140, 64
        %v1270 = vpop.permute.xlu0 %1269
        %1271 = vrot.lane.b32.xlu0 %v1152, 64
        %v1272 = vpop.permute.xlu0 %1271
        %1273 = vrot.lane.b32.xlu0 %v1155, 64
        %v1274 = vpop.permute.xlu0 %1273
        %1275 = vrot.lane.b32.xlu0 %v1167, 64
        %v1276 = vpop.permute.xlu0 %1275
        %1277 = vrot.lane.b32.xlu0 %v1170, 64
        %v1278 = vpop.permute.xlu0 %1277
        %1279 = vrot.lane.b32.xlu0 %v1182, 64
        %v1280 = vpop.permute.xlu0 %1279
        %1281 = vrot.lane.b32.xlu0 %v1185, 64
        %v1282 = vpop.permute.xlu0 %1281
        %1283 = vrot.lane.b32.xlu0 %v1197, 64
        %v1284 = vpop.permute.xlu0 %1283
        %1285 = vrot.lane.b32.xlu0 %v1200, 64
        %v1286 = vpop.permute.xlu0 %1285
        %1287 = vrot.lane.b32.xlu0 %v1212, 64
        %v1288 = vpop.permute.xlu0 %1287
        %1289 = vrot.lane.b32.xlu0 %v1215, 64
        %v1290 = vpop.permute.xlu0 %1289
        %1291 = vrot.lane.b32.xlu0 %v1227, 64
        %v1292 = vpop.permute.xlu0 %1291
        %1293 = vrot.lane.b32.xlu0 %v1230, 64
        %v1294 = vpop.permute.xlu0 %1293
        %vm1327 = vcmask 1046528
        %v1328 = vrot.slane %v894, 1
        %v1329 = vrot.slane %v910, 1
        %v1330 = vsel %vm1327, %v1328, %v1329
        %v1331 = vrot.slane %v895, 1
        %v1332 = vrot.slane %v911, 1
        %v1333 = vsel %vm1327, %v1331, %v1332
        %v1334 = vrot.slane %v896, 1
        %v1335 = vrot.slane %v912, 1
        %v1336 = vsel %vm1327, %v1334, %v1335
        %v1337 = vrot.slane %v897, 1
        %v1338 = vrot.slane %v913, 1
        %v1339 = vsel %vm1327, %v1337, %v1338
        %v1340 = vrot.slane %v898, 1
        %v1341 = vrot.slane %v914, 1
        %v1342 = vsel %vm1327, %v1340, %v1341
        %v1343 = vrot.slane %v899, 1
        %v1344 = vrot.slane %v915, 1
        %v1345 = vsel %vm1327, %v1343, %v1344
        %v1346 = vrot.slane %v900, 1
        %v1347 = vrot.slane %v916, 1
        %v1348 = vsel %vm1327, %v1346, %v1347
        %v1349 = vrot.slane %v901, 1
        %v1350 = vrot.slane %v917, 1
        %v1351 = vsel %vm1327, %v1349, %v1350
        %v1352 = vrot.slane %v902, 1
        %v1353 = vrot.slane %v918, 1
        %v1354 = vsel %vm1327, %v1352, %v1353
        %v1355 = vrot.slane %v903, 1
        %v1356 = vrot.slane %v919, 1
        %v1357 = vsel %vm1327, %v1355, %v1356
        %v1358 = vrot.slane %v904, 1
        %v1359 = vrot.slane %v920, 1
        %v1360 = vsel %vm1327, %v1358, %v1359
        %v1361 = vrot.slane %v905, 1
        %v1362 = vrot.slane %v921, 1
        %v1363 = vsel %vm1327, %v1361, %v1362
        %v1364 = vrot.slane %v906, 1
        %v1365 = vrot.slane %v922, 1
        %v1366 = vsel %vm1327, %v1364, %v1365
        %v1367 = vrot.slane %v907, 1
        %v1368 = vrot.slane %v923, 1
        %v1369 = vsel %vm1327, %v1367, %v1368
        %v1370 = vrot.slane %v908, 1
        %v1371 = vrot.slane %v924, 1
        %v1372 = vsel %vm1327, %v1370, %v1371
        %v1373 = vrot.slane %v909, 1
        %v1374 = vrot.slane %v925, 1
        %v1375 = vsel %vm1327, %v1373, %v1374
        %1408 = vrot.lane.b32.xlu0 %v926, 64
        %v1409 = vpop.permute.xlu0 %1408
        %1410 = vrot.lane.b32.xlu0 %v927, 64
        %v1411 = vpop.permute.xlu0 %1410
        %1412 = vrot.lane.b32.xlu0 %v928, 64
        %v1413 = vpop.permute.xlu0 %1412
        %1414 = vrot.lane.b32.xlu0 %v929, 64
        %v1415 = vpop.permute.xlu0 %1414
        %1416 = vrot.lane.b32.xlu0 %v930, 64
        %v1417 = vpop.permute.xlu0 %1416
        %1418 = vrot.lane.b32.xlu0 %v931, 64
        %v1419 = vpop.permute.xlu0 %1418
        %1420 = vrot.lane.b32.xlu0 %v932, 64
        %v1421 = vpop.permute.xlu0 %1420
        %1422 = vrot.lane.b32.xlu0 %v933, 64
        %v1423 = vpop.permute.xlu0 %1422
        %1424 = vrot.lane.b32.xlu0 %v934, 64
        %v1425 = vpop.permute.xlu0 %1424
        %1426 = vrot.lane.b32.xlu0 %v935, 64
        %v1427 = vpop.permute.xlu0 %1426
        %1428 = vrot.lane.b32.xlu0 %v936, 64
        %v1429 = vpop.permute.xlu0 %1428
        %1430 = vrot.lane.b32.xlu0 %v937, 64
        %v1431 = vpop.permute.xlu0 %1430
        %1432 = vrot.lane.b32.xlu0 %v938, 64
        %v1433 = vpop.permute.xlu0 %1432
        %1434 = vrot.lane.b32.xlu0 %v939, 64
        %v1435 = vpop.permute.xlu0 %1434
        %1436 = vrot.lane.b32.xlu0 %v940, 64
        %v1437 = vpop.permute.xlu0 %1436
        %1438 = vrot.lane.b32.xlu0 %v941, 64
        %v1439 = vpop.permute.xlu0 %1438
        %1440 = vrot.lane.b32.xlu0 %v942, 64
        %v1441 = vpop.permute.xlu0 %1440
        %1442 = vrot.lane.b32.xlu0 %v943, 64
        %v1443 = vpop.permute.xlu0 %1442
        %1444 = vrot.lane.b32.xlu0 %v944, 64
        %v1445 = vpop.permute.xlu0 %1444
        %1446 = vrot.lane.b32.xlu0 %v945, 64
        %v1447 = vpop.permute.xlu0 %1446
        %1448 = vrot.lane.b32.xlu0 %v946, 64
        %v1449 = vpop.permute.xlu0 %1448
        %1450 = vrot.lane.b32.xlu0 %v947, 64
        %v1451 = vpop.permute.xlu0 %1450
        %1452 = vrot.lane.b32.xlu0 %v948, 64
        %v1453 = vpop.permute.xlu0 %1452
        %1454 = vrot.lane.b32.xlu0 %v949, 64
        %v1455 = vpop.permute.xlu0 %1454
        %1456 = vrot.lane.b32.xlu0 %v950, 64
        %v1457 = vpop.permute.xlu0 %1456
        %1458 = vrot.lane.b32.xlu0 %v951, 64
        %v1459 = vpop.permute.xlu0 %1458
        %1460 = vrot.lane.b32.xlu0 %v952, 64
        %v1461 = vpop.permute.xlu0 %1460
        %1462 = vrot.lane.b32.xlu0 %v953, 64
        %v1463 = vpop.permute.xlu0 %1462
        %1464 = vrot.lane.b32.xlu0 %v954, 64
        %v1465 = vpop.permute.xlu0 %1464
        %1466 = vrot.lane.b32.xlu0 %v955, 64
        %v1467 = vpop.permute.xlu0 %1466
        %1468 = vrot.lane.b32.xlu0 %v956, 64
        %v1469 = vpop.permute.xlu0 %1468
        %1470 = vrot.lane.b32.xlu0 %v957, 64
        %v1471 = vpop.permute.xlu0 %1470
        %v1473 = vshrl.u32 %v958, 16
        %v1475 = vshll.u32 %v958, 16
        %v1477 = vrot.slane %v1475, 1
        %v1478 = vor.u32 %v1473, %v1477
        %v1480 = vshll.u32 %v927, 16
        %v1482 = vrot.slane %v1480, 1
        %v1483 = vsel %vm990, %v1478, %v1482
        %v1484 = vshrl.u32 %v927, 16
        %v1486 = vor.u32 %v1484, %v1482
        %v1488 = vshrl.u32 %v959, 16
        %v1490 = vshll.u32 %v959, 16
        %v1492 = vrot.slane %v1490, 1
        %v1493 = vor.u32 %v1488, %v1492
        %v1495 = vshll.u32 %v929, 16
        %v1497 = vrot.slane %v1495, 1
        %v1498 = vsel %vm990, %v1493, %v1497
        %v1499 = vshrl.u32 %v929, 16
        %v1501 = vor.u32 %v1499, %v1497
        %v1503 = vshrl.u32 %v960, 16
        %v1505 = vshll.u32 %v960, 16
        %v1507 = vrot.slane %v1505, 1
        %v1508 = vor.u32 %v1503, %v1507
        %v1510 = vshll.u32 %v931, 16
        %v1512 = vrot.slane %v1510, 1
        %v1513 = vsel %vm990, %v1508, %v1512
        %v1514 = vshrl.u32 %v931, 16
        %v1516 = vor.u32 %v1514, %v1512
        %v1518 = vshrl.u32 %v961, 16
        %v1520 = vshll.u32 %v961, 16
        %v1522 = vrot.slane %v1520, 1
        %v1523 = vor.u32 %v1518, %v1522
        %v1525 = vshll.u32 %v933, 16
        %v1527 = vrot.slane %v1525, 1
        %v1528 = vsel %vm990, %v1523, %v1527
        %v1529 = vshrl.u32 %v933, 16
        %v1531 = vor.u32 %v1529, %v1527
        %v1533 = vshrl.u32 %v962, 16
        %v1535 = vshll.u32 %v962, 16
        %v1537 = vrot.slane %v1535, 1
        %v1538 = vor.u32 %v1533, %v1537
        %v1540 = vshll.u32 %v935, 16
        %v1542 = vrot.slane %v1540, 1
        %v1543 = vsel %vm990, %v1538, %v1542
        %v1544 = vshrl.u32 %v935, 16
        %v1546 = vor.u32 %v1544, %v1542
        %v1548 = vshrl.u32 %v963, 16
        %v1550 = vshll.u32 %v963, 16
        %v1552 = vrot.slane %v1550, 1
        %v1553 = vor.u32 %v1548, %v1552
        %v1555 = vshll.u32 %v937, 16
        %v1557 = vrot.slane %v1555, 1
        %v1558 = vsel %vm990, %v1553, %v1557
        %v1559 = vshrl.u32 %v937, 16
        %v1561 = vor.u32 %v1559, %v1557
        %v1563 = vshrl.u32 %v964, 16
        %v1565 = vshll.u32 %v964, 16
        %v1567 = vrot.slane %v1565, 1
        %v1568 = vor.u32 %v1563, %v1567
        %v1570 = vshll.u32 %v939, 16
        %v1572 = vrot.slane %v1570, 1
        %v1573 = vsel %vm990, %v1568, %v1572
        %v1574 = vshrl.u32 %v939, 16
        %v1576 = vor.u32 %v1574, %v1572
        %v1578 = vshrl.u32 %v965, 16
        %v1580 = vshll.u32 %v965, 16
        %v1582 = vrot.slane %v1580, 1
        %v1583 = vor.u32 %v1578, %v1582
        %v1585 = vshll.u32 %v941, 16
        %v1587 = vrot.slane %v1585, 1
        %v1588 = vsel %vm990, %v1583, %v1587
        %v1589 = vshrl.u32 %v941, 16
        %v1591 = vor.u32 %v1589, %v1587
        %v1593 = vshrl.u32 %v966, 16
        %v1595 = vshll.u32 %v966, 16
        %v1597 = vrot.slane %v1595, 1
        %v1598 = vor.u32 %v1593, %v1597
        %v1600 = vshll.u32 %v943, 16
        %v1602 = vrot.slane %v1600, 1
        %v1603 = vsel %vm990, %v1598, %v1602
        %v1604 = vshrl.u32 %v943, 16
        %v1606 = vor.u32 %v1604, %v1602
        %v1608 = vshrl.u32 %v967, 16
        %v1610 = vshll.u32 %v967, 16
        %v1612 = vrot.slane %v1610, 1
        %v1613 = vor.u32 %v1608, %v1612
        %v1615 = vshll.u32 %v945, 16
        %v1617 = vrot.slane %v1615, 1
        %v1618 = vsel %vm990, %v1613, %v1617
        %v1619 = vshrl.u32 %v945, 16
        %v1621 = vor.u32 %v1619, %v1617
        %v1623 = vshrl.u32 %v968, 16
        %v1625 = vshll.u32 %v968, 16
        %v1627 = vrot.slane %v1625, 1
        %v1628 = vor.u32 %v1623, %v1627
        %v1630 = vshll.u32 %v947, 16
        %v1632 = vrot.slane %v1630, 1
        %v1633 = vsel %vm990, %v1628, %v1632
        %v1634 = vshrl.u32 %v947, 16
        %v1636 = vor.u32 %v1634, %v1632
        %v1638 = vshrl.u32 %v969, 16
        %v1640 = vshll.u32 %v969, 16
        %v1642 = vrot.slane %v1640, 1
        %v1643 = vor.u32 %v1638, %v1642
        %v1645 = vshll.u32 %v949, 16
        %v1647 = vrot.slane %v1645, 1
        %v1648 = vsel %vm990, %v1643, %v1647
        %v1649 = vshrl.u32 %v949, 16
        %v1651 = vor.u32 %v1649, %v1647
        %v1653 = vshrl.u32 %v970, 16
        %v1655 = vshll.u32 %v970, 16
        %v1657 = vrot.slane %v1655, 1
        %v1658 = vor.u32 %v1653, %v1657
        %v1660 = vshll.u32 %v951, 16
        %v1662 = vrot.slane %v1660, 1
        %v1663 = vsel %vm990, %v1658, %v1662
        %v1664 = vshrl.u32 %v951, 16
        %v1666 = vor.u32 %v1664, %v1662
        %v1668 = vshrl.u32 %v971, 16
        %v1670 = vshll.u32 %v971, 16
        %v1672 = vrot.slane %v1670, 1
        %v1673 = vor.u32 %v1668, %v1672
        %v1675 = vshll.u32 %v953, 16
        %v1677 = vrot.slane %v1675, 1
        %v1678 = vsel %vm990, %v1673, %v1677
        %v1679 = vshrl.u32 %v953, 16
        %v1681 = vor.u32 %v1679, %v1677
        %v1683 = vshrl.u32 %v972, 16
        %v1685 = vshll.u32 %v972, 16
        %v1687 = vrot.slane %v1685, 1
        %v1688 = vor.u32 %v1683, %v1687
        %v1690 = vshll.u32 %v955, 16
        %v1692 = vrot.slane %v1690, 1
        %v1693 = vsel %vm990, %v1688, %v1692
        %v1694 = vshrl.u32 %v955, 16
        %v1696 = vor.u32 %v1694, %v1692
        %v1698 = vshrl.u32 %v973, 16
        %v1700 = vshll.u32 %v973, 16
        %v1702 = vrot.slane %v1700, 1
        %v1703 = vor.u32 %v1698, %v1702
        %v1705 = vshll.u32 %v957, 16
        %v1707 = vrot.slane %v1705, 1
        %v1708 = vsel %vm990, %v1703, %v1707
        %v1709 = vshrl.u32 %v957, 16
        %v1711 = vor.u32 %v1709, %v1707
        %v1744 = vrot.slane %v958, 1
        %v1745 = vrot.slane %v974, 1
        %v1746 = vsel %vm1327, %v1744, %v1745
        %v1747 = vrot.slane %v959, 1
        %v1748 = vrot.slane %v975, 1
        %v1749 = vsel %vm1327, %v1747, %v1748
        %v1750 = vrot.slane %v960, 1
        %v1751 = vrot.slane %v976, 1
        %v1752 = vsel %vm1327, %v1750, %v1751
        %v1753 = vrot.slane %v961, 1
        %v1754 = vrot.slane %v977, 1
        %v1755 = vsel %vm1327, %v1753, %v1754
        %v1756 = vrot.slane %v962, 1
        %v1757 = vrot.slane %v978, 1
        %v1758 = vsel %vm1327, %v1756, %v1757
        %v1759 = vrot.slane %v963, 1
        %v1760 = vrot.slane %v979, 1
        %v1761 = vsel %vm1327, %v1759, %v1760
        %v1762 = vrot.slane %v964, 1
        %v1763 = vrot.slane %v980, 1
        %v1764 = vsel %vm1327, %v1762, %v1763
        %v1765 = vrot.slane %v965, 1
        %v1766 = vrot.slane %v981, 1
        %v1767 = vsel %vm1327, %v1765, %v1766
        %v1768 = vrot.slane %v966, 1
        %v1769 = vrot.slane %v982, 1
        %v1770 = vsel %vm1327, %v1768, %v1769
        %v1771 = vrot.slane %v967, 1
        %v1772 = vrot.slane %v983, 1
        %v1773 = vsel %vm1327, %v1771, %v1772
        %v1774 = vrot.slane %v968, 1
        %v1775 = vrot.slane %v984, 1
        %v1776 = vsel %vm1327, %v1774, %v1775
        %v1777 = vrot.slane %v969, 1
        %v1778 = vrot.slane %v985, 1
        %v1779 = vsel %vm1327, %v1777, %v1778
        %v1780 = vrot.slane %v970, 1
        %v1781 = vrot.slane %v986, 1
        %v1782 = vsel %vm1327, %v1780, %v1781
        %v1783 = vrot.slane %v971, 1
        %v1784 = vrot.slane %v987, 1
        %v1785 = vsel %vm1327, %v1783, %v1784
        %v1786 = vrot.slane %v972, 1
        %v1787 = vrot.slane %v988, 1
        %v1788 = vsel %vm1327, %v1786, %v1787
        %v1789 = vrot.slane %v973, 1
        %v1790 = vrot.slane %v989, 1
        %v1791 = vsel %vm1327, %v1789, %v1790
        %1792 = vrot.lane.b32.xlu0 %v1746, 64
        %v1793 = vpop.permute.xlu0 %1792
        %1794 = vrot.lane.b32.xlu0 %v1745, 64
        %v1795 = vpop.permute.xlu0 %1794
        %1796 = vrot.lane.b32.xlu0 %v1749, 64
        %v1797 = vpop.permute.xlu0 %1796
        %1798 = vrot.lane.b32.xlu0 %v1748, 64
        %v1799 = vpop.permute.xlu0 %1798
        %1800 = vrot.lane.b32.xlu0 %v1752, 64
        %v1801 = vpop.permute.xlu0 %1800
        %1802 = vrot.lane.b32.xlu0 %v1751, 64
        %v1803 = vpop.permute.xlu0 %1802
        %1804 = vrot.lane.b32.xlu0 %v1755, 64
        %v1805 = vpop.permute.xlu0 %1804
        %1806 = vrot.lane.b32.xlu0 %v1754, 64
        %v1807 = vpop.permute.xlu0 %1806
        %1808 = vrot.lane.b32.xlu0 %v1758, 64
        %v1809 = vpop.permute.xlu0 %1808
        %1810 = vrot.lane.b32.xlu0 %v1757, 64
        %v1811 = vpop.permute.xlu0 %1810
        %1812 = vrot.lane.b32.xlu0 %v1761, 64
        %v1813 = vpop.permute.xlu0 %1812
        %1814 = vrot.lane.b32.xlu0 %v1760, 64
        %v1815 = vpop.permute.xlu0 %1814
        %1816 = vrot.lane.b32.xlu0 %v1764, 64
        %v1817 = vpop.permute.xlu0 %1816
        %1818 = vrot.lane.b32.xlu0 %v1763, 64
        %v1819 = vpop.permute.xlu0 %1818
        %1820 = vrot.lane.b32.xlu0 %v1767, 64
        %v1821 = vpop.permute.xlu0 %1820
        %1822 = vrot.lane.b32.xlu0 %v1766, 64
        %v1823 = vpop.permute.xlu0 %1822
        %1824 = vrot.lane.b32.xlu0 %v1770, 64
        %v1825 = vpop.permute.xlu0 %1824
        %1826 = vrot.lane.b32.xlu0 %v1769, 64
        %v1827 = vpop.permute.xlu0 %1826
        %1828 = vrot.lane.b32.xlu0 %v1773, 64
        %v1829 = vpop.permute.xlu0 %1828
        %1830 = vrot.lane.b32.xlu0 %v1772, 64
        %v1831 = vpop.permute.xlu0 %1830
        %1832 = vrot.lane.b32.xlu0 %v1776, 64
        %v1833 = vpop.permute.xlu0 %1832
        %1834 = vrot.lane.b32.xlu0 %v1775, 64
        %v1835 = vpop.permute.xlu0 %1834
        %1836 = vrot.lane.b32.xlu0 %v1779, 64
        %v1837 = vpop.permute.xlu0 %1836
        %1838 = vrot.lane.b32.xlu0 %v1778, 64
        %v1839 = vpop.permute.xlu0 %1838
        %1840 = vrot.lane.b32.xlu0 %v1782, 64
        %v1841 = vpop.permute.xlu0 %1840
        %1842 = vrot.lane.b32.xlu0 %v1781, 64
        %v1843 = vpop.permute.xlu0 %1842
        %1844 = vrot.lane.b32.xlu0 %v1785, 64
        %v1845 = vpop.permute.xlu0 %1844
        %1846 = vrot.lane.b32.xlu0 %v1784, 64
        %v1847 = vpop.permute.xlu0 %1846
        %1848 = vrot.lane.b32.xlu0 %v1788, 64
        %v1849 = vpop.permute.xlu0 %1848
        %1850 = vrot.lane.b32.xlu0 %v1787, 64
        %v1851 = vpop.permute.xlu0 %1850
        %1852 = vrot.lane.b32.xlu0 %v1791, 64
        %v1853 = vpop.permute.xlu0 %1852
        %1854 = vrot.lane.b32.xlu0 %v1790, 64
        %v1855 = vpop.permute.xlu0 %1854
        %v1858 = vsel %vm298, %v862, %v1232
        %v1860 = vsel %vm298, %v863, %v1234
        %v1863 = vsel %vm298, %v864, %v1236
        %v1865 = vsel %vm298, %v865, %v1238
        %v1868 = vsel %vm298, %v866, %v1240
        %v1870 = vsel %vm298, %v867, %v1242
        %v1873 = vsel %vm298, %v868, %v1244
        %v1875 = vsel %vm298, %v869, %v1246
        %v1878 = vsel %vm298, %v870, %v1248
        %v1880 = vsel %vm298, %v871, %v1250
        %v1883 = vsel %vm298, %v872, %v1252
        %v1885 = vsel %vm298, %v873, %v1254
        %v1888 = vsel %vm298, %v874, %v1256
        %v1890 = vsel %vm298, %v875, %v1258
        %v1893 = vsel %vm298, %v876, %v1260
        %v1895 = vsel %vm298, %v877, %v1262
        %v1898 = vsel %vm298, %v878, %v1264
        %v1900 = vsel %vm298, %v879, %v1266
        %v1903 = vsel %vm298, %v880, %v1268
        %v1905 = vsel %vm298, %v881, %v1270
        %v1908 = vsel %vm298, %v882, %v1272
        %v1910 = vsel %vm298, %v883, %v1274
        %v1913 = vsel %vm298, %v884, %v1276
        %v1915 = vsel %vm298, %v885, %v1278
        %v1918 = vsel %vm298, %v886, %v1280
        %v1920 = vsel %vm298, %v887, %v1282
        %v1923 = vsel %vm298, %v888, %v1284
        %v1925 = vsel %vm298, %v889, %v1286
        %v1928 = vsel %vm298, %v890, %v1288
        %v1930 = vsel %vm298, %v891, %v1290
        %v1933 = vsel %vm298, %v892, %v1292
        %v1935 = vsel %vm298, %v893, %v1294
        %v1938 = vsel %vm298, %v1330, %v1409
        %v1941 = vsel %vm298, %v1329, %v1411
        %v1944 = vsel %vm298, %v1333, %v1413
        %v1947 = vsel %vm298, %v1332, %v1415
        %v1950 = vsel %vm298, %v1336, %v1417
        %v1953 = vsel %vm298, %v1335, %v1419
        %v1956 = vsel %vm298, %v1339, %v1421
        %v1959 = vsel %vm298, %v1338, %v1423
        %v1962 = vsel %vm298, %v1342, %v1425
        %v1965 = vsel %vm298, %v1341, %v1427
        %v1968 = vsel %vm298, %v1345, %v1429
        %v1971 = vsel %vm298, %v1344, %v1431
        %v1974 = vsel %vm298, %v1348, %v1433
        %v1977 = vsel %vm298, %v1347, %v1435
        %v1980 = vsel %vm298, %v1351, %v1437
        %v1983 = vsel %vm298, %v1350, %v1439
        %v1986 = vsel %vm298, %v1354, %v1441
        %v1989 = vsel %vm298, %v1353, %v1443
        %v1992 = vsel %vm298, %v1357, %v1445
        %v1995 = vsel %vm298, %v1356, %v1447
        %v1998 = vsel %vm298, %v1360, %v1449
        %v2001 = vsel %vm298, %v1359, %v1451
        %v2004 = vsel %vm298, %v1363, %v1453
        %v2007 = vsel %vm298, %v1362, %v1455
        %v2010 = vsel %vm298, %v1366, %v1457
        %v2013 = vsel %vm298, %v1365, %v1459
        %v2016 = vsel %vm298, %v1369, %v1461
        %v2019 = vsel %vm298, %v1368, %v1463
        %v2022 = vsel %vm298, %v1372, %v1465
        %v2025 = vsel %vm298, %v1371, %v1467
        %v2028 = vsel %vm298, %v1375, %v1469
        %v2031 = vsel %vm298, %v1374, %v1471
        %v2034 = vsel %vm298, %v1483, %v1793
        %v2037 = vsel %vm298, %v1486, %v1795
        %v2040 = vsel %vm298, %v1498, %v1797
        %v2043 = vsel %vm298, %v1501, %v1799
        %v2046 = vsel %vm298, %v1513, %v1801
        %v2049 = vsel %vm298, %v1516, %v1803
        %v2052 = vsel %vm298, %v1528, %v1805
        %v2055 = vsel %vm298, %v1531, %v1807
        %v2058 = vsel %vm298, %v1543, %v1809
        %v2061 = vsel %vm298, %v1546, %v1811
        %v2064 = vsel %vm298, %v1558, %v1813
        %v2067 = vsel %vm298, %v1561, %v1815
        %v2070 = vsel %vm298, %v1573, %v1817
        %v2073 = vsel %vm298, %v1576, %v1819
        %v2076 = vsel %vm298, %v1588, %v1821
        %v2079 = vsel %vm298, %v1591, %v1823
        %v2082 = vsel %vm298, %v1603, %v1825
        %v2085 = vsel %vm298, %v1606, %v1827
        %v2088 = vsel %vm298, %v1618, %v1829
        %v2091 = vsel %vm298, %v1621, %v1831
        %v2094 = vsel %vm298, %v1633, %v1833
        %v2097 = vsel %vm298, %v1636, %v1835
        %v2100 = vsel %vm298, %v1648, %v1837
        %v2103 = vsel %vm298, %v1651, %v1839
        %v2106 = vsel %vm298, %v1663, %v1841
        %v2109 = vsel %vm298, %v1666, %v1843
        %v2112 = vsel %vm298, %v1678, %v1845
        %v2115 = vsel %vm298, %v1681, %v1847
        %v2118 = vsel %vm298, %v1693, %v1849
        %v2121 = vsel %vm298, %v1696, %v1851
        %v2124 = vsel %vm298, %v1708, %v1853
        %v2127 = vsel %vm298, %v1711, %v1855
        %v2128 = vshrl.u32 %v1858, 16
        %v2130 = vrot.slane %v2128, 3
        %v2131 = vshll.u32 %v1858, 16
        %v2133 = vrot.slane %v2131, 4
        %v2134 = vor.u32 %v2130, %v2133
        %v2135 = vshrl.u32 %v1860, 16
        %v2137 = vrot.slane %v2135, 3
        %v2138 = vshll.u32 %v1860, 16
        %v2140 = vrot.slane %v2138, 4
        %v2141 = vor.u32 %v2137, %v2140
        %v2142 = vsel %vm362, %v2134, %v2141
        %v2143 = vshrl.u32 %v1938, 16
        %v2145 = vrot.slane %v2143, 3
        %v2146 = vshll.u32 %v1938, 16
        %v2148 = vrot.slane %v2146, 4
        %v2149 = vor.u32 %v2145, %v2148
        %v2150 = vshrl.u32 %v1941, 16
        %v2152 = vrot.slane %v2150, 3
        %v2153 = vshll.u32 %v1941, 16
        %v2155 = vrot.slane %v2153, 4
        %v2156 = vor.u32 %v2152, %v2155
        %v2157 = vsel %vm362, %v2149, %v2156
        %v2158 = vshrl.u32 %v2034, 16
        %v2160 = vrot.slane %v2158, 3
        %v2161 = vshll.u32 %v2034, 16
        %v2163 = vrot.slane %v2161, 4
        %v2164 = vor.u32 %v2160, %v2163
        %v2165 = vshrl.u32 %v2037, 16
        %v2167 = vrot.slane %v2165, 3
        %v2168 = vshll.u32 %v2037, 16
        %v2170 = vrot.slane %v2168, 4
        %v2171 = vor.u32 %v2167, %v2170
        %v2172 = vsel %vm362, %v2164, %v2171
        %v2173 = vshrl.u32 %v1863, 16
        %v2175 = vrot.slane %v2173, 3
        %v2176 = vshll.u32 %v1863, 16
        %v2178 = vrot.slane %v2176, 4
        %v2179 = vor.u32 %v2175, %v2178
        %v2180 = vshrl.u32 %v1865, 16
        %v2182 = vrot.slane %v2180, 3
        %v2183 = vshll.u32 %v1865, 16
        %v2185 = vrot.slane %v2183, 4
        %v2186 = vor.u32 %v2182, %v2185
        %v2187 = vsel %vm362, %v2179, %v2186
        %v2188 = vshrl.u32 %v1944, 16
        %v2190 = vrot.slane %v2188, 3
        %v2191 = vshll.u32 %v1944, 16
        %v2193 = vrot.slane %v2191, 4
        %v2194 = vor.u32 %v2190, %v2193
        %v2195 = vshrl.u32 %v1947, 16
        %v2197 = vrot.slane %v2195, 3
        %v2198 = vshll.u32 %v1947, 16
        %v2200 = vrot.slane %v2198, 4
        %v2201 = vor.u32 %v2197, %v2200
        %v2202 = vsel %vm362, %v2194, %v2201
        %v2203 = vshrl.u32 %v2040, 16
        %v2205 = vrot.slane %v2203, 3
        %v2206 = vshll.u32 %v2040, 16
        %v2208 = vrot.slane %v2206, 4
        %v2209 = vor.u32 %v2205, %v2208
        %v2210 = vshrl.u32 %v2043, 16
        %v2212 = vrot.slane %v2210, 3
        %v2213 = vshll.u32 %v2043, 16
        %v2215 = vrot.slane %v2213, 4
        %v2216 = vor.u32 %v2212, %v2215
        %v2217 = vsel %vm362, %v2209, %v2216
        %v2218 = vshrl.u32 %v1868, 16
        %v2220 = vrot.slane %v2218, 3
        %v2221 = vshll.u32 %v1868, 16
        %v2223 = vrot.slane %v2221, 4
        %v2224 = vor.u32 %v2220, %v2223
        %v2225 = vshrl.u32 %v1870, 16
        %v2227 = vrot.slane %v2225, 3
        %v2228 = vshll.u32 %v1870, 16
        %v2230 = vrot.slane %v2228, 4
        %v2231 = vor.u32 %v2227, %v2230
        %v2232 = vsel %vm362, %v2224, %v2231
        %v2233 = vshrl.u32 %v1950, 16
        %v2235 = vrot.slane %v2233, 3
        %v2236 = vshll.u32 %v1950, 16
        %v2238 = vrot.slane %v2236, 4
        %v2239 = vor.u32 %v2235, %v2238
        %v2240 = vshrl.u32 %v1953, 16
        %v2242 = vrot.slane %v2240, 3
        %v2243 = vshll.u32 %v1953, 16
        %v2245 = vrot.slane %v2243, 4
        %v2246 = vor.u32 %v2242, %v2245
        %v2247 = vsel %vm362, %v2239, %v2246
        %v2248 = vshrl.u32 %v2046, 16
        %v2250 = vrot.slane %v2248, 3
        %v2251 = vshll.u32 %v2046, 16
        %v2253 = vrot.slane %v2251, 4
        %v2254 = vor.u32 %v2250, %v2253
        %v2255 = vshrl.u32 %v2049, 16
        %v2257 = vrot.slane %v2255, 3
        %v2258 = vshll.u32 %v2049, 16
        %v2260 = vrot.slane %v2258, 4
        %v2261 = vor.u32 %v2257, %v2260
        %v2262 = vsel %vm362, %v2254, %v2261
        %v2263 = vshrl.u32 %v1873, 16
        %v2265 = vrot.slane %v2263, 3
        %v2266 = vshll.u32 %v1873, 16
        %v2268 = vrot.slane %v2266, 4
        %v2269 = vor.u32 %v2265, %v2268
        %v2270 = vshrl.u32 %v1875, 16
        %v2272 = vrot.slane %v2270, 3
        %v2273 = vshll.u32 %v1875, 16
        %v2275 = vrot.slane %v2273, 4
        %v2276 = vor.u32 %v2272, %v2275
        %v2277 = vsel %vm362, %v2269, %v2276
        %v2278 = vshrl.u32 %v1956, 16
        %v2280 = vrot.slane %v2278, 3
        %v2281 = vshll.u32 %v1956, 16
        %v2283 = vrot.slane %v2281, 4
        %v2284 = vor.u32 %v2280, %v2283
        %v2285 = vshrl.u32 %v1959, 16
        %v2287 = vrot.slane %v2285, 3
        %v2288 = vshll.u32 %v1959, 16
        %v2290 = vrot.slane %v2288, 4
        %v2291 = vor.u32 %v2287, %v2290
        %v2292 = vsel %vm362, %v2284, %v2291
        %v2293 = vshrl.u32 %v2052, 16
        %v2295 = vrot.slane %v2293, 3
        %v2296 = vshll.u32 %v2052, 16
        %v2298 = vrot.slane %v2296, 4
        %v2299 = vor.u32 %v2295, %v2298
        %v2300 = vshrl.u32 %v2055, 16
        %v2302 = vrot.slane %v2300, 3
        %v2303 = vshll.u32 %v2055, 16
        %v2305 = vrot.slane %v2303, 4
        %v2306 = vor.u32 %v2302, %v2305
        %v2307 = vsel %vm362, %v2299, %v2306
        %v2308 = vshrl.u32 %v1878, 16
        %v2310 = vrot.slane %v2308, 3
        %v2311 = vshll.u32 %v1878, 16
        %v2313 = vrot.slane %v2311, 4
        %v2314 = vor.u32 %v2310, %v2313
        %v2315 = vshrl.u32 %v1880, 16
        %v2317 = vrot.slane %v2315, 3
        %v2318 = vshll.u32 %v1880, 16
        %v2320 = vrot.slane %v2318, 4
        %v2321 = vor.u32 %v2317, %v2320
        %v2322 = vsel %vm362, %v2314, %v2321
        %v2323 = vshrl.u32 %v1962, 16
        %v2325 = vrot.slane %v2323, 3
        %v2326 = vshll.u32 %v1962, 16
        %v2328 = vrot.slane %v2326, 4
        %v2329 = vor.u32 %v2325, %v2328
        %v2330 = vshrl.u32 %v1965, 16
        %v2332 = vrot.slane %v2330, 3
        %v2333 = vshll.u32 %v1965, 16
        %v2335 = vrot.slane %v2333, 4
        %v2336 = vor.u32 %v2332, %v2335
        %v2337 = vsel %vm362, %v2329, %v2336
        %v2338 = vshrl.u32 %v2058, 16
        %v2340 = vrot.slane %v2338, 3
        %v2341 = vshll.u32 %v2058, 16
        %v2343 = vrot.slane %v2341, 4
        %v2344 = vor.u32 %v2340, %v2343
        %v2345 = vshrl.u32 %v2061, 16
        %v2347 = vrot.slane %v2345, 3
        %v2348 = vshll.u32 %v2061, 16
        %v2350 = vrot.slane %v2348, 4
        %v2351 = vor.u32 %v2347, %v2350
        %v2352 = vsel %vm362, %v2344, %v2351
        %v2353 = vshrl.u32 %v1883, 16
        %v2355 = vrot.slane %v2353, 3
        %v2356 = vshll.u32 %v1883, 16
        %v2358 = vrot.slane %v2356, 4
        %v2359 = vor.u32 %v2355, %v2358
        %v2360 = vshrl.u32 %v1885, 16
        %v2362 = vrot.slane %v2360, 3
        %v2363 = vshll.u32 %v1885, 16
        %v2365 = vrot.slane %v2363, 4
        %v2366 = vor.u32 %v2362, %v2365
        %v2367 = vsel %vm362, %v2359, %v2366
        %v2368 = vshrl.u32 %v1968, 16
        %v2370 = vrot.slane %v2368, 3
        %v2371 = vshll.u32 %v1968, 16
        %v2373 = vrot.slane %v2371, 4
        %v2374 = vor.u32 %v2370, %v2373
        %v2375 = vshrl.u32 %v1971, 16
        %v2377 = vrot.slane %v2375, 3
        %v2378 = vshll.u32 %v1971, 16
        %v2380 = vrot.slane %v2378, 4
        %v2381 = vor.u32 %v2377, %v2380
        %v2382 = vsel %vm362, %v2374, %v2381
        %v2383 = vshrl.u32 %v2064, 16
        %v2385 = vrot.slane %v2383, 3
        %v2386 = vshll.u32 %v2064, 16
        %v2388 = vrot.slane %v2386, 4
        %v2389 = vor.u32 %v2385, %v2388
        %v2390 = vshrl.u32 %v2067, 16
        %v2392 = vrot.slane %v2390, 3
        %v2393 = vshll.u32 %v2067, 16
        %v2395 = vrot.slane %v2393, 4
        %v2396 = vor.u32 %v2392, %v2395
        %v2397 = vsel %vm362, %v2389, %v2396
        %v2398 = vshrl.u32 %v1888, 16
        %v2400 = vrot.slane %v2398, 3
        %v2401 = vshll.u32 %v1888, 16
        %v2403 = vrot.slane %v2401, 4
        %v2404 = vor.u32 %v2400, %v2403
        %v2405 = vshrl.u32 %v1890, 16
        %v2407 = vrot.slane %v2405, 3
        %v2408 = vshll.u32 %v1890, 16
        %v2410 = vrot.slane %v2408, 4
        %v2411 = vor.u32 %v2407, %v2410
        %v2412 = vsel %vm362, %v2404, %v2411
        %v2413 = vshrl.u32 %v1974, 16
        %v2415 = vrot.slane %v2413, 3
        %v2416 = vshll.u32 %v1974, 16
        %v2418 = vrot.slane %v2416, 4
        %v2419 = vor.u32 %v2415, %v2418
        %v2420 = vshrl.u32 %v1977, 16
        %v2422 = vrot.slane %v2420, 3
        %v2423 = vshll.u32 %v1977, 16
        %v2425 = vrot.slane %v2423, 4
        %v2426 = vor.u32 %v2422, %v2425
        %v2427 = vsel %vm362, %v2419, %v2426
        %v2428 = vshrl.u32 %v2070, 16
        %v2430 = vrot.slane %v2428, 3
        %v2431 = vshll.u32 %v2070, 16
        %v2433 = vrot.slane %v2431, 4
        %v2434 = vor.u32 %v2430, %v2433
        %v2435 = vshrl.u32 %v2073, 16
        %v2437 = vrot.slane %v2435, 3
        %v2438 = vshll.u32 %v2073, 16
        %v2440 = vrot.slane %v2438, 4
        %v2441 = vor.u32 %v2437, %v2440
        %v2442 = vsel %vm362, %v2434, %v2441
        %v2443 = vshrl.u32 %v1893, 16
        %v2445 = vrot.slane %v2443, 3
        %v2446 = vshll.u32 %v1893, 16
        %v2448 = vrot.slane %v2446, 4
        %v2449 = vor.u32 %v2445, %v2448
        %v2450 = vshrl.u32 %v1895, 16
        %v2452 = vrot.slane %v2450, 3
        %v2453 = vshll.u32 %v1895, 16
        %v2455 = vrot.slane %v2453, 4
        %v2456 = vor.u32 %v2452, %v2455
        %v2457 = vsel %vm362, %v2449, %v2456
        %v2458 = vshrl.u32 %v1980, 16
        %v2460 = vrot.slane %v2458, 3
        %v2461 = vshll.u32 %v1980, 16
        %v2463 = vrot.slane %v2461, 4
        %v2464 = vor.u32 %v2460, %v2463
        %v2465 = vshrl.u32 %v1983, 16
        %v2467 = vrot.slane %v2465, 3
        %v2468 = vshll.u32 %v1983, 16
        %v2470 = vrot.slane %v2468, 4
        %v2471 = vor.u32 %v2467, %v2470
        %v2472 = vsel %vm362, %v2464, %v2471
        %v2473 = vshrl.u32 %v2076, 16
        %v2475 = vrot.slane %v2473, 3
        %v2476 = vshll.u32 %v2076, 16
        %v2478 = vrot.slane %v2476, 4
        %v2479 = vor.u32 %v2475, %v2478
        %v2480 = vshrl.u32 %v2079, 16
        %v2482 = vrot.slane %v2480, 3
        %v2483 = vshll.u32 %v2079, 16
        %v2485 = vrot.slane %v2483, 4
        %v2486 = vor.u32 %v2482, %v2485
        %v2487 = vsel %vm362, %v2479, %v2486
        %v2488 = vshrl.u32 %v1898, 16
        %v2490 = vrot.slane %v2488, 3
        %v2491 = vshll.u32 %v1898, 16
        %v2493 = vrot.slane %v2491, 4
        %v2494 = vor.u32 %v2490, %v2493
        %v2495 = vshrl.u32 %v1900, 16
        %v2497 = vrot.slane %v2495, 3
        %v2498 = vshll.u32 %v1900, 16
        %v2500 = vrot.slane %v2498, 4
        %v2501 = vor.u32 %v2497, %v2500
        %v2502 = vsel %vm362, %v2494, %v2501
        %v2503 = vshrl.u32 %v1986, 16
        %v2505 = vrot.slane %v2503, 3
        %v2506 = vshll.u32 %v1986, 16
        %v2508 = vrot.slane %v2506, 4
        %v2509 = vor.u32 %v2505, %v2508
        %v2510 = vshrl.u32 %v1989, 16
        %v2512 = vrot.slane %v2510, 3
        %v2513 = vshll.u32 %v1989, 16
        %v2515 = vrot.slane %v2513, 4
        %v2516 = vor.u32 %v2512, %v2515
        %v2517 = vsel %vm362, %v2509, %v2516
        %v2518 = vshrl.u32 %v2082, 16
        %v2520 = vrot.slane %v2518, 3
        %v2521 = vshll.u32 %v2082, 16
        %v2523 = vrot.slane %v2521, 4
        %v2524 = vor.u32 %v2520, %v2523
        %v2525 = vshrl.u32 %v2085, 16
        %v2527 = vrot.slane %v2525, 3
        %v2528 = vshll.u32 %v2085, 16
        %v2530 = vrot.slane %v2528, 4
        %v2531 = vor.u32 %v2527, %v2530
        %v2532 = vsel %vm362, %v2524, %v2531
        %v2533 = vshrl.u32 %v1903, 16
        %v2535 = vrot.slane %v2533, 3
        %v2536 = vshll.u32 %v1903, 16
        %v2538 = vrot.slane %v2536, 4
        %v2539 = vor.u32 %v2535, %v2538
        %v2540 = vshrl.u32 %v1905, 16
        %v2542 = vrot.slane %v2540, 3
        %v2543 = vshll.u32 %v1905, 16
        %v2545 = vrot.slane %v2543, 4
        %v2546 = vor.u32 %v2542, %v2545
        %v2547 = vsel %vm362, %v2539, %v2546
        %v2548 = vshrl.u32 %v1992, 16
        %v2550 = vrot.slane %v2548, 3
        %v2551 = vshll.u32 %v1992, 16
        %v2553 = vrot.slane %v2551, 4
        %v2554 = vor.u32 %v2550, %v2553
        %v2555 = vshrl.u32 %v1995, 16
        %v2557 = vrot.slane %v2555, 3
        %v2558 = vshll.u32 %v1995, 16
        %v2560 = vrot.slane %v2558, 4
        %v2561 = vor.u32 %v2557, %v2560
        %v2562 = vsel %vm362, %v2554, %v2561
        %v2563 = vshrl.u32 %v2088, 16
        %v2565 = vrot.slane %v2563, 3
        %v2566 = vshll.u32 %v2088, 16
        %v2568 = vrot.slane %v2566, 4
        %v2569 = vor.u32 %v2565, %v2568
        %v2570 = vshrl.u32 %v2091, 16
        %v2572 = vrot.slane %v2570, 3
        %v2573 = vshll.u32 %v2091, 16
        %v2575 = vrot.slane %v2573, 4
        %v2576 = vor.u32 %v2572, %v2575
        %v2577 = vsel %vm362, %v2569, %v2576
        %v2578 = vshrl.u32 %v1908, 16
        %v2580 = vrot.slane %v2578, 3
        %v2581 = vshll.u32 %v1908, 16
        %v2583 = vrot.slane %v2581, 4
        %v2584 = vor.u32 %v2580, %v2583
        %v2585 = vshrl.u32 %v1910, 16
        %v2587 = vrot.slane %v2585, 3
        %v2588 = vshll.u32 %v1910, 16
        %v2590 = vrot.slane %v2588, 4
        %v2591 = vor.u32 %v2587, %v2590
        %v2592 = vsel %vm362, %v2584, %v2591
        %v2593 = vshrl.u32 %v1998, 16
        %v2595 = vrot.slane %v2593, 3
        %v2596 = vshll.u32 %v1998, 16
        %v2598 = vrot.slane %v2596, 4
        %v2599 = vor.u32 %v2595, %v2598
        %v2600 = vshrl.u32 %v2001, 16
        %v2602 = vrot.slane %v2600, 3
        %v2603 = vshll.u32 %v2001, 16
        %v2605 = vrot.slane %v2603, 4
        %v2606 = vor.u32 %v2602, %v2605
        %v2607 = vsel %vm362, %v2599, %v2606
        %v2608 = vshrl.u32 %v2094, 16
        %v2610 = vrot.slane %v2608, 3
        %v2611 = vshll.u32 %v2094, 16
        %v2613 = vrot.slane %v2611, 4
        %v2614 = vor.u32 %v2610, %v2613
        %v2615 = vshrl.u32 %v2097, 16
        %v2617 = vrot.slane %v2615, 3
        %v2618 = vshll.u32 %v2097, 16
        %v2620 = vrot.slane %v2618, 4
        %v2621 = vor.u32 %v2617, %v2620
        %v2622 = vsel %vm362, %v2614, %v2621
        %v2623 = vshrl.u32 %v1913, 16
        %v2625 = vrot.slane %v2623, 3
        %v2626 = vshll.u32 %v1913, 16
        %v2628 = vrot.slane %v2626, 4
        %v2629 = vor.u32 %v2625, %v2628
        %v2630 = vshrl.u32 %v1915, 16
        %v2632 = vrot.slane %v2630, 3
        %v2633 = vshll.u32 %v1915, 16
        %v2635 = vrot.slane %v2633, 4
        %v2636 = vor.u32 %v2632, %v2635
        %v2637 = vsel %vm362, %v2629, %v2636
        %v2638 = vshrl.u32 %v2004, 16
        %v2640 = vrot.slane %v2638, 3
        %v2641 = vshll.u32 %v2004, 16
        %v2643 = vrot.slane %v2641, 4
        %v2644 = vor.u32 %v2640, %v2643
        %v2645 = vshrl.u32 %v2007, 16
        %v2647 = vrot.slane %v2645, 3
        %v2648 = vshll.u32 %v2007, 16
        %v2650 = vrot.slane %v2648, 4
        %v2651 = vor.u32 %v2647, %v2650
        %v2652 = vsel %vm362, %v2644, %v2651
        %v2653 = vshrl.u32 %v2100, 16
        %v2655 = vrot.slane %v2653, 3
        %v2656 = vshll.u32 %v2100, 16
        %v2658 = vrot.slane %v2656, 4
        %v2659 = vor.u32 %v2655, %v2658
        %v2660 = vshrl.u32 %v2103, 16
        %v2662 = vrot.slane %v2660, 3
        %v2663 = vshll.u32 %v2103, 16
        %v2665 = vrot.slane %v2663, 4
        %v2666 = vor.u32 %v2662, %v2665
        %v2667 = vsel %vm362, %v2659, %v2666
        %v2668 = vshrl.u32 %v1918, 16
        %v2670 = vrot.slane %v2668, 3
        %v2671 = vshll.u32 %v1918, 16
        %v2673 = vrot.slane %v2671, 4
        %v2674 = vor.u32 %v2670, %v2673
        %v2675 = vshrl.u32 %v1920, 16
        %v2677 = vrot.slane %v2675, 3
        %v2678 = vshll.u32 %v1920, 16
        %v2680 = vrot.slane %v2678, 4
        %v2681 = vor.u32 %v2677, %v2680
        %v2682 = vsel %vm362, %v2674, %v2681
        %v2683 = vshrl.u32 %v2010, 16
        %v2685 = vrot.slane %v2683, 3
        %v2686 = vshll.u32 %v2010, 16
        %v2688 = vrot.slane %v2686, 4
        %v2689 = vor.u32 %v2685, %v2688
        %v2690 = vshrl.u32 %v2013, 16
        %v2692 = vrot.slane %v2690, 3
        %v2693 = vshll.u32 %v2013, 16
        %v2695 = vrot.slane %v2693, 4
        %v2696 = vor.u32 %v2692, %v2695
        %v2697 = vsel %vm362, %v2689, %v2696
        %v2698 = vshrl.u32 %v2106, 16
        %v2700 = vrot.slane %v2698, 3
        %v2701 = vshll.u32 %v2106, 16
        %v2703 = vrot.slane %v2701, 4
        %v2704 = vor.u32 %v2700, %v2703
        %v2705 = vshrl.u32 %v2109, 16
        %v2707 = vrot.slane %v2705, 3
        %v2708 = vshll.u32 %v2109, 16
        %v2710 = vrot.slane %v2708, 4
        %v2711 = vor.u32 %v2707, %v2710
        %v2712 = vsel %vm362, %v2704, %v2711
        %v2713 = vshrl.u32 %v1923, 16
        %v2715 = vrot.slane %v2713, 3
        %v2716 = vshll.u32 %v1923, 16
        %v2718 = vrot.slane %v2716, 4
        %v2719 = vor.u32 %v2715, %v2718
        %v2720 = vshrl.u32 %v1925, 16
        %v2722 = vrot.slane %v2720, 3
        %v2723 = vshll.u32 %v1925, 16
        %v2725 = vrot.slane %v2723, 4
        %v2726 = vor.u32 %v2722, %v2725
        %v2727 = vsel %vm362, %v2719, %v2726
        %v2728 = vshrl.u32 %v2016, 16
        %v2730 = vrot.slane %v2728, 3
        %v2731 = vshll.u32 %v2016, 16
        %v2733 = vrot.slane %v2731, 4
        %v2734 = vor.u32 %v2730, %v2733
        %v2735 = vshrl.u32 %v2019, 16
        %v2737 = vrot.slane %v2735, 3
        %v2738 = vshll.u32 %v2019, 16
        %v2740 = vrot.slane %v2738, 4
        %v2741 = vor.u32 %v2737, %v2740
        %v2742 = vsel %vm362, %v2734, %v2741
        %v2743 = vshrl.u32 %v2112, 16
        %v2745 = vrot.slane %v2743, 3
        %v2746 = vshll.u32 %v2112, 16
        %v2748 = vrot.slane %v2746, 4
        %v2749 = vor.u32 %v2745, %v2748
        %v2750 = vshrl.u32 %v2115, 16
        %v2752 = vrot.slane %v2750, 3
        %v2753 = vshll.u32 %v2115, 16
        %v2755 = vrot.slane %v2753, 4
        %v2756 = vor.u32 %v2752, %v2755
        %v2757 = vsel %vm362, %v2749, %v2756
        %v2758 = vshrl.u32 %v1928, 16
        %v2760 = vrot.slane %v2758, 3
        %v2761 = vshll.u32 %v1928, 16
        %v2763 = vrot.slane %v2761, 4
        %v2764 = vor.u32 %v2760, %v2763
        %v2765 = vshrl.u32 %v1930, 16
        %v2767 = vrot.slane %v2765, 3
        %v2768 = vshll.u32 %v1930, 16
        %v2770 = vrot.slane %v2768, 4
        %v2771 = vor.u32 %v2767, %v2770
        %v2772 = vsel %vm362, %v2764, %v2771
        %v2773 = vshrl.u32 %v2022, 16
        %v2775 = vrot.slane %v2773, 3
        %v2776 = vshll.u32 %v2022, 16
        %v2778 = vrot.slane %v2776, 4
        %v2779 = vor.u32 %v2775, %v2778
        %v2780 = vshrl.u32 %v2025, 16
        %v2782 = vrot.slane %v2780, 3
        %v2783 = vshll.u32 %v2025, 16
        %v2785 = vrot.slane %v2783, 4
        %v2786 = vor.u32 %v2782, %v2785
        %v2787 = vsel %vm362, %v2779, %v2786
        %v2788 = vshrl.u32 %v2118, 16
        %v2790 = vrot.slane %v2788, 3
        %v2791 = vshll.u32 %v2118, 16
        %v2793 = vrot.slane %v2791, 4
        %v2794 = vor.u32 %v2790, %v2793
        %v2795 = vshrl.u32 %v2121, 16
        %v2797 = vrot.slane %v2795, 3
        %v2798 = vshll.u32 %v2121, 16
        %v2800 = vrot.slane %v2798, 4
        %v2801 = vor.u32 %v2797, %v2800
        %v2802 = vsel %vm362, %v2794, %v2801
        %v2803 = vshrl.u32 %v1933, 16
        %v2805 = vrot.slane %v2803, 3
        %v2806 = vshll.u32 %v1933, 16
        %v2808 = vrot.slane %v2806, 4
        %v2809 = vor.u32 %v2805, %v2808
        %v2810 = vshrl.u32 %v1935, 16
        %v2812 = vrot.slane %v2810, 3
        %v2813 = vshll.u32 %v1935, 16
        %v2815 = vrot.slane %v2813, 4
        %v2816 = vor.u32 %v2812, %v2815
        %v2817 = vsel %vm362, %v2809, %v2816
        %v2818 = vshrl.u32 %v2028, 16
        %v2820 = vrot.slane %v2818, 3
        %v2821 = vshll.u32 %v2028, 16
        %v2823 = vrot.slane %v2821, 4
        %v2824 = vor.u32 %v2820, %v2823
        %v2825 = vshrl.u32 %v2031, 16
        %v2827 = vrot.slane %v2825, 3
        %v2828 = vshll.u32 %v2031, 16
        %v2830 = vrot.slane %v2828, 4
        %v2831 = vor.u32 %v2827, %v2830
        %v2832 = vsel %vm362, %v2824, %v2831
        %v2833 = vshrl.u32 %v2124, 16
        %v2835 = vrot.slane %v2833, 3
        %v2836 = vshll.u32 %v2124, 16
        %v2838 = vrot.slane %v2836, 4
        %v2839 = vor.u32 %v2835, %v2838
        %v2840 = vshrl.u32 %v2127, 16
        %v2842 = vrot.slane %v2840, 3
        %v2843 = vshll.u32 %v2127, 16
        %v2845 = vrot.slane %v2843, 4
        %v2846 = vor.u32 %v2842, %v2845
        %v2847 = vsel %vm362, %v2839, %v2846
        %v2896 = vld [vmem:[#allocation9] sm:$0xf]
        %v2897 = vld [vmem:[#allocation9 + $0x4] sm:$0xf]
        %v2898 = vld [vmem:[#allocation9 + $0x8] sm:$0xf]
        %v2899 = vld [vmem:[#allocation9 + $0xc] sm:$0xf]
        %v2900 = vld [vmem:[#allocation9 + $0x10] sm:$0xf]
        %v2901 = vld [vmem:[#allocation9 + $0x14] sm:$0xf]
        %v2902 = vld [vmem:[#allocation9 + $0x18] sm:$0xf]
        %v2903 = vld [vmem:[#allocation9 + $0x1c] sm:$0xf]
        %v2904 = vld [vmem:[#allocation9 + $0x20] sm:$0xf]
        %v2905 = vld [vmem:[#allocation9 + $0x24] sm:$0xf]
        %v2906 = vld [vmem:[#allocation9 + $0x28] sm:$0xf]
        %v2907 = vld [vmem:[#allocation9 + $0x2c] sm:$0xf]
        %v2908 = vld [vmem:[#allocation9 + $0x30] sm:$0xf]
        %v2909 = vld [vmem:[#allocation9 + $0x34] sm:$0xf]
        %v2910 = vld [vmem:[#allocation9 + $0x38] sm:$0xf]
        %v2911 = vld [vmem:[#allocation9 + $0x3c] sm:$0xf]
        %v2912 = vld [vmem:[#allocation9 + $0x40] sm:$0xf]
        %v2913 = vld [vmem:[#allocation9 + $0x44] sm:$0xf]
        %v2914 = vld [vmem:[#allocation9 + $0x48] sm:$0xf]
        %v2915 = vld [vmem:[#allocation9 + $0x4c] sm:$0xf]
        %v2916 = vld [vmem:[#allocation9 + $0x50] sm:$0xf]
        %v2917 = vld [vmem:[#allocation9 + $0x54] sm:$0xf]
        %v2918 = vld [vmem:[#allocation9 + $0x58] sm:$0xf]
        %v2919 = vld [vmem:[#allocation9 + $0x5c] sm:$0xf]
        %v2920 = vld [vmem:[#allocation9 + $0x60] sm:$0xf]
        %v2921 = vld [vmem:[#allocation9 + $0x64] sm:$0xf]
        %v2922 = vld [vmem:[#allocation9 + $0x68] sm:$0xf]
        %v2923 = vld [vmem:[#allocation9 + $0x6c] sm:$0xf]
        %v2924 = vld [vmem:[#allocation9 + $0x70] sm:$0xf]
        %v2925 = vld [vmem:[#allocation9 + $0x74] sm:$0xf]
        %v2926 = vld [vmem:[#allocation9 + $0x78] sm:$0xf]
        %v2927 = vld [vmem:[#allocation9 + $0x7c] sm:$0xf]
        %v2928 = vld [vmem:[#allocation9 + $0x80] sm:$0xf]
        %v2929 = vld [vmem:[#allocation9 + $0x84] sm:$0xf]
        %v2930 = vld [vmem:[#allocation9 + $0x88] sm:$0xf]
        %v2931 = vld [vmem:[#allocation9 + $0x8c] sm:$0xf]
        %v2932 = vld [vmem:[#allocation9 + $0x90] sm:$0xf]
        %v2933 = vld [vmem:[#allocation9 + $0x94] sm:$0xf]
        %v2934 = vld [vmem:[#allocation9 + $0x98] sm:$0xf]
        %v2935 = vld [vmem:[#allocation9 + $0x9c] sm:$0xf]
        %v2936 = vld [vmem:[#allocation9 + $0xa0] sm:$0xf]
        %v2937 = vld [vmem:[#allocation9 + $0xa4] sm:$0xf]
        %v2938 = vld [vmem:[#allocation9 + $0xa8] sm:$0xf]
        %v2939 = vld [vmem:[#allocation9 + $0xac] sm:$0xf]
        %v2940 = vld [vmem:[#allocation9 + $0xb0] sm:$0xf]
        %v2941 = vld [vmem:[#allocation9 + $0xb4] sm:$0xf]
        %v2942 = vld [vmem:[#allocation9 + $0xb8] sm:$0xf]
        %v2943 = vld [vmem:[#allocation9 + $0xbc] sm:$0xf]
        %v2945 = vlaneseq
        %v2946 = vshrl.u32 %v2945, 7
        %v2947 = vsub.s32 0, %v2946
        %v2948 = vrot.slane %v861, %v2947
        %v2998 = vunpack.c.l.b16 %v2896
        %v2999 = vunpack.c.l.b16 %v2897
        %v3000 = vunpack.c.l.b16 %v2898
        %v3001 = vunpack.c.l.b16 %v2899
        %v3002 = vunpack.c.l.b16 %v2900
        %v3003 = vunpack.c.l.b16 %v2901
        %v3004 = vunpack.c.l.b16 %v2902
        %v3005 = vunpack.c.l.b16 %v2903
        %v3006 = vunpack.c.l.b16 %v2904
        %v3007 = vunpack.c.l.b16 %v2905
        %v3008 = vunpack.c.l.b16 %v2906
        %v3009 = vunpack.c.l.b16 %v2907
        %v3010 = vunpack.c.l.b16 %v2908
        %v3011 = vunpack.c.l.b16 %v2909
        %v3012 = vunpack.c.l.b16 %v2910
        %v3013 = vunpack.c.l.b16 %v2911
        %v3014 = vunpack.c.l.b16 %v2912
        %v3015 = vunpack.c.l.b16 %v2913
        %v3016 = vunpack.c.l.b16 %v2914
        %v3017 = vunpack.c.l.b16 %v2915
        %v3018 = vunpack.c.l.b16 %v2916
        %v3019 = vunpack.c.l.b16 %v2917
        %v3020 = vunpack.c.l.b16 %v2918
        %v3021 = vunpack.c.l.b16 %v2919
        %v3022 = vunpack.c.l.b16 %v2920
        %v3023 = vunpack.c.l.b16 %v2921
        %v3024 = vunpack.c.l.b16 %v2922
        %v3025 = vunpack.c.l.b16 %v2923
        %v3026 = vunpack.c.l.b16 %v2924
        %v3027 = vunpack.c.l.b16 %v2925
        %v3028 = vunpack.c.l.b16 %v2926
        %v3029 = vunpack.c.l.b16 %v2927
        %v3030 = vunpack.c.l.b16 %v2928
        %v3031 = vunpack.c.l.b16 %v2929
        %v3032 = vunpack.c.l.b16 %v2930
        %v3033 = vunpack.c.l.b16 %v2931
        %v3034 = vunpack.c.l.b16 %v2932
        %v3035 = vunpack.c.l.b16 %v2933
        %v3036 = vunpack.c.l.b16 %v2934
        %v3037 = vunpack.c.l.b16 %v2935
        %v3038 = vunpack.c.l.b16 %v2936
        %v3039 = vunpack.c.l.b16 %v2937
        %v3040 = vunpack.c.l.b16 %v2938
        %v3041 = vunpack.c.l.b16 %v2939
        %v3042 = vunpack.c.l.b16 %v2940
        %v3043 = vunpack.c.l.b16 %v2941
        %v3044 = vunpack.c.l.b16 %v2942
        %v3045 = vunpack.c.l.b16 %v2943
        %v3046 = vpack.c.b16 %v2999, %v2998
        %v3047 = vpack.c.b16 %v3001, %v3000
        %v3048 = vpack.c.b16 %v3003, %v3002
        %v3049 = vpack.c.b16 %v3005, %v3004
        %v3050 = vpack.c.b16 %v3007, %v3006
        %v3051 = vpack.c.b16 %v3009, %v3008
        %v3052 = vpack.c.b16 %v3011, %v3010
        %v3053 = vpack.c.b16 %v3013, %v3012
        %v3054 = vpack.c.b16 %v3015, %v3014
        %v3055 = vpack.c.b16 %v3017, %v3016
        %v3056 = vpack.c.b16 %v3019, %v3018
        %v3057 = vpack.c.b16 %v3021, %v3020
        %v3058 = vpack.c.b16 %v3023, %v3022
        %v3059 = vpack.c.b16 %v3025, %v3024
        %v3060 = vpack.c.b16 %v3027, %v3026
        %v3061 = vpack.c.b16 %v3029, %v3028
        %v3062 = vpack.c.b16 %v3031, %v3030
        %v3063 = vpack.c.b16 %v3033, %v3032
        %v3064 = vpack.c.b16 %v3035, %v3034
        %v3065 = vpack.c.b16 %v3037, %v3036
        %v3066 = vpack.c.b16 %v3039, %v3038
        %v3067 = vpack.c.b16 %v3041, %v3040
        %v3068 = vpack.c.b16 %v3043, %v3042
        %v3069 = vpack.c.b16 %v3045, %v3044
        %3094 = vmatprep.subr.bf16.mxu0 0
        %3095 = vmatpush1.bf16.msra.mxu0 %v3046
        %3096 = vmatprep.subr.bf16.mxu0 0
        %3097 = vmatpush1.bf16.msra.mxu0 %v3047
        %3098 = vmatprep.subr.bf16.mxu0 0
        %3099 = vmatpush1.bf16.msra.mxu0 %v3048
        %3100 = vmatprep.subr.bf16.mxu0 0
        %3101 = vmatpush1.bf16.msra.mxu0 %v3049
        %3102 = vmatprep.subr.bf16.mxu0 0
        %3103 = vmatpush1.bf16.msra.mxu0 %v3050
        %3104 = vmatprep.subr.bf16.mxu0 0
        %3105 = vmatpush1.bf16.msra.mxu0 %v3051
        %3106 = vmatprep.subr.bf16.mxu0 0
        %3107 = vmatpush1.bf16.msra.mxu0 %v3052
        %3108 = vmatprep.subr.bf16.mxu0 0
        %3109 = vmatpush1.bf16.msra.mxu0 %v3053
        %3110 = vmatprep.subr.bf16.mxu0 0
        %3111 = vmatpush1.bf16.msra.mxu0 %v3054
        %3112 = vmatprep.subr.bf16.mxu0 0
        %3113 = vmatpush1.bf16.msra.mxu0 %v3055
        %3114 = vmatprep.subr.bf16.mxu0 0
        %3115 = vmatpush1.bf16.msra.mxu0 %v3056
        %3116 = vmatprep.subr.bf16.mxu0 0
        %3117 = vmatpush1.bf16.msra.mxu0 %v3057
        %3118 = vmatprep.subr.bf16.mxu0 0
        %3119 = vmatpush1.bf16.msra.mxu0 %v3058
        %3120 = vmatprep.subr.bf16.mxu0 0
        %3121 = vmatpush1.bf16.msra.mxu0 %v3059
        %3122 = vmatprep.subr.bf16.mxu0 0
        %3123 = vmatpush1.bf16.msra.mxu0 %v3060
        %3124 = vmatprep.subr.bf16.mxu0 0
        %3125 = vmatpush1.bf16.msra.mxu0 %v3061
        %3126 = vmatprep.mubr.bf16.mxu0 %v2157
        %3127 = vmatmul.mubr.bf16.gmra.mrb[0].mxu0 %v2142
        %v3128 = vpop.f32.mrb[0].mxu0
        %v3129 = vadd.f32 %v2948, %v3128
        %v3130 = vpop.f32.mrb[0].mxu0
        %v3131 = vpop.f32.mrb[0].mxu0
        %v3132 = vadd.f32 %v2948, %v3131
        %v3133 = vpop.f32.mrb[0].mxu0
        %3134 = vmatprep.mubr.bf16.mxu0 %v2202
        %3135 = vmatmul.mubr.bf16.gmra.mrb[0].mxu0 %v2187
        %v3136 = vpop.f32.mrb[0].mxu0
        %v3137 = vadd.f32 %v2948, %v3136
        %v3138 = vpop.f32.mrb[0].mxu0
        %v3139 = vpop.f32.mrb[0].mxu0
        %v3140 = vadd.f32 %v2948, %v3139
        %v3141 = vpop.f32.mrb[0].mxu0
        %3142 = vmatprep.mubr.bf16.mxu0 %v2247
        %3143 = vmatmul.mubr.bf16.gmra.mrb[0].mxu0 %v2232
        %v3144 = vpop.f32.mrb[0].mxu0
        %v3145 = vadd.f32 %v2948, %v3144
        %v3146 = vpop.f32.mrb[0].mxu0
        %v3147 = vpop.f32.mrb[0].mxu0
        %v3148 = vadd.f32 %v2948, %v3147
        %v3149 = vpop.f32.mrb[0].mxu0
        %3150 = vmatprep.mubr.bf16.mxu0 %v2292
        %3151 = vmatmul.mubr.bf16.gmra.mrb[0].mxu0 %v2277
        %v3152 = vpop.f32.mrb[0].mxu0
        %v3153 = vadd.f32 %v2948, %v3152
        %v3154 = vpop.f32.mrb[0].mxu0
        %v3155 = vpop.f32.mrb[0].mxu0
        %v3156 = vadd.f32 %v2948, %v3155
        %v3157 = vpop.f32.mrb[0].mxu0
        %3158 = vmatprep.mubr.bf16.mxu0 %v2337
        %3159 = vmatmul.mubr.bf16.gmra.mrb[0].mxu0 %v2322
        %v3160 = vpop.f32.mrb[0].mxu0
        %v3161 = vadd.f32 %v2948, %v3160
        %v3162 = vpop.f32.mrb[0].mxu0
        %v3163 = vpop.f32.mrb[0].mxu0
        %v3164 = vadd.f32 %v2948, %v3163
        %v3165 = vpop.f32.mrb[0].mxu0
        %3166 = vmatprep.mubr.bf16.mxu0 %v2382
        %3167 = vmatmul.mubr.bf16.gmra.mrb[0].mxu0 %v2367
        %v3168 = vpop.f32.mrb[0].mxu0
        %v3169 = vadd.f32 %v2948, %v3168
        %v3170 = vpop.f32.mrb[0].mxu0
        %v3171 = vpop.f32.mrb[0].mxu0
        %v3172 = vadd.f32 %v2948, %v3171
        %v3173 = vpop.f32.mrb[0].mxu0
        %3174 = vmatprep.mubr.bf16.mxu0 %v2427
        %3175 = vmatmul.mubr.bf16.gmra.mrb[0].mxu0 %v2412
        %v3176 = vpop.f32.mrb[0].mxu0
        %v3177 = vadd.f32 %v2948, %v3176
        %v3178 = vpop.f32.mrb[0].mxu0
        %v3179 = vpop.f32.mrb[0].mxu0
        %v3180 = vadd.f32 %v2948, %v3179
        %v3181 = vpop.f32.mrb[0].mxu0
        %3182 = vmatprep.mubr.bf16.mxu0 %v2472
        %3183 = vmatmul.mubr.bf16.gmra.mrb[0].mxu0 %v2457
        %v3184 = vpop.f32.mrb[0].mxu0
        %v3185 = vadd.f32 %v2948, %v3184
        %v3186 = vpop.f32.mrb[0].mxu0
        %v3187 = vpop.f32.mrb[0].mxu0
        %v3188 = vadd.f32 %v2948, %v3187
        %v3189 = vpop.f32.mrb[0].mxu0
        %3190 = vmatprep.mubr.bf16.mxu0 %v2517
        %3191 = vmatmul.mubr.bf16.gmra.mrb[0].mxu0 %v2502
        %v3192 = vpop.f32.mrb[0].mxu0
        %v3193 = vadd.f32 %v2948, %v3192
        %v3194 = vpop.f32.mrb[0].mxu0
        %v3195 = vpop.f32.mrb[0].mxu0
        %v3196 = vadd.f32 %v2948, %v3195
        %v3197 = vpop.f32.mrb[0].mxu0
        %3198 = vmatprep.mubr.bf16.mxu0 %v2562
        %3199 = vmatmul.mubr.bf16.gmra.mrb[0].mxu0 %v2547
        %v3200 = vpop.f32.mrb[0].mxu0
        %v3201 = vadd.f32 %v2948, %v3200
        %v3202 = vpop.f32.mrb[0].mxu0
        %v3203 = vpop.f32.mrb[0].mxu0
        %v3204 = vadd.f32 %v2948, %v3203
        %v3205 = vpop.f32.mrb[0].mxu0
        %3206 = vmatprep.mubr.bf16.mxu0 %v2607
        %3207 = vmatmul.mubr.bf16.gmra.mrb[0].mxu0 %v2592
        %v3208 = vpop.f32.mrb[0].mxu0
        %v3209 = vadd.f32 %v2948, %v3208
        %v3210 = vpop.f32.mrb[0].mxu0
        %v3211 = vpop.f32.mrb[0].mxu0
        %v3212 = vadd.f32 %v2948, %v3211
        %v3213 = vpop.f32.mrb[0].mxu0
        %3214 = vmatprep.mubr.bf16.mxu0 %v2652
        %3215 = vmatmul.mubr.bf16.gmra.mrb[0].mxu0 %v2637
        %v3216 = vpop.f32.mrb[0].mxu0
        %v3217 = vadd.f32 %v2948, %v3216
        %v3218 = vpop.f32.mrb[0].mxu0
        %v3219 = vpop.f32.mrb[0].mxu0
        %v3220 = vadd.f32 %v2948, %v3219
        %v3221 = vpop.f32.mrb[0].mxu0
        %3222 = vmatprep.mubr.bf16.mxu0 %v2697
        %3223 = vmatmul.mubr.bf16.gmra.mrb[0].mxu0 %v2682
        %v3224 = vpop.f32.mrb[0].mxu0
        %v3225 = vadd.f32 %v2948, %v3224
        %v3226 = vpop.f32.mrb[0].mxu0
        %v3227 = vpop.f32.mrb[0].mxu0
        %v3228 = vadd.f32 %v2948, %v3227
        %v3229 = vpop.f32.mrb[0].mxu0
        %3230 = vmatprep.mubr.bf16.mxu0 %v2742
        %3231 = vmatmul.mubr.bf16.gmra.mrb[0].mxu0 %v2727
        %v3232 = vpop.f32.mrb[0].mxu0
        %v3233 = vadd.f32 %v2948, %v3232
        %v3234 = vpop.f32.mrb[0].mxu0
        %v3235 = vpop.f32.mrb[0].mxu0
        %v3236 = vadd.f32 %v2948, %v3235
        %v3237 = vpop.f32.mrb[0].mxu0
        %3238 = vmatprep.mubr.bf16.mxu0 %v2787
        %3239 = vmatmul.mubr.bf16.gmra.mrb[0].mxu0 %v2772
        %v3240 = vpop.f32.mrb[0].mxu0
        %v3241 = vadd.f32 %v2948, %v3240
        %v3242 = vpop.f32.mrb[0].mxu0
        %v3243 = vpop.f32.mrb[0].mxu0
        %v3244 = vadd.f32 %v2948, %v3243
        %v3245 = vpop.f32.mrb[0].mxu0
        %3246 = vmatprep.mubr.bf16.mxu0 %v2832
        %3247 = vmatmul.mubr.bf16.gmra.mrb[0].mxu0 %v2817
        %v3248 = vpop.f32.mrb[0].mxu0
        %v3249 = vadd.f32 %v2948, %v3248
        %v3250 = vpop.f32.mrb[0].mxu0
        %v3251 = vpop.f32.mrb[0].mxu0
        %v3252 = vadd.f32 %v2948, %v3251
        %v3253 = vpop.f32.mrb[0].mxu0
        %3254 = vdwg.mxu0
        %3255 = vmatprep.subr.bf16.mxu0 0
        %3256 = vmatpush1.bf16.msra.mxu0 %v3062
        %3257 = vmatprep.subr.bf16.mxu0 0
        %3258 = vmatpush1.bf16.msra.mxu0 %v3063
        %3259 = vmatprep.subr.bf16.mxu0 0
        %3260 = vmatpush1.bf16.msra.mxu0 %v3064
        %3261 = vmatprep.subr.bf16.mxu0 0
        %3262 = vmatpush1.bf16.msra.mxu0 %v3065
        %3263 = vmatprep.subr.bf16.mxu0 0
        %3264 = vmatpush1.bf16.msra.mxu0 %v3066
        %3265 = vmatprep.subr.bf16.mxu0 0
        %3266 = vmatpush1.bf16.msra.mxu0 %v3067
        %3267 = vmatprep.subr.bf16.mxu0 0
        %3268 = vmatpush1.bf16.msra.mxu0 %v3068
        %3269 = vmatprep.subr.bf16.mxu0 0
        %3270 = vmatpush1.bf16.msra.mxu0 %v3069
        %3271 = vmatprep.subr.bf16.mxu0 0
        %3272 = vmatpush1.bf16.msra.mxu0 0
        %3273 = vmatprep.subr.bf16.mxu0 0
        %3274 = vmatpush1.bf16.msra.mxu0 0
        %3275 = vmatprep.subr.bf16.mxu0 0
        %3276 = vmatpush1.bf16.msra.mxu0 0
        %3277 = vmatprep.subr.bf16.mxu0 0
        %3278 = vmatpush1.bf16.msra.mxu0 0
        %3279 = vmatprep.subr.bf16.mxu0 0
        %3280 = vmatpush1.bf16.msra.mxu0 0
        %3281 = vmatprep.subr.bf16.mxu0 0
        %3282 = vmatpush1.bf16.msra.mxu0 0
        %3283 = vmatprep.subr.bf16.mxu0 0
        %3284 = vmatpush1.bf16.msra.mxu0 0
        %3285 = vmatprep.subr.bf16.mxu0 0
        %3286 = vmatpush1.bf16.msra.mxu0 0
        %3287 = vmatprep.mubr.bf16.mxu0 0
        %3288 = vmatmul.mubr.bf16.gmra.mrb[0].mxu0 %v2172
        %v3289 = vpop.f32.mrb[0].mxu0
        %v3290 = vadd.f32 %v3129, %v3289
        %v3291 = vpop.f32.mrb[0].mxu0
        %v3292 = vpop.f32.mrb[0].mxu0
        %v3293 = vadd.f32 %v3132, %v3292
        %v3294 = vpop.f32.mrb[0].mxu0
        %3295 = vmatprep.mubr.bf16.mxu0 0
        %3296 = vmatmul.mubr.bf16.gmra.mrb[0].mxu0 %v2217
        %v3297 = vpop.f32.mrb[0].mxu0
        %v3298 = vadd.f32 %v3137, %v3297
        %v3299 = vpop.f32.mrb[0].mxu0
        %v3300 = vpop.f32.mrb[0].mxu0
        %v3301 = vadd.f32 %v3140, %v3300
        %v3302 = vpop.f32.mrb[0].mxu0
        %3303 = vmatprep.mubr.bf16.mxu0 0
        %3304 = vmatmul.mubr.bf16.gmra.mrb[0].mxu0 %v2262
        %v3305 = vpop.f32.mrb[0].mxu0
        %v3306 = vadd.f32 %v3145, %v3305
        %v3307 = vpop.f32.mrb[0].mxu0
        %v3308 = vpop.f32.mrb[0].mxu0
        %v3309 = vadd.f32 %v3148, %v3308
        %v3310 = vpop.f32.mrb[0].mxu0
        %3311 = vmatprep.mubr.bf16.mxu0 0
        %3312 = vmatmul.mubr.bf16.gmra.mrb[0].mxu0 %v2307
        %v3313 = vpop.f32.mrb[0].mxu0
        %v3314 = vadd.f32 %v3153, %v3313
        %v3315 = vpop.f32.mrb[0].mxu0
        %v3316 = vpop.f32.mrb[0].mxu0
        %v3317 = vadd.f32 %v3156, %v3316
        %v3318 = vpop.f32.mrb[0].mxu0
        %3319 = vmatprep.mubr.bf16.mxu0 0
        %3320 = vmatmul.mubr.bf16.gmra.mrb[0].mxu0 %v2352
        %v3321 = vpop.f32.mrb[0].mxu0
        %v3322 = vadd.f32 %v3161, %v3321
        %v3323 = vpop.f32.mrb[0].mxu0
        %v3324 = vpop.f32.mrb[0].mxu0
        %v3325 = vadd.f32 %v3164, %v3324
        %v3326 = vpop.f32.mrb[0].mxu0
        %3327 = vmatprep.mubr.bf16.mxu0 0
        %3328 = vmatmul.mubr.bf16.gmra.mrb[0].mxu0 %v2397
        %v3329 = vpop.f32.mrb[0].mxu0
        %v3330 = vadd.f32 %v3169, %v3329
        %v3331 = vpop.f32.mrb[0].mxu0
        %v3332 = vpop.f32.mrb[0].mxu0
        %v3333 = vadd.f32 %v3172, %v3332
        %v3334 = vpop.f32.mrb[0].mxu0
        %3335 = vmatprep.mubr.bf16.mxu0 0
        %3336 = vmatmul.mubr.bf16.gmra.mrb[0].mxu0 %v2442
        %v3337 = vpop.f32.mrb[0].mxu0
        %v3338 = vadd.f32 %v3177, %v3337
        %v3339 = vpop.f32.mrb[0].mxu0
        %v3340 = vpop.f32.mrb[0].mxu0
        %v3341 = vadd.f32 %v3180, %v3340
        %v3342 = vpop.f32.mrb[0].mxu0
        %3343 = vmatprep.mubr.bf16.mxu0 0
        %3344 = vmatmul.mubr.bf16.gmra.mrb[0].mxu0 %v2487
        %v3345 = vpop.f32.mrb[0].mxu0
        %v3346 = vadd.f32 %v3185, %v3345
        %v3347 = vpop.f32.mrb[0].mxu0
        %v3348 = vpop.f32.mrb[0].mxu0
        %v3349 = vadd.f32 %v3188, %v3348
        %v3350 = vpop.f32.mrb[0].mxu0
        %3351 = vmatprep.mubr.bf16.mxu0 0
        %3352 = vmatmul.mubr.bf16.gmra.mrb[0].mxu0 %v2532
        %v3353 = vpop.f32.mrb[0].mxu0
        %v3354 = vadd.f32 %v3193, %v3353
        %v3355 = vpop.f32.mrb[0].mxu0
        %v3356 = vpop.f32.mrb[0].mxu0
        %v3357 = vadd.f32 %v3196, %v3356
        %v3358 = vpop.f32.mrb[0].mxu0
        %3359 = vmatprep.mubr.bf16.mxu0 0
        %3360 = vmatmul.mubr.bf16.gmra.mrb[0].mxu0 %v2577
        %v3361 = vpop.f32.mrb[0].mxu0
        %v3362 = vadd.f32 %v3201, %v3361
        %v3363 = vpop.f32.mrb[0].mxu0
        %v3364 = vpop.f32.mrb[0].mxu0
        %v3365 = vadd.f32 %v3204, %v3364
        %v3366 = vpop.f32.mrb[0].mxu0
        %3367 = vmatprep.mubr.bf16.mxu0 0
        %3368 = vmatmul.mubr.bf16.gmra.mrb[0].mxu0 %v2622
        %v3369 = vpop.f32.mrb[0].mxu0
        %v3370 = vadd.f32 %v3209, %v3369
        %v3371 = vpop.f32.mrb[0].mxu0
        %v3372 = vpop.f32.mrb[0].mxu0
        %v3373 = vadd.f32 %v3212, %v3372
        %v3374 = vpop.f32.mrb[0].mxu0
        %3375 = vmatprep.mubr.bf16.mxu0 0
        %3376 = vmatmul.mubr.bf16.gmra.mrb[0].mxu0 %v2667
        %v3377 = vpop.f32.mrb[0].mxu0
        %v3378 = vadd.f32 %v3217, %v3377
        %v3379 = vpop.f32.mrb[0].mxu0
        %v3380 = vpop.f32.mrb[0].mxu0
        %v3381 = vadd.f32 %v3220, %v3380
        %v3382 = vpop.f32.mrb[0].mxu0
        %3383 = vmatprep.mubr.bf16.mxu0 0
        %3384 = vmatmul.mubr.bf16.gmra.mrb[0].mxu0 %v2712
        %v3385 = vpop.f32.mrb[0].mxu0
        %v3386 = vadd.f32 %v3225, %v3385
        %v3387 = vpop.f32.mrb[0].mxu0
        %v3388 = vpop.f32.mrb[0].mxu0
        %v3389 = vadd.f32 %v3228, %v3388
        %v3390 = vpop.f32.mrb[0].mxu0
        %3391 = vmatprep.mubr.bf16.mxu0 0
        %3392 = vmatmul.mubr.bf16.gmra.mrb[0].mxu0 %v2757
        %v3393 = vpop.f32.mrb[0].mxu0
        %v3394 = vadd.f32 %v3233, %v3393
        %v3395 = vpop.f32.mrb[0].mxu0
        %v3396 = vpop.f32.mrb[0].mxu0
        %v3397 = vadd.f32 %v3236, %v3396
        %v3398 = vpop.f32.mrb[0].mxu0
        %3399 = vmatprep.mubr.bf16.mxu0 0
        %3400 = vmatmul.mubr.bf16.gmra.mrb[0].mxu0 %v2802
        %v3401 = vpop.f32.mrb[0].mxu0
        %v3402 = vadd.f32 %v3241, %v3401
        %v3403 = vpop.f32.mrb[0].mxu0
        %v3404 = vpop.f32.mrb[0].mxu0
        %v3405 = vadd.f32 %v3244, %v3404
        %v3406 = vpop.f32.mrb[0].mxu0
        %3407 = vmatprep.mubr.bf16.mxu0 0
        %3408 = vmatmul.mubr.bf16.gmra.mrb[0].mxu0 %v2847
        %v3409 = vpop.f32.mrb[0].mxu0
        %v3410 = vadd.f32 %v3249, %v3409
        %v3411 = vpop.f32.mrb[0].mxu0
        %v3412 = vpop.f32.mrb[0].mxu0
        %v3413 = vadd.f32 %v3252, %v3412
        %v3414 = vpop.f32.mrb[0].mxu0
        %3415 = vdwg.mxu0
        %3416 = vst [vmem:[%s296] sm:$0xff] %v3290
        %3417 = vst [vmem:[%s296 + $0x8] sm:$0xff] %v3293
        %3418 = vst [vmem:[%s296 + $0x20] sm:$0xff] %v3298
        %3419 = vst [vmem:[%s296 + $0x28] sm:$0xff] %v3301
        %3420 = vst [vmem:[%s296 + $0x40] sm:$0xff] %v3306
        %3421 = vst [vmem:[%s296 + $0x48] sm:$0xff] %v3309
        %3422 = vst [vmem:[%s296 + $0x60] sm:$0xff] %v3314
        %3423 = vst [vmem:[%s296 + $0x68] sm:$0xff] %v3317
        %3424 = vst [vmem:[%s296 + $0x80] sm:$0xff] %v3322
        %3425 = vst [vmem:[%s296 + $0x88] sm:$0xff] %v3325
        %3426 = vst [vmem:[%s296 + $0xa0] sm:$0xff] %v3330
        %3427 = vst [vmem:[%s296 + $0xa8] sm:$0xff] %v3333
        %3428 = vst [vmem:[%s296 + $0xc0] sm:$0xff] %v3338
        %3429 = vst [vmem:[%s296 + $0xc8] sm:$0xff] %v3341
        %3430 = vst [vmem:[%s296 + $0xe0] sm:$0xff] %v3346
        %3431 = vst [vmem:[%s296 + $0xe8] sm:$0xff] %v3349
        %3432 = vst [vmem:[%s296 + $0x100] sm:$0xff] %v3354
        %3433 = vst [vmem:[%s296 + $0x108] sm:$0xff] %v3357
        %3434 = vst [vmem:[%s296 + $0x120] sm:$0xff] %v3362
        %3435 = vst [vmem:[%s296 + $0x128] sm:$0xff] %v3365
        %3436 = vst [vmem:[%s296 + $0x140] sm:$0xff] %v3370
        %3437 = vst [vmem:[%s296 + $0x148] sm:$0xff] %v3373
        %3438 = vst [vmem:[%s296 + $0x160] sm:$0xff] %v3378
        %3439 = vst [vmem:[%s296 + $0x168] sm:$0xff] %v3381
        %3440 = vst [vmem:[%s296 + $0x180] sm:$0xff] %v3386
        %3441 = vst [vmem:[%s296 + $0x188] sm:$0xff] %v3389
        %3442 = vst [vmem:[%s296 + $0x1a0] sm:$0xff] %v3394
        %3443 = vst [vmem:[%s296 + $0x1a8] sm:$0xff] %v3397
        %3444 = vst [vmem:[%s296 + $0x1c0] sm:$0xff] %v3402
        %3445 = vst [vmem:[%s296 + $0x1c8] sm:$0xff] %v3405
        %3446 = vst [vmem:[%s296 + $0x1e0] sm:$0xff] %v3410
        %3447 = vst [vmem:[%s296 + $0x1e8] sm:$0xff] %v3413
        %s3448 = scalar_lea.vmem [#allocation2], 32
        %v3449 = vld [vmem:[%s3448] sm:$0xf8]
        %v3450 = vld [vmem:[%s3448 + $0x8] sm:$0xf]
        %v3451 = vld [vmem:[%s3448 + $0x10] sm:$0xf8]
        %v3452 = vld [vmem:[%s3448 + $0x18] sm:$0xf]
        %v3453 = vld [vmem:[%s3448 + $0x20] sm:$0xf8]
        %v3454 = vld [vmem:[%s3448 + $0x28] sm:$0xf]
        %v3455 = vld [vmem:[%s3448 + $0x30] sm:$0xf8]
        %v3456 = vld [vmem:[%s3448 + $0x38] sm:$0xf]
        %v3457 = vld [vmem:[%s3448 + $0x40] sm:$0xf8]
        %v3458 = vld [vmem:[%s3448 + $0x48] sm:$0xf]
        %v3459 = vld [vmem:[%s3448 + $0x50] sm:$0xf8]
        %v3460 = vld [vmem:[%s3448 + $0x58] sm:$0xf]
        %v3461 = vld [vmem:[%s3448 + $0x60] sm:$0xf8]
        %v3462 = vld [vmem:[%s3448 + $0x68] sm:$0xf]
        %v3463 = vld [vmem:[%s3448 + $0x70] sm:$0xf8]
        %v3464 = vld [vmem:[%s3448 + $0x78] sm:$0xf]
        %v3465 = vld [vmem:[%s3448 + $0x80] sm:$0xf8]
        %v3466 = vld [vmem:[%s3448 + $0x88] sm:$0xf]
        %v3467 = vld [vmem:[%s3448 + $0x90] sm:$0xf8]
        %v3468 = vld [vmem:[%s3448 + $0x98] sm:$0xf]
        %v3469 = vld [vmem:[%s3448 + $0xa0] sm:$0xf8]
        %v3470 = vld [vmem:[%s3448 + $0xa8] sm:$0xf]
        %v3471 = vld [vmem:[%s3448 + $0xb0] sm:$0xf8]
        %v3472 = vld [vmem:[%s3448 + $0xb8] sm:$0xf]
        %v3473 = vld [vmem:[%s3448 + $0xc0] sm:$0xf8]
        %v3474 = vld [vmem:[%s3448 + $0xc8] sm:$0xf]
        %v3475 = vld [vmem:[%s3448 + $0xd0] sm:$0xf8]
        %v3476 = vld [vmem:[%s3448 + $0xd8] sm:$0xf]
        %v3477 = vld [vmem:[%s3448 + $0xe0] sm:$0xf8]
        %v3478 = vld [vmem:[%s3448 + $0xe8] sm:$0xf]
        %v3479 = vld [vmem:[%s3448 + $0xf0] sm:$0xf8]
        %v3480 = vld [vmem:[%s3448 + $0xf8] sm:$0xf]
        %v3481 = vld [vmem:[%s3448] sm:$0xf0]
        %v3482 = vld [vmem:[%s3448 + $0x10] sm:$0xf0]
        %v3483 = vld [vmem:[%s3448 + $0x20] sm:$0xf0]
        %v3484 = vld [vmem:[%s3448 + $0x30] sm:$0xf0]
        %v3485 = vld [vmem:[%s3448 + $0x40] sm:$0xf0]
        %v3486 = vld [vmem:[%s3448 + $0x50] sm:$0xf0]
        %v3487 = vld [vmem:[%s3448 + $0x60] sm:$0xf0]
        %v3488 = vld [vmem:[%s3448 + $0x70] sm:$0xf0]
        %v3489 = vld [vmem:[%s3448 + $0x80] sm:$0xf0]
        %v3490 = vld [vmem:[%s3448 + $0x90] sm:$0xf0]
        %v3491 = vld [vmem:[%s3448 + $0xa0] sm:$0xf0]
        %v3492 = vld [vmem:[%s3448 + $0xb0] sm:$0xf0]
        %v3493 = vld [vmem:[%s3448 + $0xc0] sm:$0xf0]
        %v3494 = vld [vmem:[%s3448 + $0xd0] sm:$0xf0]
        %v3495 = vld [vmem:[%s3448 + $0xe0] sm:$0xf0]
        %v3496 = vld [vmem:[%s3448 + $0xf0] sm:$0xf0]
        %v3497 = vld [vmem:[%s3448 + $0x8] sm:$0x1f]
        %v3498 = vld [vmem:[%s3448 + $0x18] sm:$0x1f]
        %v3499 = vld [vmem:[%s3448 + $0x28] sm:$0x1f]
        %v3500 = vld [vmem:[%s3448 + $0x38] sm:$0x1f]
        %v3501 = vld [vmem:[%s3448 + $0x48] sm:$0x1f]
        %v3502 = vld [vmem:[%s3448 + $0x58] sm:$0x1f]
        %v3503 = vld [vmem:[%s3448 + $0x68] sm:$0x1f]
        %v3504 = vld [vmem:[%s3448 + $0x78] sm:$0x1f]
        %v3505 = vld [vmem:[%s3448 + $0x88] sm:$0x1f]
        %v3506 = vld [vmem:[%s3448 + $0x98] sm:$0x1f]
        %v3507 = vld [vmem:[%s3448 + $0xa8] sm:$0x1f]
        %v3508 = vld [vmem:[%s3448 + $0xb8] sm:$0x1f]
        %v3509 = vld [vmem:[%s3448 + $0xc8] sm:$0x1f]
        %v3510 = vld [vmem:[%s3448 + $0xd8] sm:$0x1f]
        %v3511 = vld [vmem:[%s3448 + $0xe8] sm:$0x1f]
        %v3512 = vld [vmem:[%s3448 + $0xf8] sm:$0x1f]
        %v3513 = vld [vmem:[%s826] sm:$0xf8]
        %v3514 = vld [vmem:[%s826 + $0x8] sm:$0xf]
        %v3515 = vld [vmem:[%s826 + $0x10] sm:$0xf8]
        %v3516 = vld [vmem:[%s826 + $0x18] sm:$0xf]
        %v3517 = vld [vmem:[%s826 + $0x20] sm:$0xf8]
        %v3518 = vld [vmem:[%s826 + $0x28] sm:$0xf]
        %v3519 = vld [vmem:[%s826 + $0x30] sm:$0xf8]
        %v3520 = vld [vmem:[%s826 + $0x38] sm:$0xf]
        %v3521 = vld [vmem:[%s826 + $0x40] sm:$0xf8]
        %v3522 = vld [vmem:[%s826 + $0x48] sm:$0xf]
        %v3523 = vld [vmem:[%s826 + $0x50] sm:$0xf8]
        %v3524 = vld [vmem:[%s826 + $0x58] sm:$0xf]
        %v3525 = vld [vmem:[%s826 + $0x60] sm:$0xf8]
        %v3526 = vld [vmem:[%s826 + $0x68] sm:$0xf]
        %v3527 = vld [vmem:[%s826 + $0x70] sm:$0xf8]
        %v3528 = vld [vmem:[%s826 + $0x78] sm:$0xf]
        %v3529 = vld [vmem:[%s826 + $0x80] sm:$0xf8]
        %v3530 = vld [vmem:[%s826 + $0x88] sm:$0xf]
        %v3531 = vld [vmem:[%s826 + $0x90] sm:$0xf8]
        %v3532 = vld [vmem:[%s826 + $0x98] sm:$0xf]
        %v3533 = vld [vmem:[%s826 + $0xa0] sm:$0xf8]
        %v3534 = vld [vmem:[%s826 + $0xa8] sm:$0xf]
        %v3535 = vld [vmem:[%s826 + $0xb0] sm:$0xf8]
        %v3536 = vld [vmem:[%s826 + $0xb8] sm:$0xf]
        %v3537 = vld [vmem:[%s826 + $0xc0] sm:$0xf8]
        %v3538 = vld [vmem:[%s826 + $0xc8] sm:$0xf]
        %v3539 = vld [vmem:[%s826 + $0xd0] sm:$0xf8]
        %v3540 = vld [vmem:[%s826 + $0xd8] sm:$0xf]
        %v3541 = vld [vmem:[%s826 + $0xe0] sm:$0xf8]
        %v3542 = vld [vmem:[%s826 + $0xe8] sm:$0xf]
        %v3543 = vld [vmem:[%s826 + $0xf0] sm:$0xf8]
        %v3544 = vld [vmem:[%s826 + $0xf8] sm:$0xf]
        %v3545 = vld [vmem:[%s826] sm:$0xf0]
        %v3546 = vld [vmem:[%s826 + $0x10] sm:$0xf0]
        %v3547 = vld [vmem:[%s826 + $0x20] sm:$0xf0]
        %v3548 = vld [vmem:[%s826 + $0x30] sm:$0xf0]
        %v3549 = vld [vmem:[%s826 + $0x40] sm:$0xf0]
        %v3550 = vld [vmem:[%s826 + $0x50] sm:$0xf0]
        %v3551 = vld [vmem:[%s826 + $0x60] sm:$0xf0]
        %v3552 = vld [vmem:[%s826 + $0x70] sm:$0xf0]
        %v3553 = vld [vmem:[%s826 + $0x80] sm:$0xf0]
        %v3554 = vld [vmem:[%s826 + $0x90] sm:$0xf0]
        %v3555 = vld [vmem:[%s826 + $0xa0] sm:$0xf0]
        %v3556 = vld [vmem:[%s826 + $0xb0] sm:$0xf0]
        %v3557 = vld [vmem:[%s826 + $0xc0] sm:$0xf0]
        %v3558 = vld [vmem:[%s826 + $0xd0] sm:$0xf0]
        %v3559 = vld [vmem:[%s826 + $0xe0] sm:$0xf0]
        %v3560 = vld [vmem:[%s826 + $0xf0] sm:$0xf0]
        %v3561 = vld [vmem:[%s826 + $0x8] sm:$0x1f]
        %v3562 = vld [vmem:[%s826 + $0x18] sm:$0x1f]
        %v3563 = vld [vmem:[%s826 + $0x28] sm:$0x1f]
        %v3564 = vld [vmem:[%s826 + $0x38] sm:$0x1f]
        %v3565 = vld [vmem:[%s826 + $0x48] sm:$0x1f]
        %v3566 = vld [vmem:[%s826 + $0x58] sm:$0x1f]
        %v3567 = vld [vmem:[%s826 + $0x68] sm:$0x1f]
        %v3568 = vld [vmem:[%s826 + $0x78] sm:$0x1f]
        %v3569 = vld [vmem:[%s826 + $0x88] sm:$0x1f]
        %v3570 = vld [vmem:[%s826 + $0x98] sm:$0x1f]
        %v3571 = vld [vmem:[%s826 + $0xa8] sm:$0x1f]
        %v3572 = vld [vmem:[%s826 + $0xb8] sm:$0x1f]
        %v3573 = vld [vmem:[%s826 + $0xc8] sm:$0x1f]
        %v3574 = vld [vmem:[%s826 + $0xd8] sm:$0x1f]
        %v3575 = vld [vmem:[%s826 + $0xe8] sm:$0x1f]
        %v3576 = vld [vmem:[%s826 + $0xf8] sm:$0x1f]
        %v3578 = vshrl.u32 %v3481, 16
        %v3580 = vshll.u32 %v3481, 16
        %v3582 = vrot.slane %v3580, 1
        %v3583 = vor.u32 %v3578, %v3582
        %v3585 = vshll.u32 %v3450, 16
        %v3587 = vrot.slane %v3585, 1
        %v3588 = vsel %vm990, %v3583, %v3587
        %v3589 = vshrl.u32 %v3450, 16
        %v3591 = vor.u32 %v3589, %v3587
        %v3593 = vshrl.u32 %v3482, 16
        %v3595 = vshll.u32 %v3482, 16
        %v3597 = vrot.slane %v3595, 1
        %v3598 = vor.u32 %v3593, %v3597
        %v3600 = vshll.u32 %v3452, 16
        %v3602 = vrot.slane %v3600, 1
        %v3603 = vsel %vm990, %v3598, %v3602
        %v3604 = vshrl.u32 %v3452, 16
        %v3606 = vor.u32 %v3604, %v3602
        %v3608 = vshrl.u32 %v3483, 16
        %v3610 = vshll.u32 %v3483, 16
        %v3612 = vrot.slane %v3610, 1
        %v3613 = vor.u32 %v3608, %v3612
        %v3615 = vshll.u32 %v3454, 16
        %v3617 = vrot.slane %v3615, 1
        %v3618 = vsel %vm990, %v3613, %v3617
        %v3619 = vshrl.u32 %v3454, 16
        %v3621 = vor.u32 %v3619, %v3617
        %v3623 = vshrl.u32 %v3484, 16
        %v3625 = vshll.u32 %v3484, 16
        %v3627 = vrot.slane %v3625, 1
        %v3628 = vor.u32 %v3623, %v3627
        %v3630 = vshll.u32 %v3456, 16
        %v3632 = vrot.slane %v3630, 1
        %v3633 = vsel %vm990, %v3628, %v3632
        %v3634 = vshrl.u32 %v3456, 16
        %v3636 = vor.u32 %v3634, %v3632
        %v3638 = vshrl.u32 %v3485, 16
        %v3640 = vshll.u32 %v3485, 16
        %v3642 = vrot.slane %v3640, 1
        %v3643 = vor.u32 %v3638, %v3642
        %v3645 = vshll.u32 %v3458, 16
        %v3647 = vrot.slane %v3645, 1
        %v3648 = vsel %vm990, %v3643, %v3647
        %v3649 = vshrl.u32 %v3458, 16
        %v3651 = vor.u32 %v3649, %v3647
        %v3653 = vshrl.u32 %v3486, 16
        %v3655 = vshll.u32 %v3486, 16
        %v3657 = vrot.slane %v3655, 1
        %v3658 = vor.u32 %v3653, %v3657
        %v3660 = vshll.u32 %v3460, 16
        %v3662 = vrot.slane %v3660, 1
        %v3663 = vsel %vm990, %v3658, %v3662
        %v3664 = vshrl.u32 %v3460, 16
        %v3666 = vor.u32 %v3664, %v3662
        %v3668 = vshrl.u32 %v3487, 16
        %v3670 = vshll.u32 %v3487, 16
        %v3672 = vrot.slane %v3670, 1
        %v3673 = vor.u32 %v3668, %v3672
        %v3675 = vshll.u32 %v3462, 16
        %v3677 = vrot.slane %v3675, 1
        %v3678 = vsel %vm990, %v3673, %v3677
        %v3679 = vshrl.u32 %v3462, 16
        %v3681 = vor.u32 %v3679, %v3677
        %v3683 = vshrl.u32 %v3488, 16
        %v3685 = vshll.u32 %v3488, 16
        %v3687 = vrot.slane %v3685, 1
        %v3688 = vor.u32 %v3683, %v3687
        %v3690 = vshll.u32 %v3464, 16
        %v3692 = vrot.slane %v3690, 1
        %v3693 = vsel %vm990, %v3688, %v3692
        %v3694 = vshrl.u32 %v3464, 16
        %v3696 = vor.u32 %v3694, %v3692
        %v3698 = vshrl.u32 %v3489, 16
        %v3700 = vshll.u32 %v3489, 16
        %v3702 = vrot.slane %v3700, 1
        %v3703 = vor.u32 %v3698, %v3702
        %v3705 = vshll.u32 %v3466, 16
        %v3707 = vrot.slane %v3705, 1
        %v3708 = vsel %vm990, %v3703, %v3707
        %v3709 = vshrl.u32 %v3466, 16
        %v3711 = vor.u32 %v3709, %v3707
        %v3713 = vshrl.u32 %v3490, 16
        %v3715 = vshll.u32 %v3490, 16
        %v3717 = vrot.slane %v3715, 1
        %v3718 = vor.u32 %v3713, %v3717
        %v3720 = vshll.u32 %v3468, 16
        %v3722 = vrot.slane %v3720, 1
        %v3723 = vsel %vm990, %v3718, %v3722
        %v3724 = vshrl.u32 %v3468, 16
        %v3726 = vor.u32 %v3724, %v3722
        %v3728 = vshrl.u32 %v3491, 16
        %v3730 = vshll.u32 %v3491, 16
        %v3732 = vrot.slane %v3730, 1
        %v3733 = vor.u32 %v3728, %v3732
        %v3735 = vshll.u32 %v3470, 16
        %v3737 = vrot.slane %v3735, 1
        %v3738 = vsel %vm990, %v3733, %v3737
        %v3739 = vshrl.u32 %v3470, 16
        %v3741 = vor.u32 %v3739, %v3737
        %v3743 = vshrl.u32 %v3492, 16
        %v3745 = vshll.u32 %v3492, 16
        %v3747 = vrot.slane %v3745, 1
        %v3748 = vor.u32 %v3743, %v3747
        %v3750 = vshll.u32 %v3472, 16
        %v3752 = vrot.slane %v3750, 1
        %v3753 = vsel %vm990, %v3748, %v3752
        %v3754 = vshrl.u32 %v3472, 16
        %v3756 = vor.u32 %v3754, %v3752
        %v3758 = vshrl.u32 %v3493, 16
        %v3760 = vshll.u32 %v3493, 16
        %v3762 = vrot.slane %v3760, 1
        %v3763 = vor.u32 %v3758, %v3762
        %v3765 = vshll.u32 %v3474, 16
        %v3767 = vrot.slane %v3765, 1
        %v3768 = vsel %vm990, %v3763, %v3767
        %v3769 = vshrl.u32 %v3474, 16
        %v3771 = vor.u32 %v3769, %v3767
        %v3773 = vshrl.u32 %v3494, 16
        %v3775 = vshll.u32 %v3494, 16
        %v3777 = vrot.slane %v3775, 1
        %v3778 = vor.u32 %v3773, %v3777
        %v3780 = vshll.u32 %v3476, 16
        %v3782 = vrot.slane %v3780, 1
        %v3783 = vsel %vm990, %v3778, %v3782
        %v3784 = vshrl.u32 %v3476, 16
        %v3786 = vor.u32 %v3784, %v3782
        %v3788 = vshrl.u32 %v3495, 16
        %v3790 = vshll.u32 %v3495, 16
        %v3792 = vrot.slane %v3790, 1
        %v3793 = vor.u32 %v3788, %v3792
        %v3795 = vshll.u32 %v3478, 16
        %v3797 = vrot.slane %v3795, 1
        %v3798 = vsel %vm990, %v3793, %v3797
        %v3799 = vshrl.u32 %v3478, 16
        %v3801 = vor.u32 %v3799, %v3797
        %v3803 = vshrl.u32 %v3496, 16
        %v3805 = vshll.u32 %v3496, 16
        %v3807 = vrot.slane %v3805, 1
        %v3808 = vor.u32 %v3803, %v3807
        %v3810 = vshll.u32 %v3480, 16
        %v3812 = vrot.slane %v3810, 1
        %v3813 = vsel %vm990, %v3808, %v3812
        %v3814 = vshrl.u32 %v3480, 16
        %v3816 = vor.u32 %v3814, %v3812
        %3817 = vrot.lane.b32.xlu0 %v3588, 64
        %v3818 = vpop.permute.xlu0 %3817
        %3819 = vrot.lane.b32.xlu0 %v3591, 64
        %v3820 = vpop.permute.xlu0 %3819
        %3821 = vrot.lane.b32.xlu0 %v3603, 64
        %v3822 = vpop.permute.xlu0 %3821
        %3823 = vrot.lane.b32.xlu0 %v3606, 64
        %v3824 = vpop.permute.xlu0 %3823
        %3825 = vrot.lane.b32.xlu0 %v3618, 64
        %v3826 = vpop.permute.xlu0 %3825
        %3827 = vrot.lane.b32.xlu0 %v3621, 64
        %v3828 = vpop.permute.xlu0 %3827
        %3829 = vrot.lane.b32.xlu0 %v3633, 64
        %v3830 = vpop.permute.xlu0 %3829
        %3831 = vrot.lane.b32.xlu0 %v3636, 64
        %v3832 = vpop.permute.xlu0 %3831
        %3833 = vrot.lane.b32.xlu0 %v3648, 64
        %v3834 = vpop.permute.xlu0 %3833
        %3835 = vrot.lane.b32.xlu0 %v3651, 64
        %v3836 = vpop.permute.xlu0 %3835
        %3837 = vrot.lane.b32.xlu0 %v3663, 64
        %v3838 = vpop.permute.xlu0 %3837
        %3839 = vrot.lane.b32.xlu0 %v3666, 64
        %v3840 = vpop.permute.xlu0 %3839
        %3841 = vrot.lane.b32.xlu0 %v3678, 64
        %v3842 = vpop.permute.xlu0 %3841
        %3843 = vrot.lane.b32.xlu0 %v3681, 64
        %v3844 = vpop.permute.xlu0 %3843
        %3845 = vrot.lane.b32.xlu0 %v3693, 64
        %v3846 = vpop.permute.xlu0 %3845
        %3847 = vrot.lane.b32.xlu0 %v3696, 64
        %v3848 = vpop.permute.xlu0 %3847
        %3849 = vrot.lane.b32.xlu0 %v3708, 64
        %v3850 = vpop.permute.xlu0 %3849
        %3851 = vrot.lane.b32.xlu0 %v3711, 64
        %v3852 = vpop.permute.xlu0 %3851
        %3853 = vrot.lane.b32.xlu0 %v3723, 64
        %v3854 = vpop.permute.xlu0 %3853
        %3855 = vrot.lane.b32.xlu0 %v3726, 64
        %v3856 = vpop.permute.xlu0 %3855
        %3857 = vrot.lane.b32.xlu0 %v3738, 64
        %v3858 = vpop.permute.xlu0 %3857
        %3859 = vrot.lane.b32.xlu0 %v3741, 64
        %v3860 = vpop.permute.xlu0 %3859
        %3861 = vrot.lane.b32.xlu0 %v3753, 64
        %v3862 = vpop.permute.xlu0 %3861
        %3863 = vrot.lane.b32.xlu0 %v3756, 64
        %v3864 = vpop.permute.xlu0 %3863
        %3865 = vrot.lane.b32.xlu0 %v3768, 64
        %v3866 = vpop.permute.xlu0 %3865
        %3867 = vrot.lane.b32.xlu0 %v3771, 64
        %v3868 = vpop.permute.xlu0 %3867
        %3869 = vrot.lane.b32.xlu0 %v3783, 64
        %v3870 = vpop.permute.xlu0 %3869
        %3871 = vrot.lane.b32.xlu0 %v3786, 64
        %v3872 = vpop.permute.xlu0 %3871
        %3873 = vrot.lane.b32.xlu0 %v3798, 64
        %v3874 = vpop.permute.xlu0 %3873
        %3875 = vrot.lane.b32.xlu0 %v3801, 64
        %v3876 = vpop.permute.xlu0 %3875
        %3877 = vrot.lane.b32.xlu0 %v3813, 64
        %v3878 = vpop.permute.xlu0 %3877
        %3879 = vrot.lane.b32.xlu0 %v3816, 64
        %v3880 = vpop.permute.xlu0 %3879
        %v3913 = vrot.slane %v3481, 1
        %v3914 = vrot.slane %v3497, 1
        %v3915 = vsel %vm1327, %v3913, %v3914
        %v3916 = vrot.slane %v3482, 1
        %v3917 = vrot.slane %v3498, 1
        %v3918 = vsel %vm1327, %v3916, %v3917
        %v3919 = vrot.slane %v3483, 1
        %v3920 = vrot.slane %v3499, 1
        %v3921 = vsel %vm1327, %v3919, %v3920
        %v3922 = vrot.slane %v3484, 1
        %v3923 = vrot.slane %v3500, 1
        %v3924 = vsel %vm1327, %v3922, %v3923
        %v3925 = vrot.slane %v3485, 1
        %v3926 = vrot.slane %v3501, 1
        %v3927 = vsel %vm1327, %v3925, %v3926
        %v3928 = vrot.slane %v3486, 1
        %v3929 = vrot.slane %v3502, 1
        %v3930 = vsel %vm1327, %v3928, %v3929
        %v3931 = vrot.slane %v3487, 1
        %v3932 = vrot.slane %v3503, 1
        %v3933 = vsel %vm1327, %v3931, %v3932
        %v3934 = vrot.slane %v3488, 1
        %v3935 = vrot.slane %v3504, 1
        %v3936 = vsel %vm1327, %v3934, %v3935
        %v3937 = vrot.slane %v3489, 1
        %v3938 = vrot.slane %v3505, 1
        %v3939 = vsel %vm1327, %v3937, %v3938
        %v3940 = vrot.slane %v3490, 1
        %v3941 = vrot.slane %v3506, 1
        %v3942 = vsel %vm1327, %v3940, %v3941
        %v3943 = vrot.slane %v3491, 1
        %v3944 = vrot.slane %v3507, 1
        %v3945 = vsel %vm1327, %v3943, %v3944
        %v3946 = vrot.slane %v3492, 1
        %v3947 = vrot.slane %v3508, 1
        %v3948 = vsel %vm1327, %v3946, %v3947
        %v3949 = vrot.slane %v3493, 1
        %v3950 = vrot.slane %v3509, 1
        %v3951 = vsel %vm1327, %v3949, %v3950
        %v3952 = vrot.slane %v3494, 1
        %v3953 = vrot.slane %v3510, 1
        %v3954 = vsel %vm1327, %v3952, %v3953
        %v3955 = vrot.slane %v3495, 1
        %v3956 = vrot.slane %v3511, 1
        %v3957 = vsel %vm1327, %v3955, %v3956
        %v3958 = vrot.slane %v3496, 1
        %v3959 = vrot.slane %v3512, 1
        %v3960 = vsel %vm1327, %v3958, %v3959
        %3993 = vrot.lane.b32.xlu0 %v3513, 64
        %v3994 = vpop.permute.xlu0 %3993
        %3995 = vrot.lane.b32.xlu0 %v3514, 64
        %v3996 = vpop.permute.xlu0 %3995
        %3997 = vrot.lane.b32.xlu0 %v3515, 64
        %v3998 = vpop.permute.xlu0 %3997
        %3999 = vrot.lane.b32.xlu0 %v3516, 64
        %v4000 = vpop.permute.xlu0 %3999
        %4001 = vrot.lane.b32.xlu0 %v3517, 64
        %v4002 = vpop.permute.xlu0 %4001
        %4003 = vrot.lane.b32.xlu0 %v3518, 64
        %v4004 = vpop.permute.xlu0 %4003
        %4005 = vrot.lane.b32.xlu0 %v3519, 64
        %v4006 = vpop.permute.xlu0 %4005
        %4007 = vrot.lane.b32.xlu0 %v3520, 64
        %v4008 = vpop.permute.xlu0 %4007
        %4009 = vrot.lane.b32.xlu0 %v3521, 64
        %v4010 = vpop.permute.xlu0 %4009
        %4011 = vrot.lane.b32.xlu0 %v3522, 64
        %v4012 = vpop.permute.xlu0 %4011
        %4013 = vrot.lane.b32.xlu0 %v3523, 64
        %v4014 = vpop.permute.xlu0 %4013
        %4015 = vrot.lane.b32.xlu0 %v3524, 64
        %v4016 = vpop.permute.xlu0 %4015
        %4017 = vrot.lane.b32.xlu0 %v3525, 64
        %v4018 = vpop.permute.xlu0 %4017
        %4019 = vrot.lane.b32.xlu0 %v3526, 64
        %v4020 = vpop.permute.xlu0 %4019
        %4021 = vrot.lane.b32.xlu0 %v3527, 64
        %v4022 = vpop.permute.xlu0 %4021
        %4023 = vrot.lane.b32.xlu0 %v3528, 64
        %v4024 = vpop.permute.xlu0 %4023
        %4025 = vrot.lane.b32.xlu0 %v3529, 64
        %v4026 = vpop.permute.xlu0 %4025
        %4027 = vrot.lane.b32.xlu0 %v3530, 64
        %v4028 = vpop.permute.xlu0 %4027
        %4029 = vrot.lane.b32.xlu0 %v3531, 64
        %v4030 = vpop.permute.xlu0 %4029
        %4031 = vrot.lane.b32.xlu0 %v3532, 64
        %v4032 = vpop.permute.xlu0 %4031
        %4033 = vrot.lane.b32.xlu0 %v3533, 64
        %v4034 = vpop.permute.xlu0 %4033
        %4035 = vrot.lane.b32.xlu0 %v3534, 64
        %v4036 = vpop.permute.xlu0 %4035
        %4037 = vrot.lane.b32.xlu0 %v3535, 64
        %v4038 = vpop.permute.xlu0 %4037
        %4039 = vrot.lane.b32.xlu0 %v3536, 64
        %v4040 = vpop.permute.xlu0 %4039
        %4041 = vrot.lane.b32.xlu0 %v3537, 64
        %v4042 = vpop.permute.xlu0 %4041
        %4043 = vrot.lane.b32.xlu0 %v3538, 64
        %v4044 = vpop.permute.xlu0 %4043
        %4045 = vrot.lane.b32.xlu0 %v3539, 64
        %v4046 = vpop.permute.xlu0 %4045
        %4047 = vrot.lane.b32.xlu0 %v3540, 64
        %v4048 = vpop.permute.xlu0 %4047
        %4049 = vrot.lane.b32.xlu0 %v3541, 64
        %v4050 = vpop.permute.xlu0 %4049
        %4051 = vrot.lane.b32.xlu0 %v3542, 64
        %v4052 = vpop.permute.xlu0 %4051
        %4053 = vrot.lane.b32.xlu0 %v3543, 64
        %v4054 = vpop.permute.xlu0 %4053
        %4055 = vrot.lane.b32.xlu0 %v3544, 64
        %v4056 = vpop.permute.xlu0 %4055
        %v4058 = vshrl.u32 %v3545, 16
        %v4060 = vshll.u32 %v3545, 16
        %v4062 = vrot.slane %v4060, 1
        %v4063 = vor.u32 %v4058, %v4062
        %v4065 = vshll.u32 %v3514, 16
        %v4067 = vrot.slane %v4065, 1
        %v4068 = vsel %vm990, %v4063, %v4067
        %v4069 = vshrl.u32 %v3514, 16
        %v4071 = vor.u32 %v4069, %v4067
        %v4073 = vshrl.u32 %v3546, 16
        %v4075 = vshll.u32 %v3546, 16
        %v4077 = vrot.slane %v4075, 1
        %v4078 = vor.u32 %v4073, %v4077
        %v4080 = vshll.u32 %v3516, 16
        %v4082 = vrot.slane %v4080, 1
        %v4083 = vsel %vm990, %v4078, %v4082
        %v4084 = vshrl.u32 %v3516, 16
        %v4086 = vor.u32 %v4084, %v4082
        %v4088 = vshrl.u32 %v3547, 16
        %v4090 = vshll.u32 %v3547, 16
        %v4092 = vrot.slane %v4090, 1
        %v4093 = vor.u32 %v4088, %v4092
        %v4095 = vshll.u32 %v3518, 16
        %v4097 = vrot.slane %v4095, 1
        %v4098 = vsel %vm990, %v4093, %v4097
        %v4099 = vshrl.u32 %v3518, 16
        %v4101 = vor.u32 %v4099, %v4097
        %v4103 = vshrl.u32 %v3548, 16
        %v4105 = vshll.u32 %v3548, 16
        %v4107 = vrot.slane %v4105, 1
        %v4108 = vor.u32 %v4103, %v4107
        %v4110 = vshll.u32 %v3520, 16
        %v4112 = vrot.slane %v4110, 1
        %v4113 = vsel %vm990, %v4108, %v4112
        %v4114 = vshrl.u32 %v3520, 16
        %v4116 = vor.u32 %v4114, %v4112
        %v4118 = vshrl.u32 %v3549, 16
        %v4120 = vshll.u32 %v3549, 16
        %v4122 = vrot.slane %v4120, 1
        %v4123 = vor.u32 %v4118, %v4122
        %v4125 = vshll.u32 %v3522, 16
        %v4127 = vrot.slane %v4125, 1
        %v4128 = vsel %vm990, %v4123, %v4127
        %v4129 = vshrl.u32 %v3522, 16
        %v4131 = vor.u32 %v4129, %v4127
        %v4133 = vshrl.u32 %v3550, 16
        %v4135 = vshll.u32 %v3550, 16
        %v4137 = vrot.slane %v4135, 1
        %v4138 = vor.u32 %v4133, %v4137
        %v4140 = vshll.u32 %v3524, 16
        %v4142 = vrot.slane %v4140, 1
        %v4143 = vsel %vm990, %v4138, %v4142
        %v4144 = vshrl.u32 %v3524, 16
        %v4146 = vor.u32 %v4144, %v4142
        %v4148 = vshrl.u32 %v3551, 16
        %v4150 = vshll.u32 %v3551, 16
        %v4152 = vrot.slane %v4150, 1
        %v4153 = vor.u32 %v4148, %v4152
        %v4155 = vshll.u32 %v3526, 16
        %v4157 = vrot.slane %v4155, 1
        %v4158 = vsel %vm990, %v4153, %v4157
        %v4159 = vshrl.u32 %v3526, 16
        %v4161 = vor.u32 %v4159, %v4157
        %v4163 = vshrl.u32 %v3552, 16
        %v4165 = vshll.u32 %v3552, 16
        %v4167 = vrot.slane %v4165, 1
        %v4168 = vor.u32 %v4163, %v4167
        %v4170 = vshll.u32 %v3528, 16
        %v4172 = vrot.slane %v4170, 1
        %v4173 = vsel %vm990, %v4168, %v4172
        %v4174 = vshrl.u32 %v3528, 16
        %v4176 = vor.u32 %v4174, %v4172
        %v4178 = vshrl.u32 %v3553, 16
        %v4180 = vshll.u32 %v3553, 16
        %v4182 = vrot.slane %v4180, 1
        %v4183 = vor.u32 %v4178, %v4182
        %v4185 = vshll.u32 %v3530, 16
        %v4187 = vrot.slane %v4185, 1
        %v4188 = vsel %vm990, %v4183, %v4187
        %v4189 = vshrl.u32 %v3530, 16
        %v4191 = vor.u32 %v4189, %v4187
        %v4193 = vshrl.u32 %v3554, 16
        %v4195 = vshll.u32 %v3554, 16
        %v4197 = vrot.slane %v4195, 1
        %v4198 = vor.u32 %v4193, %v4197
        %v4200 = vshll.u32 %v3532, 16
        %v4202 = vrot.slane %v4200, 1
        %v4203 = vsel %vm990, %v4198, %v4202
        %v4204 = vshrl.u32 %v3532, 16
        %v4206 = vor.u32 %v4204, %v4202
        %v4208 = vshrl.u32 %v3555, 16
        %v4210 = vshll.u32 %v3555, 16
        %v4212 = vrot.slane %v4210, 1
        %v4213 = vor.u32 %v4208, %v4212
        %v4215 = vshll.u32 %v3534, 16
        %v4217 = vrot.slane %v4215, 1
        %v4218 = vsel %vm990, %v4213, %v4217
        %v4219 = vshrl.u32 %v3534, 16
        %v4221 = vor.u32 %v4219, %v4217
        %v4223 = vshrl.u32 %v3556, 16
        %v4225 = vshll.u32 %v3556, 16
        %v4227 = vrot.slane %v4225, 1
        %v4228 = vor.u32 %v4223, %v4227
        %v4230 = vshll.u32 %v3536, 16
        %v4232 = vrot.slane %v4230, 1
        %v4233 = vsel %vm990, %v4228, %v4232
        %v4234 = vshrl.u32 %v3536, 16
        %v4236 = vor.u32 %v4234, %v4232
        %v4238 = vshrl.u32 %v3557, 16
        %v4240 = vshll.u32 %v3557, 16
        %v4242 = vrot.slane %v4240, 1
        %v4243 = vor.u32 %v4238, %v4242
        %v4245 = vshll.u32 %v3538, 16
        %v4247 = vrot.slane %v4245, 1
        %v4248 = vsel %vm990, %v4243, %v4247
        %v4249 = vshrl.u32 %v3538, 16
        %v4251 = vor.u32 %v4249, %v4247
        %v4253 = vshrl.u32 %v3558, 16
        %v4255 = vshll.u32 %v3558, 16
        %v4257 = vrot.slane %v4255, 1
        %v4258 = vor.u32 %v4253, %v4257
        %v4260 = vshll.u32 %v3540, 16
        %v4262 = vrot.slane %v4260, 1
        %v4263 = vsel %vm990, %v4258, %v4262
        %v4264 = vshrl.u32 %v3540, 16
        %v4266 = vor.u32 %v4264, %v4262
        %v4268 = vshrl.u32 %v3559, 16
        %v4270 = vshll.u32 %v3559, 16
        %v4272 = vrot.slane %v4270, 1
        %v4273 = vor.u32 %v4268, %v4272
        %v4275 = vshll.u32 %v3542, 16
        %v4277 = vrot.slane %v4275, 1
        %v4278 = vsel %vm990, %v4273, %v4277
        %v4279 = vshrl.u32 %v3542, 16
        %v4281 = vor.u32 %v4279, %v4277
        %v4283 = vshrl.u32 %v3560, 16
        %v4285 = vshll.u32 %v3560, 16
        %v4287 = vrot.slane %v4285, 1
        %v4288 = vor.u32 %v4283, %v4287
        %v4290 = vshll.u32 %v3544, 16
        %v4292 = vrot.slane %v4290, 1
        %v4293 = vsel %vm990, %v4288, %v4292
        %v4294 = vshrl.u32 %v3544, 16
        %v4296 = vor.u32 %v4294, %v4292
        %v4329 = vrot.slane %v3545, 1
        %v4330 = vrot.slane %v3561, 1
        %v4331 = vsel %vm1327, %v4329, %v4330
        %v4332 = vrot.slane %v3546, 1
        %v4333 = vrot.slane %v3562, 1
        %v4334 = vsel %vm1327, %v4332, %v4333
        %v4335 = vrot.slane %v3547, 1
        %v4336 = vrot.slane %v3563, 1
        %v4337 = vsel %vm1327, %v4335, %v4336
        %v4338 = vrot.slane %v3548, 1
        %v4339 = vrot.slane %v3564, 1
        %v4340 = vsel %vm1327, %v4338, %v4339
        %v4341 = vrot.slane %v3549, 1
        %v4342 = vrot.slane %v3565, 1
        %v4343 = vsel %vm1327, %v4341, %v4342
        %v4344 = vrot.slane %v3550, 1
        %v4345 = vrot.slane %v3566, 1
        %v4346 = vsel %vm1327, %v4344, %v4345
        %v4347 = vrot.slane %v3551, 1
        %v4348 = vrot.slane %v3567, 1
        %v4349 = vsel %vm1327, %v4347, %v4348
        %v4350 = vrot.slane %v3552, 1
        %v4351 = vrot.slane %v3568, 1
        %v4352 = vsel %vm1327, %v4350, %v4351
        %v4353 = vrot.slane %v3553, 1
        %v4354 = vrot.slane %v3569, 1
        %v4355 = vsel %vm1327, %v4353, %v4354
        %v4356 = vrot.slane %v3554, 1
        %v4357 = vrot.slane %v3570, 1
        %v4358 = vsel %vm1327, %v4356, %v4357
        %v4359 = vrot.slane %v3555, 1
        %v4360 = vrot.slane %v3571, 1
        %v4361 = vsel %vm1327, %v4359, %v4360
        %v4362 = vrot.slane %v3556, 1
        %v4363 = vrot.slane %v3572, 1
        %v4364 = vsel %vm1327, %v4362, %v4363
        %v4365 = vrot.slane %v3557, 1
        %v4366 = vrot.slane %v3573, 1
        %v4367 = vsel %vm1327, %v4365, %v4366
        %v4368 = vrot.slane %v3558, 1
        %v4369 = vrot.slane %v3574, 1
        %v4370 = vsel %vm1327, %v4368, %v4369
        %v4371 = vrot.slane %v3559, 1
        %v4372 = vrot.slane %v3575, 1
        %v4373 = vsel %vm1327, %v4371, %v4372
        %v4374 = vrot.slane %v3560, 1
        %v4375 = vrot.slane %v3576, 1
        %v4376 = vsel %vm1327, %v4374, %v4375
        %4377 = vrot.lane.b32.xlu0 %v4331, 64
        %v4378 = vpop.permute.xlu0 %4377
        %4379 = vrot.lane.b32.xlu0 %v4330, 64
        %v4380 = vpop.permute.xlu0 %4379
        %4381 = vrot.lane.b32.xlu0 %v4334, 64
        %v4382 = vpop.permute.xlu0 %4381
        %4383 = vrot.lane.b32.xlu0 %v4333, 64
        %v4384 = vpop.permute.xlu0 %4383
        %4385 = vrot.lane.b32.xlu0 %v4337, 64
        %v4386 = vpop.permute.xlu0 %4385
        %4387 = vrot.lane.b32.xlu0 %v4336, 64
        %v4388 = vpop.permute.xlu0 %4387
        %4389 = vrot.lane.b32.xlu0 %v4340, 64
        %v4390 = vpop.permute.xlu0 %4389
        %4391 = vrot.lane.b32.xlu0 %v4339, 64
        %v4392 = vpop.permute.xlu0 %4391
        %4393 = vrot.lane.b32.xlu0 %v4343, 64
        %v4394 = vpop.permute.xlu0 %4393
        %4395 = vrot.lane.b32.xlu0 %v4342, 64
        %v4396 = vpop.permute.xlu0 %4395
        %4397 = vrot.lane.b32.xlu0 %v4346, 64
        %v4398 = vpop.permute.xlu0 %4397
        %4399 = vrot.lane.b32.xlu0 %v4345, 64
        %v4400 = vpop.permute.xlu0 %4399
        %4401 = vrot.lane.b32.xlu0 %v4349, 64
        %v4402 = vpop.permute.xlu0 %4401
        %4403 = vrot.lane.b32.xlu0 %v4348, 64
        %v4404 = vpop.permute.xlu0 %4403
        %4405 = vrot.lane.b32.xlu0 %v4352, 64
        %v4406 = vpop.permute.xlu0 %4405
        %4407 = vrot.lane.b32.xlu0 %v4351, 64
        %v4408 = vpop.permute.xlu0 %4407
        %4409 = vrot.lane.b32.xlu0 %v4355, 64
        %v4410 = vpop.permute.xlu0 %4409
        %4411 = vrot.lane.b32.xlu0 %v4354, 64
        %v4412 = vpop.permute.xlu0 %4411
        %4413 = vrot.lane.b32.xlu0 %v4358, 64
        %v4414 = vpop.permute.xlu0 %4413
        %4415 = vrot.lane.b32.xlu0 %v4357, 64
        %v4416 = vpop.permute.xlu0 %4415
        %4417 = vrot.lane.b32.xlu0 %v4361, 64
        %v4418 = vpop.permute.xlu0 %4417
        %4419 = vrot.lane.b32.xlu0 %v4360, 64
        %v4420 = vpop.permute.xlu0 %4419
        %4421 = vrot.lane.b32.xlu0 %v4364, 64
        %v4422 = vpop.permute.xlu0 %4421
        %4423 = vrot.lane.b32.xlu0 %v4363, 64
        %v4424 = vpop.permute.xlu0 %4423
        %4425 = vrot.lane.b32.xlu0 %v4367, 64
        %v4426 = vpop.permute.xlu0 %4425
        %4427 = vrot.lane.b32.xlu0 %v4366, 64
        %v4428 = vpop.permute.xlu0 %4427
        %4429 = vrot.lane.b32.xlu0 %v4370, 64
        %v4430 = vpop.permute.xlu0 %4429
        %4431 = vrot.lane.b32.xlu0 %v4369, 64
        %v4432 = vpop.permute.xlu0 %4431
        %4433 = vrot.lane.b32.xlu0 %v4373, 64
        %v4434 = vpop.permute.xlu0 %4433
        %4435 = vrot.lane.b32.xlu0 %v4372, 64
        %v4436 = vpop.permute.xlu0 %4435
        %4437 = vrot.lane.b32.xlu0 %v4376, 64
        %v4438 = vpop.permute.xlu0 %4437
        %4439 = vrot.lane.b32.xlu0 %v4375, 64
        %v4440 = vpop.permute.xlu0 %4439
        %v4443 = vsel %vm298, %v3449, %v3818
        %v4445 = vsel %vm298, %v3450, %v3820
        %v4448 = vsel %vm298, %v3451, %v3822
        %v4450 = vsel %vm298, %v3452, %v3824
        %v4453 = vsel %vm298, %v3453, %v3826
        %v4455 = vsel %vm298, %v3454, %v3828
        %v4458 = vsel %vm298, %v3455, %v3830
        %v4460 = vsel %vm298, %v3456, %v3832
        %v4463 = vsel %vm298, %v3457, %v3834
        %v4465 = vsel %vm298, %v3458, %v3836
        %v4468 = vsel %vm298, %v3459, %v3838
        %v4470 = vsel %vm298, %v3460, %v3840
        %v4473 = vsel %vm298, %v3461, %v3842
        %v4475 = vsel %vm298, %v3462, %v3844
        %v4478 = vsel %vm298, %v3463, %v3846
        %v4480 = vsel %vm298, %v3464, %v3848
        %v4483 = vsel %vm298, %v3465, %v3850
        %v4485 = vsel %vm298, %v3466, %v3852
        %v4488 = vsel %vm298, %v3467, %v3854
        %v4490 = vsel %vm298, %v3468, %v3856
        %v4493 = vsel %vm298, %v3469, %v3858
        %v4495 = vsel %vm298, %v3470, %v3860
        %v4498 = vsel %vm298, %v3471, %v3862
        %v4500 = vsel %vm298, %v3472, %v3864
        %v4503 = vsel %vm298, %v3473, %v3866
        %v4505 = vsel %vm298, %v3474, %v3868
        %v4508 = vsel %vm298, %v3475, %v3870
        %v4510 = vsel %vm298, %v3476, %v3872
        %v4513 = vsel %vm298, %v3477, %v3874
        %v4515 = vsel %vm298, %v3478, %v3876
        %v4518 = vsel %vm298, %v3479, %v3878
        %v4520 = vsel %vm298, %v3480, %v3880
        %v4523 = vsel %vm298, %v3915, %v3994
        %v4526 = vsel %vm298, %v3914, %v3996
        %v4529 = vsel %vm298, %v3918, %v3998
        %v4532 = vsel %vm298, %v3917, %v4000
        %v4535 = vsel %vm298, %v3921, %v4002
        %v4538 = vsel %vm298, %v3920, %v4004
        %v4541 = vsel %vm298, %v3924, %v4006
        %v4544 = vsel %vm298, %v3923, %v4008
        %v4547 = vsel %vm298, %v3927, %v4010
        %v4550 = vsel %vm298, %v3926, %v4012
        %v4553 = vsel %vm298, %v3930, %v4014
        %v4556 = vsel %vm298, %v3929, %v4016
        %v4559 = vsel %vm298, %v3933, %v4018
        %v4562 = vsel %vm298, %v3932, %v4020
        %v4565 = vsel %vm298, %v3936, %v4022
        %v4568 = vsel %vm298, %v3935, %v4024
        %v4571 = vsel %vm298, %v3939, %v4026
        %v4574 = vsel %vm298, %v3938, %v4028
        %v4577 = vsel %vm298, %v3942, %v4030
        %v4580 = vsel %vm298, %v3941, %v4032
        %v4583 = vsel %vm298, %v3945, %v4034
        %v4586 = vsel %vm298, %v3944, %v4036
        %v4589 = vsel %vm298, %v3948, %v4038
        %v4592 = vsel %vm298, %v3947, %v4040
        %v4595 = vsel %vm298, %v3951, %v4042
        %v4598 = vsel %vm298, %v3950, %v4044
        %v4601 = vsel %vm298, %v3954, %v4046
        %v4604 = vsel %vm298, %v3953, %v4048
        %v4607 = vsel %vm298, %v3957, %v4050
        %v4610 = vsel %vm298, %v3956, %v4052
        %v4613 = vsel %vm298, %v3960, %v4054
        %v4616 = vsel %vm298, %v3959, %v4056
        %v4619 = vsel %vm298, %v4068, %v4378
        %v4622 = vsel %vm298, %v4071, %v4380
        %v4625 = vsel %vm298, %v4083, %v4382
        %v4628 = vsel %vm298, %v4086, %v4384
        %v4631 = vsel %vm298, %v4098, %v4386
        %v4634 = vsel %vm298, %v4101, %v4388
        %v4637 = vsel %vm298, %v4113, %v4390
        %v4640 = vsel %vm298, %v4116, %v4392
        %v4643 = vsel %vm298, %v4128, %v4394
        %v4646 = vsel %vm298, %v4131, %v4396
        %v4649 = vsel %vm298, %v4143, %v4398
        %v4652 = vsel %vm298, %v4146, %v4400
        %v4655 = vsel %vm298, %v4158, %v4402
        %v4658 = vsel %vm298, %v4161, %v4404
        %v4661 = vsel %vm298, %v4173, %v4406
        %v4664 = vsel %vm298, %v4176, %v4408
        %v4667 = vsel %vm298, %v4188, %v4410
        %v4670 = vsel %vm298, %v4191, %v4412
        %v4673 = vsel %vm298, %v4203, %v4414
        %v4676 = vsel %vm298, %v4206, %v4416
        %v4679 = vsel %vm298, %v4218, %v4418
        %v4682 = vsel %vm298, %v4221, %v4420
        %v4685 = vsel %vm298, %v4233, %v4422
        %v4688 = vsel %vm298, %v4236, %v4424
        %v4691 = vsel %vm298, %v4248, %v4426
        %v4694 = vsel %vm298, %v4251, %v4428
        %v4697 = vsel %vm298, %v4263, %v4430
        %v4700 = vsel %vm298, %v4266, %v4432
        %v4703 = vsel %vm298, %v4278, %v4434
        %v4706 = vsel %vm298, %v4281, %v4436
        %v4709 = vsel %vm298, %v4293, %v4438
        %v4712 = vsel %vm298, %v4296, %v4440
        %v4713 = vshrl.u32 %v4443, 16
        %v4715 = vrot.slane %v4713, 3
        %v4716 = vshll.u32 %v4443, 16
        %v4718 = vrot.slane %v4716, 4
        %v4719 = vor.u32 %v4715, %v4718
        %v4720 = vshrl.u32 %v4445, 16
        %v4722 = vrot.slane %v4720, 3
        %v4723 = vshll.u32 %v4445, 16
        %v4725 = vrot.slane %v4723, 4
        %v4726 = vor.u32 %v4722, %v4725
        %v4727 = vsel %vm362, %v4719, %v4726
        %v4728 = vshrl.u32 %v4523, 16
        %v4730 = vrot.slane %v4728, 3
        %v4731 = vshll.u32 %v4523, 16
        %v4733 = vrot.slane %v4731, 4
        %v4734 = vor.u32 %v4730, %v4733
        %v4735 = vshrl.u32 %v4526, 16
        %v4737 = vrot.slane %v4735, 3
        %v4738 = vshll.u32 %v4526, 16
        %v4740 = vrot.slane %v4738, 4
        %v4741 = vor.u32 %v4737, %v4740
        %v4742 = vsel %vm362, %v4734, %v4741
        %v4743 = vshrl.u32 %v4619, 16
        %v4745 = vrot.slane %v4743, 3
        %v4746 = vshll.u32 %v4619, 16
        %v4748 = vrot.slane %v4746, 4
        %v4749 = vor.u32 %v4745, %v4748
        %v4750 = vshrl.u32 %v4622, 16
        %v4752 = vrot.slane %v4750, 3
        %v4753 = vshll.u32 %v4622, 16
        %v4755 = vrot.slane %v4753, 4
        %v4756 = vor.u32 %v4752, %v4755
        %v4757 = vsel %vm362, %v4749, %v4756
        %v4758 = vshrl.u32 %v4448, 16
        %v4760 = vrot.slane %v4758, 3
        %v4761 = vshll.u32 %v4448, 16
        %v4763 = vrot.slane %v4761, 4
        %v4764 = vor.u32 %v4760, %v4763
        %v4765 = vshrl.u32 %v4450, 16
        %v4767 = vrot.slane %v4765, 3
        %v4768 = vshll.u32 %v4450, 16
        %v4770 = vrot.slane %v4768, 4
        %v4771 = vor.u32 %v4767, %v4770
        %v4772 = vsel %vm362, %v4764, %v4771
        %v4773 = vshrl.u32 %v4529, 16
        %v4775 = vrot.slane %v4773, 3
        %v4776 = vshll.u32 %v4529, 16
        %v4778 = vrot.slane %v4776, 4
        %v4779 = vor.u32 %v4775, %v4778
        %v4780 = vshrl.u32 %v4532, 16
        %v4782 = vrot.slane %v4780, 3
        %v4783 = vshll.u32 %v4532, 16
        %v4785 = vrot.slane %v4783, 4
        %v4786 = vor.u32 %v4782, %v4785
        %v4787 = vsel %vm362, %v4779, %v4786
        %v4788 = vshrl.u32 %v4625, 16
        %v4790 = vrot.slane %v4788, 3
        %v4791 = vshll.u32 %v4625, 16
        %v4793 = vrot.slane %v4791, 4
        %v4794 = vor.u32 %v4790, %v4793
        %v4795 = vshrl.u32 %v4628, 16
        %v4797 = vrot.slane %v4795, 3
        %v4798 = vshll.u32 %v4628, 16
        %v4800 = vrot.slane %v4798, 4
        %v4801 = vor.u32 %v4797, %v4800
        %v4802 = vsel %vm362, %v4794, %v4801
        %v4803 = vshrl.u32 %v4453, 16
        %v4805 = vrot.slane %v4803, 3
        %v4806 = vshll.u32 %v4453, 16
        %v4808 = vrot.slane %v4806, 4
        %v4809 = vor.u32 %v4805, %v4808
        %v4810 = vshrl.u32 %v4455, 16
        %v4812 = vrot.slane %v4810, 3
        %v4813 = vshll.u32 %v4455, 16
        %v4815 = vrot.slane %v4813, 4
        %v4816 = vor.u32 %v4812, %v4815
        %v4817 = vsel %vm362, %v4809, %v4816
        %v4818 = vshrl.u32 %v4535, 16
        %v4820 = vrot.slane %v4818, 3
        %v4821 = vshll.u32 %v4535, 16
        %v4823 = vrot.slane %v4821, 4
        %v4824 = vor.u32 %v4820, %v4823
        %v4825 = vshrl.u32 %v4538, 16
        %v4827 = vrot.slane %v4825, 3
        %v4828 = vshll.u32 %v4538, 16
        %v4830 = vrot.slane %v4828, 4
        %v4831 = vor.u32 %v4827, %v4830
        %v4832 = vsel %vm362, %v4824, %v4831
        %v4833 = vshrl.u32 %v4631, 16
        %v4835 = vrot.slane %v4833, 3
        %v4836 = vshll.u32 %v4631, 16
        %v4838 = vrot.slane %v4836, 4
        %v4839 = vor.u32 %v4835, %v4838
        %v4840 = vshrl.u32 %v4634, 16
        %v4842 = vrot.slane %v4840, 3
        %v4843 = vshll.u32 %v4634, 16
        %v4845 = vrot.slane %v4843, 4
        %v4846 = vor.u32 %v4842, %v4845
        %v4847 = vsel %vm362, %v4839, %v4846
        %v4848 = vshrl.u32 %v4458, 16
        %v4850 = vrot.slane %v4848, 3
        %v4851 = vshll.u32 %v4458, 16
        %v4853 = vrot.slane %v4851, 4
        %v4854 = vor.u32 %v4850, %v4853
        %v4855 = vshrl.u32 %v4460, 16
        %v4857 = vrot.slane %v4855, 3
        %v4858 = vshll.u32 %v4460, 16
        %v4860 = vrot.slane %v4858, 4
        %v4861 = vor.u32 %v4857, %v4860
        %v4862 = vsel %vm362, %v4854, %v4861
        %v4863 = vshrl.u32 %v4541, 16
        %v4865 = vrot.slane %v4863, 3
        %v4866 = vshll.u32 %v4541, 16
        %v4868 = vrot.slane %v4866, 4
        %v4869 = vor.u32 %v4865, %v4868
        %v4870 = vshrl.u32 %v4544, 16
        %v4872 = vrot.slane %v4870, 3
        %v4873 = vshll.u32 %v4544, 16
        %v4875 = vrot.slane %v4873, 4
        %v4876 = vor.u32 %v4872, %v4875
        %v4877 = vsel %vm362, %v4869, %v4876
        %v4878 = vshrl.u32 %v4637, 16
        %v4880 = vrot.slane %v4878, 3
        %v4881 = vshll.u32 %v4637, 16
        %v4883 = vrot.slane %v4881, 4
        %v4884 = vor.u32 %v4880, %v4883
        %v4885 = vshrl.u32 %v4640, 16
        %v4887 = vrot.slane %v4885, 3
        %v4888 = vshll.u32 %v4640, 16
        %v4890 = vrot.slane %v4888, 4
        %v4891 = vor.u32 %v4887, %v4890
        %v4892 = vsel %vm362, %v4884, %v4891
        %v4893 = vshrl.u32 %v4463, 16
        %v4895 = vrot.slane %v4893, 3
        %v4896 = vshll.u32 %v4463, 16
        %v4898 = vrot.slane %v4896, 4
        %v4899 = vor.u32 %v4895, %v4898
        %v4900 = vshrl.u32 %v4465, 16
        %v4902 = vrot.slane %v4900, 3
        %v4903 = vshll.u32 %v4465, 16
        %v4905 = vrot.slane %v4903, 4
        %v4906 = vor.u32 %v4902, %v4905
        %v4907 = vsel %vm362, %v4899, %v4906
        %v4908 = vshrl.u32 %v4547, 16
        %v4910 = vrot.slane %v4908, 3
        %v4911 = vshll.u32 %v4547, 16
        %v4913 = vrot.slane %v4911, 4
        %v4914 = vor.u32 %v4910, %v4913
        %v4915 = vshrl.u32 %v4550, 16
        %v4917 = vrot.slane %v4915, 3
        %v4918 = vshll.u32 %v4550, 16
        %v4920 = vrot.slane %v4918, 4
        %v4921 = vor.u32 %v4917, %v4920
        %v4922 = vsel %vm362, %v4914, %v4921
        %v4923 = vshrl.u32 %v4643, 16
        %v4925 = vrot.slane %v4923, 3
        %v4926 = vshll.u32 %v4643, 16
        %v4928 = vrot.slane %v4926, 4
        %v4929 = vor.u32 %v4925, %v4928
        %v4930 = vshrl.u32 %v4646, 16
        %v4932 = vrot.slane %v4930, 3
        %v4933 = vshll.u32 %v4646, 16
        %v4935 = vrot.slane %v4933, 4
        %v4936 = vor.u32 %v4932, %v4935
        %v4937 = vsel %vm362, %v4929, %v4936
        %v4938 = vshrl.u32 %v4468, 16
        %v4940 = vrot.slane %v4938, 3
        %v4941 = vshll.u32 %v4468, 16
        %v4943 = vrot.slane %v4941, 4
        %v4944 = vor.u32 %v4940, %v4943
        %v4945 = vshrl.u32 %v4470, 16
        %v4947 = vrot.slane %v4945, 3
        %v4948 = vshll.u32 %v4470, 16
        %v4950 = vrot.slane %v4948, 4
        %v4951 = vor.u32 %v4947, %v4950
        %v4952 = vsel %vm362, %v4944, %v4951
        %v4953 = vshrl.u32 %v4553, 16
        %v4955 = vrot.slane %v4953, 3
        %v4956 = vshll.u32 %v4553, 16
        %v4958 = vrot.slane %v4956, 4
        %v4959 = vor.u32 %v4955, %v4958
        %v4960 = vshrl.u32 %v4556, 16
        %v4962 = vrot.slane %v4960, 3
        %v4963 = vshll.u32 %v4556, 16
        %v4965 = vrot.slane %v4963, 4
        %v4966 = vor.u32 %v4962, %v4965
        %v4967 = vsel %vm362, %v4959, %v4966
        %v4968 = vshrl.u32 %v4649, 16
        %v4970 = vrot.slane %v4968, 3
        %v4971 = vshll.u32 %v4649, 16
        %v4973 = vrot.slane %v4971, 4
        %v4974 = vor.u32 %v4970, %v4973
        %v4975 = vshrl.u32 %v4652, 16
        %v4977 = vrot.slane %v4975, 3
        %v4978 = vshll.u32 %v4652, 16
        %v4980 = vrot.slane %v4978, 4
        %v4981 = vor.u32 %v4977, %v4980
        %v4982 = vsel %vm362, %v4974, %v4981
        %v4983 = vshrl.u32 %v4473, 16
        %v4985 = vrot.slane %v4983, 3
        %v4986 = vshll.u32 %v4473, 16
        %v4988 = vrot.slane %v4986, 4
        %v4989 = vor.u32 %v4985, %v4988
        %v4990 = vshrl.u32 %v4475, 16
        %v4992 = vrot.slane %v4990, 3
        %v4993 = vshll.u32 %v4475, 16
        %v4995 = vrot.slane %v4993, 4
        %v4996 = vor.u32 %v4992, %v4995
        %v4997 = vsel %vm362, %v4989, %v4996
        %v4998 = vshrl.u32 %v4559, 16
        %v5000 = vrot.slane %v4998, 3
        %v5001 = vshll.u32 %v4559, 16
        %v5003 = vrot.slane %v5001, 4
        %v5004 = vor.u32 %v5000, %v5003
        %v5005 = vshrl.u32 %v4562, 16
        %v5007 = vrot.slane %v5005, 3
        %v5008 = vshll.u32 %v4562, 16
        %v5010 = vrot.slane %v5008, 4
        %v5011 = vor.u32 %v5007, %v5010
        %v5012 = vsel %vm362, %v5004, %v5011
        %v5013 = vshrl.u32 %v4655, 16
        %v5015 = vrot.slane %v5013, 3
        %v5016 = vshll.u32 %v4655, 16
        %v5018 = vrot.slane %v5016, 4
        %v5019 = vor.u32 %v5015, %v5018
        %v5020 = vshrl.u32 %v4658, 16
        %v5022 = vrot.slane %v5020, 3
        %v5023 = vshll.u32 %v4658, 16
        %v5025 = vrot.slane %v5023, 4
        %v5026 = vor.u32 %v5022, %v5025
        %v5027 = vsel %vm362, %v5019, %v5026
        %v5028 = vshrl.u32 %v4478, 16
        %v5030 = vrot.slane %v5028, 3
        %v5031 = vshll.u32 %v4478, 16
        %v5033 = vrot.slane %v5031, 4
        %v5034 = vor.u32 %v5030, %v5033
        %v5035 = vshrl.u32 %v4480, 16
        %v5037 = vrot.slane %v5035, 3
        %v5038 = vshll.u32 %v4480, 16
        %v5040 = vrot.slane %v5038, 4
        %v5041 = vor.u32 %v5037, %v5040
        %v5042 = vsel %vm362, %v5034, %v5041
        %v5043 = vshrl.u32 %v4565, 16
        %v5045 = vrot.slane %v5043, 3
        %v5046 = vshll.u32 %v4565, 16
        %v5048 = vrot.slane %v5046, 4
        %v5049 = vor.u32 %v5045, %v5048
        %v5050 = vshrl.u32 %v4568, 16
        %v5052 = vrot.slane %v5050, 3
        %v5053 = vshll.u32 %v4568, 16
        %v5055 = vrot.slane %v5053, 4
        %v5056 = vor.u32 %v5052, %v5055
        %v5057 = vsel %vm362, %v5049, %v5056
        %v5058 = vshrl.u32 %v4661, 16
        %v5060 = vrot.slane %v5058, 3
        %v5061 = vshll.u32 %v4661, 16
        %v5063 = vrot.slane %v5061, 4
        %v5064 = vor.u32 %v5060, %v5063
        %v5065 = vshrl.u32 %v4664, 16
        %v5067 = vrot.slane %v5065, 3
        %v5068 = vshll.u32 %v4664, 16
        %v5070 = vrot.slane %v5068, 4
        %v5071 = vor.u32 %v5067, %v5070
        %v5072 = vsel %vm362, %v5064, %v5071
        %v5073 = vshrl.u32 %v4483, 16
        %v5075 = vrot.slane %v5073, 3
        %v5076 = vshll.u32 %v4483, 16
        %v5078 = vrot.slane %v5076, 4
        %v5079 = vor.u32 %v5075, %v5078
        %v5080 = vshrl.u32 %v4485, 16
        %v5082 = vrot.slane %v5080, 3
        %v5083 = vshll.u32 %v4485, 16
        %v5085 = vrot.slane %v5083, 4
        %v5086 = vor.u32 %v5082, %v5085
        %v5087 = vsel %vm362, %v5079, %v5086
        %v5088 = vshrl.u32 %v4571, 16
        %v5090 = vrot.slane %v5088, 3
        %v5091 = vshll.u32 %v4571, 16
        %v5093 = vrot.slane %v5091, 4
        %v5094 = vor.u32 %v5090, %v5093
        %v5095 = vshrl.u32 %v4574, 16
        %v5097 = vrot.slane %v5095, 3
        %v5098 = vshll.u32 %v4574, 16
        %v5100 = vrot.slane %v5098, 4
        %v5101 = vor.u32 %v5097, %v5100
        %v5102 = vsel %vm362, %v5094, %v5101
        %v5103 = vshrl.u32 %v4667, 16
        %v5105 = vrot.slane %v5103, 3
        %v5106 = vshll.u32 %v4667, 16
        %v5108 = vrot.slane %v5106, 4
        %v5109 = vor.u32 %v5105, %v5108
        %v5110 = vshrl.u32 %v4670, 16
        %v5112 = vrot.slane %v5110, 3
        %v5113 = vshll.u32 %v4670, 16
        %v5115 = vrot.slane %v5113, 4
        %v5116 = vor.u32 %v5112, %v5115
        %v5117 = vsel %vm362, %v5109, %v5116
        %v5118 = vshrl.u32 %v4488, 16
        %v5120 = vrot.slane %v5118, 3
        %v5121 = vshll.u32 %v4488, 16
        %v5123 = vrot.slane %v5121, 4
        %v5124 = vor.u32 %v5120, %v5123
        %v5125 = vshrl.u32 %v4490, 16
        %v5127 = vrot.slane %v5125, 3
        %v5128 = vshll.u32 %v4490, 16
        %v5130 = vrot.slane %v5128, 4
        %v5131 = vor.u32 %v5127, %v5130
        %v5132 = vsel %vm362, %v5124, %v5131
        %v5133 = vshrl.u32 %v4577, 16
        %v5135 = vrot.slane %v5133, 3
        %v5136 = vshll.u32 %v4577, 16
        %v5138 = vrot.slane %v5136, 4
        %v5139 = vor.u32 %v5135, %v5138
        %v5140 = vshrl.u32 %v4580, 16
        %v5142 = vrot.slane %v5140, 3
        %v5143 = vshll.u32 %v4580, 16
        %v5145 = vrot.slane %v5143, 4
        %v5146 = vor.u32 %v5142, %v5145
        %v5147 = vsel %vm362, %v5139, %v5146
        %v5148 = vshrl.u32 %v4673, 16
        %v5150 = vrot.slane %v5148, 3
        %v5151 = vshll.u32 %v4673, 16
        %v5153 = vrot.slane %v5151, 4
        %v5154 = vor.u32 %v5150, %v5153
        %v5155 = vshrl.u32 %v4676, 16
        %v5157 = vrot.slane %v5155, 3
        %v5158 = vshll.u32 %v4676, 16
        %v5160 = vrot.slane %v5158, 4
        %v5161 = vor.u32 %v5157, %v5160
        %v5162 = vsel %vm362, %v5154, %v5161
        %v5163 = vshrl.u32 %v4493, 16
        %v5165 = vrot.slane %v5163, 3
        %v5166 = vshll.u32 %v4493, 16
        %v5168 = vrot.slane %v5166, 4
        %v5169 = vor.u32 %v5165, %v5168
        %v5170 = vshrl.u32 %v4495, 16
        %v5172 = vrot.slane %v5170, 3
        %v5173 = vshll.u32 %v4495, 16
        %v5175 = vrot.slane %v5173, 4
        %v5176 = vor.u32 %v5172, %v5175
        %v5177 = vsel %vm362, %v5169, %v5176
        %v5178 = vshrl.u32 %v4583, 16
        %v5180 = vrot.slane %v5178, 3
        %v5181 = vshll.u32 %v4583, 16
        %v5183 = vrot.slane %v5181, 4
        %v5184 = vor.u32 %v5180, %v5183
        %v5185 = vshrl.u32 %v4586, 16
        %v5187 = vrot.slane %v5185, 3
        %v5188 = vshll.u32 %v4586, 16
        %v5190 = vrot.slane %v5188, 4
        %v5191 = vor.u32 %v5187, %v5190
        %v5192 = vsel %vm362, %v5184, %v5191
        %v5193 = vshrl.u32 %v4679, 16
        %v5195 = vrot.slane %v5193, 3
        %v5196 = vshll.u32 %v4679, 16
        %v5198 = vrot.slane %v5196, 4
        %v5199 = vor.u32 %v5195, %v5198
        %v5200 = vshrl.u32 %v4682, 16
        %v5202 = vrot.slane %v5200, 3
        %v5203 = vshll.u32 %v4682, 16
        %v5205 = vrot.slane %v5203, 4
        %v5206 = vor.u32 %v5202, %v5205
        %v5207 = vsel %vm362, %v5199, %v5206
        %v5208 = vshrl.u32 %v4498, 16
        %v5210 = vrot.slane %v5208, 3
        %v5211 = vshll.u32 %v4498, 16
        %v5213 = vrot.slane %v5211, 4
        %v5214 = vor.u32 %v5210, %v5213
        %v5215 = vshrl.u32 %v4500, 16
        %v5217 = vrot.slane %v5215, 3
        %v5218 = vshll.u32 %v4500, 16
        %v5220 = vrot.slane %v5218, 4
        %v5221 = vor.u32 %v5217, %v5220
        %v5222 = vsel %vm362, %v5214, %v5221
        %v5223 = vshrl.u32 %v4589, 16
        %v5225 = vrot.slane %v5223, 3
        %v5226 = vshll.u32 %v4589, 16
        %v5228 = vrot.slane %v5226, 4
        %v5229 = vor.u32 %v5225, %v5228
        %v5230 = vshrl.u32 %v4592, 16
        %v5232 = vrot.slane %v5230, 3
        %v5233 = vshll.u32 %v4592, 16
        %v5235 = vrot.slane %v5233, 4
        %v5236 = vor.u32 %v5232, %v5235
        %v5237 = vsel %vm362, %v5229, %v5236
        %v5238 = vshrl.u32 %v4685, 16
        %v5240 = vrot.slane %v5238, 3
        %v5241 = vshll.u32 %v4685, 16
        %v5243 = vrot.slane %v5241, 4
        %v5244 = vor.u32 %v5240, %v5243
        %v5245 = vshrl.u32 %v4688, 16
        %v5247 = vrot.slane %v5245, 3
        %v5248 = vshll.u32 %v4688, 16
        %v5250 = vrot.slane %v5248, 4
        %v5251 = vor.u32 %v5247, %v5250
        %v5252 = vsel %vm362, %v5244, %v5251
        %v5253 = vshrl.u32 %v4503, 16
        %v5255 = vrot.slane %v5253, 3
        %v5256 = vshll.u32 %v4503, 16
        %v5258 = vrot.slane %v5256, 4
        %v5259 = vor.u32 %v5255, %v5258
        %v5260 = vshrl.u32 %v4505, 16
        %v5262 = vrot.slane %v5260, 3
        %v5263 = vshll.u32 %v4505, 16
        %v5265 = vrot.slane %v5263, 4
        %v5266 = vor.u32 %v5262, %v5265
        %v5267 = vsel %vm362, %v5259, %v5266
        %v5268 = vshrl.u32 %v4595, 16
        %v5270 = vrot.slane %v5268, 3
        %v5271 = vshll.u32 %v4595, 16
        %v5273 = vrot.slane %v5271, 4
        %v5274 = vor.u32 %v5270, %v5273
        %v5275 = vshrl.u32 %v4598, 16
        %v5277 = vrot.slane %v5275, 3
        %v5278 = vshll.u32 %v4598, 16
        %v5280 = vrot.slane %v5278, 4
        %v5281 = vor.u32 %v5277, %v5280
        %v5282 = vsel %vm362, %v5274, %v5281
        %v5283 = vshrl.u32 %v4691, 16
        %v5285 = vrot.slane %v5283, 3
        %v5286 = vshll.u32 %v4691, 16
        %v5288 = vrot.slane %v5286, 4
        %v5289 = vor.u32 %v5285, %v5288
        %v5290 = vshrl.u32 %v4694, 16
        %v5292 = vrot.slane %v5290, 3
        %v5293 = vshll.u32 %v4694, 16
        %v5295 = vrot.slane %v5293, 4
        %v5296 = vor.u32 %v5292, %v5295
        %v5297 = vsel %vm362, %v5289, %v5296
        %v5298 = vshrl.u32 %v4508, 16
        %v5300 = vrot.slane %v5298, 3
        %v5301 = vshll.u32 %v4508, 16
        %v5303 = vrot.slane %v5301, 4
        %v5304 = vor.u32 %v5300, %v5303
        %v5305 = vshrl.u32 %v4510, 16
        %v5307 = vrot.slane %v5305, 3
        %v5308 = vshll.u32 %v4510, 16
        %v5310 = vrot.slane %v5308, 4
        %v5311 = vor.u32 %v5307, %v5310
        %v5312 = vsel %vm362, %v5304, %v5311
        %v5313 = vshrl.u32 %v4601, 16
        %v5315 = vrot.slane %v5313, 3
        %v5316 = vshll.u32 %v4601, 16
        %v5318 = vrot.slane %v5316, 4
        %v5319 = vor.u32 %v5315, %v5318
        %v5320 = vshrl.u32 %v4604, 16
        %v5322 = vrot.slane %v5320, 3
        %v5323 = vshll.u32 %v4604, 16
        %v5325 = vrot.slane %v5323, 4
        %v5326 = vor.u32 %v5322, %v5325
        %v5327 = vsel %vm362, %v5319, %v5326
        %v5328 = vshrl.u32 %v4697, 16
        %v5330 = vrot.slane %v5328, 3
        %v5331 = vshll.u32 %v4697, 16
        %v5333 = vrot.slane %v5331, 4
        %v5334 = vor.u32 %v5330, %v5333
        %v5335 = vshrl.u32 %v4700, 16
        %v5337 = vrot.slane %v5335, 3
        %v5338 = vshll.u32 %v4700, 16
        %v5340 = vrot.slane %v5338, 4
        %v5341 = vor.u32 %v5337, %v5340
        %v5342 = vsel %vm362, %v5334, %v5341
        %v5343 = vshrl.u32 %v4513, 16
        %v5345 = vrot.slane %v5343, 3
        %v5346 = vshll.u32 %v4513, 16
        %v5348 = vrot.slane %v5346, 4
        %v5349 = vor.u32 %v5345, %v5348
        %v5350 = vshrl.u32 %v4515, 16
        %v5352 = vrot.slane %v5350, 3
        %v5353 = vshll.u32 %v4515, 16
        %v5355 = vrot.slane %v5353, 4
        %v5356 = vor.u32 %v5352, %v5355
        %v5357 = vsel %vm362, %v5349, %v5356
        %v5358 = vshrl.u32 %v4607, 16
        %v5360 = vrot.slane %v5358, 3
        %v5361 = vshll.u32 %v4607, 16
        %v5363 = vrot.slane %v5361, 4
        %v5364 = vor.u32 %v5360, %v5363
        %v5365 = vshrl.u32 %v4610, 16
        %v5367 = vrot.slane %v5365, 3
        %v5368 = vshll.u32 %v4610, 16
        %v5370 = vrot.slane %v5368, 4
        %v5371 = vor.u32 %v5367, %v5370
        %v5372 = vsel %vm362, %v5364, %v5371
        %v5373 = vshrl.u32 %v4703, 16
        %v5375 = vrot.slane %v5373, 3
        %v5376 = vshll.u32 %v4703, 16
        %v5378 = vrot.slane %v5376, 4
        %v5379 = vor.u32 %v5375, %v5378
        %v5380 = vshrl.u32 %v4706, 16
        %v5382 = vrot.slane %v5380, 3
        %v5383 = vshll.u32 %v4706, 16
        %v5385 = vrot.slane %v5383, 4
        %v5386 = vor.u32 %v5382, %v5385
        %v5387 = vsel %vm362, %v5379, %v5386
        %v5388 = vshrl.u32 %v4518, 16
        %v5390 = vrot.slane %v5388, 3
        %v5391 = vshll.u32 %v4518, 16
        %v5393 = vrot.slane %v5391, 4
        %v5394 = vor.u32 %v5390, %v5393
        %v5395 = vshrl.u32 %v4520, 16
        %v5397 = vrot.slane %v5395, 3
        %v5398 = vshll.u32 %v4520, 16
        %v5400 = vrot.slane %v5398, 4
        %v5401 = vor.u32 %v5397, %v5400
        %v5402 = vsel %vm362, %v5394, %v5401
        %v5403 = vshrl.u32 %v4613, 16
        %v5405 = vrot.slane %v5403, 3
        %v5406 = vshll.u32 %v4613, 16
        %v5408 = vrot.slane %v5406, 4
        %v5409 = vor.u32 %v5405, %v5408
        %v5410 = vshrl.u32 %v4616, 16
        %v5412 = vrot.slane %v5410, 3
        %v5413 = vshll.u32 %v4616, 16
        %v5415 = vrot.slane %v5413, 4
        %v5416 = vor.u32 %v5412, %v5415
        %v5417 = vsel %vm362, %v5409, %v5416
        %v5418 = vshrl.u32 %v4709, 16
        %v5420 = vrot.slane %v5418, 3
        %v5421 = vshll.u32 %v4709, 16
        %v5423 = vrot.slane %v5421, 4
        %v5424 = vor.u32 %v5420, %v5423
        %v5425 = vshrl.u32 %v4712, 16
        %v5427 = vrot.slane %v5425, 3
        %v5428 = vshll.u32 %v4712, 16
        %v5430 = vrot.slane %v5428, 4
        %v5431 = vor.u32 %v5427, %v5430
        %v5432 = vsel %vm362, %v5424, %v5431
        %s5481 = scalar_lea.vmem [#allocation9], 192
        %v5482 = vld [vmem:[%s5481] sm:$0xf]
        %v5483 = vld [vmem:[%s5481 + $0x4] sm:$0xf]
        %v5484 = vld [vmem:[%s5481 + $0x8] sm:$0xf]
        %v5485 = vld [vmem:[%s5481 + $0xc] sm:$0xf]
        %v5486 = vld [vmem:[%s5481 + $0x10] sm:$0xf]
        %v5487 = vld [vmem:[%s5481 + $0x14] sm:$0xf]
        %v5488 = vld [vmem:[%s5481 + $0x18] sm:$0xf]
        %v5489 = vld [vmem:[%s5481 + $0x1c] sm:$0xf]
        %v5490 = vld [vmem:[%s5481 + $0x20] sm:$0xf]
        %v5491 = vld [vmem:[%s5481 + $0x24] sm:$0xf]
        %v5492 = vld [vmem:[%s5481 + $0x28] sm:$0xf]
        %v5493 = vld [vmem:[%s5481 + $0x2c] sm:$0xf]
        %v5494 = vld [vmem:[%s5481 + $0x30] sm:$0xf]
        %v5495 = vld [vmem:[%s5481 + $0x34] sm:$0xf]
        %v5496 = vld [vmem:[%s5481 + $0x38] sm:$0xf]
        %v5497 = vld [vmem:[%s5481 + $0x3c] sm:$0xf]
        %v5498 = vld [vmem:[%s5481 + $0x40] sm:$0xf]
        %v5499 = vld [vmem:[%s5481 + $0x44] sm:$0xf]
        %v5500 = vld [vmem:[%s5481 + $0x48] sm:$0xf]
        %v5501 = vld [vmem:[%s5481 + $0x4c] sm:$0xf]
        %v5502 = vld [vmem:[%s5481 + $0x50] sm:$0xf]
        %v5503 = vld [vmem:[%s5481 + $0x54] sm:$0xf]
        %v5504 = vld [vmem:[%s5481 + $0x58] sm:$0xf]
        %v5505 = vld [vmem:[%s5481 + $0x5c] sm:$0xf]
        %v5506 = vld [vmem:[%s5481 + $0x60] sm:$0xf]
        %v5507 = vld [vmem:[%s5481 + $0x64] sm:$0xf]
        %v5508 = vld [vmem:[%s5481 + $0x68] sm:$0xf]
        %v5509 = vld [vmem:[%s5481 + $0x6c] sm:$0xf]
        %v5510 = vld [vmem:[%s5481 + $0x70] sm:$0xf]
        %v5511 = vld [vmem:[%s5481 + $0x74] sm:$0xf]
        %v5512 = vld [vmem:[%s5481 + $0x78] sm:$0xf]
        %v5513 = vld [vmem:[%s5481 + $0x7c] sm:$0xf]
        %v5514 = vld [vmem:[%s5481 + $0x80] sm:$0xf]
        %v5515 = vld [vmem:[%s5481 + $0x84] sm:$0xf]
        %v5516 = vld [vmem:[%s5481 + $0x88] sm:$0xf]
        %v5517 = vld [vmem:[%s5481 + $0x8c] sm:$0xf]
        %v5518 = vld [vmem:[%s5481 + $0x90] sm:$0xf]
        %v5519 = vld [vmem:[%s5481 + $0x94] sm:$0xf]
        %v5520 = vld [vmem:[%s5481 + $0x98] sm:$0xf]
        %v5521 = vld [vmem:[%s5481 + $0x9c] sm:$0xf]
        %v5522 = vld [vmem:[%s5481 + $0xa0] sm:$0xf]
        %v5523 = vld [vmem:[%s5481 + $0xa4] sm:$0xf]
        %v5524 = vld [vmem:[%s5481 + $0xa8] sm:$0xf]
        %v5525 = vld [vmem:[%s5481 + $0xac] sm:$0xf]
        %v5526 = vld [vmem:[%s5481 + $0xb0] sm:$0xf]
        %v5527 = vld [vmem:[%s5481 + $0xb4] sm:$0xf]
        %v5528 = vld [vmem:[%s5481 + $0xb8] sm:$0xf]
        %v5529 = vld [vmem:[%s5481 + $0xbc] sm:$0xf]
        %v5578 = vunpack.c.l.b16 %v5482
        %v5579 = vunpack.c.l.b16 %v5483
        %v5580 = vunpack.c.l.b16 %v5484
        %v5581 = vunpack.c.l.b16 %v5485
        %v5582 = vunpack.c.l.b16 %v5486
        %v5583 = vunpack.c.l.b16 %v5487
        %v5584 = vunpack.c.l.b16 %v5488
        %v5585 = vunpack.c.l.b16 %v5489
        %v5586 = vunpack.c.l.b16 %v5490
        %v5587 = vunpack.c.l.b16 %v5491
        %v5588 = vunpack.c.l.b16 %v5492
        %v5589 = vunpack.c.l.b16 %v5493
        %v5590 = vunpack.c.l.b16 %v5494
        %v5591 = vunpack.c.l.b16 %v5495
        %v5592 = vunpack.c.l.b16 %v5496
        %v5593 = vunpack.c.l.b16 %v5497
        %v5594 = vunpack.c.l.b16 %v5498
        %v5595 = vunpack.c.l.b16 %v5499
        %v5596 = vunpack.c.l.b16 %v5500
        %v5597 = vunpack.c.l.b16 %v5501
        %v5598 = vunpack.c.l.b16 %v5502
        %v5599 = vunpack.c.l.b16 %v5503
        %v5600 = vunpack.c.l.b16 %v5504
        %v5601 = vunpack.c.l.b16 %v5505
        %v5602 = vunpack.c.l.b16 %v5506
        %v5603 = vunpack.c.l.b16 %v5507
        %v5604 = vunpack.c.l.b16 %v5508
        %v5605 = vunpack.c.l.b16 %v5509
        %v5606 = vunpack.c.l.b16 %v5510
        %v5607 = vunpack.c.l.b16 %v5511
        %v5608 = vunpack.c.l.b16 %v5512
        %v5609 = vunpack.c.l.b16 %v5513
        %v5610 = vunpack.c.l.b16 %v5514
        %v5611 = vunpack.c.l.b16 %v5515
        %v5612 = vunpack.c.l.b16 %v5516
        %v5613 = vunpack.c.l.b16 %v5517
        %v5614 = vunpack.c.l.b16 %v5518
        %v5615 = vunpack.c.l.b16 %v5519
        %v5616 = vunpack.c.l.b16 %v5520
        %v5617 = vunpack.c.l.b16 %v5521
        %v5618 = vunpack.c.l.b16 %v5522
        %v5619 = vunpack.c.l.b16 %v5523
        %v5620 = vunpack.c.l.b16 %v5524
        %v5621 = vunpack.c.l.b16 %v5525
        %v5622 = vunpack.c.l.b16 %v5526
        %v5623 = vunpack.c.l.b16 %v5527
        %v5624 = vunpack.c.l.b16 %v5528
        %v5625 = vunpack.c.l.b16 %v5529
        %v5626 = vpack.c.b16 %v5579, %v5578
        %v5627 = vpack.c.b16 %v5581, %v5580
        %v5628 = vpack.c.b16 %v5583, %v5582
        %v5629 = vpack.c.b16 %v5585, %v5584
        %v5630 = vpack.c.b16 %v5587, %v5586
        %v5631 = vpack.c.b16 %v5589, %v5588
        %v5632 = vpack.c.b16 %v5591, %v5590
        %v5633 = vpack.c.b16 %v5593, %v5592
        %v5634 = vpack.c.b16 %v5595, %v5594
        %v5635 = vpack.c.b16 %v5597, %v5596
        %v5636 = vpack.c.b16 %v5599, %v5598
        %v5637 = vpack.c.b16 %v5601, %v5600
        %v5638 = vpack.c.b16 %v5603, %v5602
        %v5639 = vpack.c.b16 %v5605, %v5604
        %v5640 = vpack.c.b16 %v5607, %v5606
        %v5641 = vpack.c.b16 %v5609, %v5608
        %v5642 = vpack.c.b16 %v5611, %v5610
        %v5643 = vpack.c.b16 %v5613, %v5612
        %v5644 = vpack.c.b16 %v5615, %v5614
        %v5645 = vpack.c.b16 %v5617, %v5616
        %v5646 = vpack.c.b16 %v5619, %v5618
        %v5647 = vpack.c.b16 %v5621, %v5620
        %v5648 = vpack.c.b16 %v5623, %v5622
        %v5649 = vpack.c.b16 %v5625, %v5624
        %5674 = vmatprep.subr.bf16.mxu0 0
        %5675 = vmatpush1.bf16.msra.mxu0 %v5626
        %5676 = vmatprep.subr.bf16.mxu0 0
        %5677 = vmatpush1.bf16.msra.mxu0 %v5627
        %5678 = vmatprep.subr.bf16.mxu0 0
        %5679 = vmatpush1.bf16.msra.mxu0 %v5628
        %5680 = vmatprep.subr.bf16.mxu0 0
        %5681 = vmatpush1.bf16.msra.mxu0 %v5629
        %5682 = vmatprep.subr.bf16.mxu0 0
        %5683 = vmatpush1.bf16.msra.mxu0 %v5630
        %5684 = vmatprep.subr.bf16.mxu0 0
        %5685 = vmatpush1.bf16.msra.mxu0 %v5631
        %5686 = vmatprep.subr.bf16.mxu0 0
        %5687 = vmatpush1.bf16.msra.mxu0 %v5632
        %5688 = vmatprep.subr.bf16.mxu0 0
        %5689 = vmatpush1.bf16.msra.mxu0 %v5633
        %5690 = vmatprep.subr.bf16.mxu0 0
        %5691 = vmatpush1.bf16.msra.mxu0 %v5634
        %5692 = vmatprep.subr.bf16.mxu0 0
        %5693 = vmatpush1.bf16.msra.mxu0 %v5635
        %5694 = vmatprep.subr.bf16.mxu0 0
        %5695 = vmatpush1.bf16.msra.mxu0 %v5636
        %5696 = vmatprep.subr.bf16.mxu0 0
        %5697 = vmatpush1.bf16.msra.mxu0 %v5637
        %5698 = vmatprep.subr.bf16.mxu0 0
        %5699 = vmatpush1.bf16.msra.mxu0 %v5638
        %5700 = vmatprep.subr.bf16.mxu0 0
        %5701 = vmatpush1.bf16.msra.mxu0 %v5639
        %5702 = vmatprep.subr.bf16.mxu0 0
        %5703 = vmatpush1.bf16.msra.mxu0 %v5640
        %5704 = vmatprep.subr.bf16.mxu0 0
        %5705 = vmatpush1.bf16.msra.mxu0 %v5641
        %5706 = vmatprep.mubr.bf16.mxu0 %v4742
        %5707 = vmatmul.mubr.bf16.gmra.mrb[0].mxu0 %v4727
        %v5708 = vpop.f32.mrb[0].mxu0
        %v5709 = vadd.f32 %v2948, %v5708
        %v5710 = vpop.f32.mrb[0].mxu0
        %v5711 = vpop.f32.mrb[0].mxu0
        %v5712 = vadd.f32 %v2948, %v5711
        %v5713 = vpop.f32.mrb[0].mxu0
        %5714 = vmatprep.mubr.bf16.mxu0 %v4787
        %5715 = vmatmul.mubr.bf16.gmra.mrb[0].mxu0 %v4772
        %v5716 = vpop.f32.mrb[0].mxu0
        %v5717 = vadd.f32 %v2948, %v5716
        %v5718 = vpop.f32.mrb[0].mxu0
        %v5719 = vpop.f32.mrb[0].mxu0
        %v5720 = vadd.f32 %v2948, %v5719
        %v5721 = vpop.f32.mrb[0].mxu0
        %5722 = vmatprep.mubr.bf16.mxu0 %v4832
        %5723 = vmatmul.mubr.bf16.gmra.mrb[0].mxu0 %v4817
        %v5724 = vpop.f32.mrb[0].mxu0
        %v5725 = vadd.f32 %v2948, %v5724
        %v5726 = vpop.f32.mrb[0].mxu0
        %v5727 = vpop.f32.mrb[0].mxu0
        %v5728 = vadd.f32 %v2948, %v5727
        %v5729 = vpop.f32.mrb[0].mxu0
        %5730 = vmatprep.mubr.bf16.mxu0 %v4877
        %5731 = vmatmul.mubr.bf16.gmra.mrb[0].mxu0 %v4862
        %v5732 = vpop.f32.mrb[0].mxu0
        %v5733 = vadd.f32 %v2948, %v5732
        %v5734 = vpop.f32.mrb[0].mxu0
        %v5735 = vpop.f32.mrb[0].mxu0
        %v5736 = vadd.f32 %v2948, %v5735
        %v5737 = vpop.f32.mrb[0].mxu0
        %5738 = vmatprep.mubr.bf16.mxu0 %v4922
        %5739 = vmatmul.mubr.bf16.gmra.mrb[0].mxu0 %v4907
        %v5740 = vpop.f32.mrb[0].mxu0
        %v5741 = vadd.f32 %v2948, %v5740
        %v5742 = vpop.f32.mrb[0].mxu0
        %v5743 = vpop.f32.mrb[0].mxu0
        %v5744 = vadd.f32 %v2948, %v5743
        %v5745 = vpop.f32.mrb[0].mxu0
        %5746 = vmatprep.mubr.bf16.mxu0 %v4967
        %5747 = vmatmul.mubr.bf16.gmra.mrb[0].mxu0 %v4952
        %v5748 = vpop.f32.mrb[0].mxu0
        %v5749 = vadd.f32 %v2948, %v5748
        %v5750 = vpop.f32.mrb[0].mxu0
        %v5751 = vpop.f32.mrb[0].mxu0
        %v5752 = vadd.f32 %v2948, %v5751
        %v5753 = vpop.f32.mrb[0].mxu0
        %5754 = vmatprep.mubr.bf16.mxu0 %v5012
        %5755 = vmatmul.mubr.bf16.gmra.mrb[0].mxu0 %v4997
        %v5756 = vpop.f32.mrb[0].mxu0
        %v5757 = vadd.f32 %v2948, %v5756
        %v5758 = vpop.f32.mrb[0].mxu0
        %v5759 = vpop.f32.mrb[0].mxu0
        %v5760 = vadd.f32 %v2948, %v5759
        %v5761 = vpop.f32.mrb[0].mxu0
        %5762 = vmatprep.mubr.bf16.mxu0 %v5057
        %5763 = vmatmul.mubr.bf16.gmra.mrb[0].mxu0 %v5042
        %v5764 = vpop.f32.mrb[0].mxu0
        %v5765 = vadd.f32 %v2948, %v5764
        %v5766 = vpop.f32.mrb[0].mxu0
        %v5767 = vpop.f32.mrb[0].mxu0
        %v5768 = vadd.f32 %v2948, %v5767
        %v5769 = vpop.f32.mrb[0].mxu0
        %5770 = vmatprep.mubr.bf16.mxu0 %v5102
        %5771 = vmatmul.mubr.bf16.gmra.mrb[0].mxu0 %v5087
        %v5772 = vpop.f32.mrb[0].mxu0
        %v5773 = vadd.f32 %v2948, %v5772
        %v5774 = vpop.f32.mrb[0].mxu0
        %v5775 = vpop.f32.mrb[0].mxu0
        %v5776 = vadd.f32 %v2948, %v5775
        %v5777 = vpop.f32.mrb[0].mxu0
        %5778 = vmatprep.mubr.bf16.mxu0 %v5147
        %5779 = vmatmul.mubr.bf16.gmra.mrb[0].mxu0 %v5132
        %v5780 = vpop.f32.mrb[0].mxu0
        %v5781 = vadd.f32 %v2948, %v5780
        %v5782 = vpop.f32.mrb[0].mxu0
        %v5783 = vpop.f32.mrb[0].mxu0
        %v5784 = vadd.f32 %v2948, %v5783
        %v5785 = vpop.f32.mrb[0].mxu0
        %5786 = vmatprep.mubr.bf16.mxu0 %v5192
        %5787 = vmatmul.mubr.bf16.gmra.mrb[0].mxu0 %v5177
        %v5788 = vpop.f32.mrb[0].mxu0
        %v5789 = vadd.f32 %v2948, %v5788
        %v5790 = vpop.f32.mrb[0].mxu0
        %v5791 = vpop.f32.mrb[0].mxu0
        %v5792 = vadd.f32 %v2948, %v5791
        %v5793 = vpop.f32.mrb[0].mxu0
        %5794 = vmatprep.mubr.bf16.mxu0 %v5237
        %5795 = vmatmul.mubr.bf16.gmra.mrb[0].mxu0 %v5222
        %v5796 = vpop.f32.mrb[0].mxu0
        %v5797 = vadd.f32 %v2948, %v5796
        %v5798 = vpop.f32.mrb[0].mxu0
        %v5799 = vpop.f32.mrb[0].mxu0
        %v5800 = vadd.f32 %v2948, %v5799
        %v5801 = vpop.f32.mrb[0].mxu0
        %5802 = vmatprep.mubr.bf16.mxu0 %v5282
        %5803 = vmatmul.mubr.bf16.gmra.mrb[0].mxu0 %v5267
        %v5804 = vpop.f32.mrb[0].mxu0
        %v5805 = vadd.f32 %v2948, %v5804
        %v5806 = vpop.f32.mrb[0].mxu0
        %v5807 = vpop.f32.mrb[0].mxu0
        %v5808 = vadd.f32 %v2948, %v5807
        %v5809 = vpop.f32.mrb[0].mxu0
        %5810 = vmatprep.mubr.bf16.mxu0 %v5327
        %5811 = vmatmul.mubr.bf16.gmra.mrb[0].mxu0 %v5312
        %v5812 = vpop.f32.mrb[0].mxu0
        %v5813 = vadd.f32 %v2948, %v5812
        %v5814 = vpop.f32.mrb[0].mxu0
        %v5815 = vpop.f32.mrb[0].mxu0
        %v5816 = vadd.f32 %v2948, %v5815
        %v5817 = vpop.f32.mrb[0].mxu0
        %5818 = vmatprep.mubr.bf16.mxu0 %v5372
        %5819 = vmatmul.mubr.bf16.gmra.mrb[0].mxu0 %v5357
        %v5820 = vpop.f32.mrb[0].mxu0
        %v5821 = vadd.f32 %v2948, %v5820
        %v5822 = vpop.f32.mrb[0].mxu0
        %v5823 = vpop.f32.mrb[0].mxu0
        %v5824 = vadd.f32 %v2948, %v5823
        %v5825 = vpop.f32.mrb[0].mxu0
        %5826 = vmatprep.mubr.bf16.mxu0 %v5417
        %5827 = vmatmul.mubr.bf16.gmra.mrb[0].mxu0 %v5402
        %v5828 = vpop.f32.mrb[0].mxu0
        %v5829 = vadd.f32 %v2948, %v5828
        %v5830 = vpop.f32.mrb[0].mxu0
        %v5831 = vpop.f32.mrb[0].mxu0
        %v5832 = vadd.f32 %v2948, %v5831
        %v5833 = vpop.f32.mrb[0].mxu0
        %5834 = vdwg.mxu0
        %5835 = vmatprep.subr.bf16.mxu0 0
        %5836 = vmatpush1.bf16.msra.mxu0 %v5642
        %5837 = vmatprep.subr.bf16.mxu0 0
        %5838 = vmatpush1.bf16.msra.mxu0 %v5643
        %5839 = vmatprep.subr.bf16.mxu0 0
        %5840 = vmatpush1.bf16.msra.mxu0 %v5644
        %5841 = vmatprep.subr.bf16.mxu0 0
        %5842 = vmatpush1.bf16.msra.mxu0 %v5645
        %5843 = vmatprep.subr.bf16.mxu0 0
        %5844 = vmatpush1.bf16.msra.mxu0 %v5646
        %5845 = vmatprep.subr.bf16.mxu0 0
        %5846 = vmatpush1.bf16.msra.mxu0 %v5647
        %5847 = vmatprep.subr.bf16.mxu0 0
        %5848 = vmatpush1.bf16.msra.mxu0 %v5648
        %5849 = vmatprep.subr.bf16.mxu0 0
        %5850 = vmatpush1.bf16.msra.mxu0 %v5649
        %5851 = vmatprep.subr.bf16.mxu0 0
        %5852 = vmatpush1.bf16.msra.mxu0 0
        %5853 = vmatprep.subr.bf16.mxu0 0
        %5854 = vmatpush1.bf16.msra.mxu0 0
        %5855 = vmatprep.subr.bf16.mxu0 0
        %5856 = vmatpush1.bf16.msra.mxu0 0
        %5857 = vmatprep.subr.bf16.mxu0 0
        %5858 = vmatpush1.bf16.msra.mxu0 0
        %5859 = vmatprep.subr.bf16.mxu0 0
        %5860 = vmatpush1.bf16.msra.mxu0 0
        %5861 = vmatprep.subr.bf16.mxu0 0
        %5862 = vmatpush1.bf16.msra.mxu0 0
        %5863 = vmatprep.subr.bf16.mxu0 0
        %5864 = vmatpush1.bf16.msra.mxu0 0
        %5865 = vmatprep.subr.bf16.mxu0 0
        %5866 = vmatpush1.bf16.msra.mxu0 0
        %5867 = vmatprep.mubr.bf16.mxu0 0
        %5868 = vmatmul.mubr.bf16.gmra.mrb[0].mxu0 %v4757
        %v5869 = vpop.f32.mrb[0].mxu0
        %v5870 = vadd.f32 %v5709, %v5869
        %v5871 = vpop.f32.mrb[0].mxu0
        %v5872 = vpop.f32.mrb[0].mxu0
        %v5873 = vadd.f32 %v5712, %v5872
        %v5874 = vpop.f32.mrb[0].mxu0
        %5875 = vmatprep.mubr.bf16.mxu0 0
        %5876 = vmatmul.mubr.bf16.gmra.mrb[0].mxu0 %v4802
        %v5877 = vpop.f32.mrb[0].mxu0
        %v5878 = vadd.f32 %v5717, %v5877
        %v5879 = vpop.f32.mrb[0].mxu0
        %v5880 = vpop.f32.mrb[0].mxu0
        %v5881 = vadd.f32 %v5720, %v5880
        %v5882 = vpop.f32.mrb[0].mxu0
        %5883 = vmatprep.mubr.bf16.mxu0 0
        %5884 = vmatmul.mubr.bf16.gmra.mrb[0].mxu0 %v4847
        %v5885 = vpop.f32.mrb[0].mxu0
        %v5886 = vadd.f32 %v5725, %v5885
        %v5887 = vpop.f32.mrb[0].mxu0
        %v5888 = vpop.f32.mrb[0].mxu0
        %v5889 = vadd.f32 %v5728, %v5888
        %v5890 = vpop.f32.mrb[0].mxu0
        %5891 = vmatprep.mubr.bf16.mxu0 0
        %5892 = vmatmul.mubr.bf16.gmra.mrb[0].mxu0 %v4892
        %v5893 = vpop.f32.mrb[0].mxu0
        %v5894 = vadd.f32 %v5733, %v5893
        %v5895 = vpop.f32.mrb[0].mxu0
        %v5896 = vpop.f32.mrb[0].mxu0
        %v5897 = vadd.f32 %v5736, %v5896
        %v5898 = vpop.f32.mrb[0].mxu0
        %5899 = vmatprep.mubr.bf16.mxu0 0
        %5900 = vmatmul.mubr.bf16.gmra.mrb[0].mxu0 %v4937
        %v5901 = vpop.f32.mrb[0].mxu0
        %v5902 = vadd.f32 %v5741, %v5901
        %v5903 = vpop.f32.mrb[0].mxu0
        %v5904 = vpop.f32.mrb[0].mxu0
        %v5905 = vadd.f32 %v5744, %v5904
        %v5906 = vpop.f32.mrb[0].mxu0
        %5907 = vmatprep.mubr.bf16.mxu0 0
        %5908 = vmatmul.mubr.bf16.gmra.mrb[0].mxu0 %v4982
        %v5909 = vpop.f32.mrb[0].mxu0
        %v5910 = vadd.f32 %v5749, %v5909
        %v5911 = vpop.f32.mrb[0].mxu0
        %v5912 = vpop.f32.mrb[0].mxu0
        %v5913 = vadd.f32 %v5752, %v5912
        %v5914 = vpop.f32.mrb[0].mxu0
        %5915 = vmatprep.mubr.bf16.mxu0 0
        %5916 = vmatmul.mubr.bf16.gmra.mrb[0].mxu0 %v5027
        %v5917 = vpop.f32.mrb[0].mxu0
        %v5918 = vadd.f32 %v5757, %v5917
        %v5919 = vpop.f32.mrb[0].mxu0
        %v5920 = vpop.f32.mrb[0].mxu0
        %v5921 = vadd.f32 %v5760, %v5920
        %v5922 = vpop.f32.mrb[0].mxu0
        %5923 = vmatprep.mubr.bf16.mxu0 0
        %5924 = vmatmul.mubr.bf16.gmra.mrb[0].mxu0 %v5072
        %v5925 = vpop.f32.mrb[0].mxu0
        %v5926 = vadd.f32 %v5765, %v5925
        %v5927 = vpop.f32.mrb[0].mxu0
        %v5928 = vpop.f32.mrb[0].mxu0
        %v5929 = vadd.f32 %v5768, %v5928
        %v5930 = vpop.f32.mrb[0].mxu0
        %5931 = vmatprep.mubr.bf16.mxu0 0
        %5932 = vmatmul.mubr.bf16.gmra.mrb[0].mxu0 %v5117
        %v5933 = vpop.f32.mrb[0].mxu0
        %v5934 = vadd.f32 %v5773, %v5933
        %v5935 = vpop.f32.mrb[0].mxu0
        %v5936 = vpop.f32.mrb[0].mxu0
        %v5937 = vadd.f32 %v5776, %v5936
        %v5938 = vpop.f32.mrb[0].mxu0
        %5939 = vmatprep.mubr.bf16.mxu0 0
        %5940 = vmatmul.mubr.bf16.gmra.mrb[0].mxu0 %v5162
        %v5941 = vpop.f32.mrb[0].mxu0
        %v5942 = vadd.f32 %v5781, %v5941
        %v5943 = vpop.f32.mrb[0].mxu0
        %v5944 = vpop.f32.mrb[0].mxu0
        %v5945 = vadd.f32 %v5784, %v5944
        %v5946 = vpop.f32.mrb[0].mxu0
        %5947 = vmatprep.mubr.bf16.mxu0 0
        %5948 = vmatmul.mubr.bf16.gmra.mrb[0].mxu0 %v5207
        %v5949 = vpop.f32.mrb[0].mxu0
        %v5950 = vadd.f32 %v5789, %v5949
        %v5951 = vpop.f32.mrb[0].mxu0
        %v5952 = vpop.f32.mrb[0].mxu0
        %v5953 = vadd.f32 %v5792, %v5952
        %v5954 = vpop.f32.mrb[0].mxu0
        %5955 = vmatprep.mubr.bf16.mxu0 0
        %5956 = vmatmul.mubr.bf16.gmra.mrb[0].mxu0 %v5252
        %v5957 = vpop.f32.mrb[0].mxu0
        %v5958 = vadd.f32 %v5797, %v5957
        %v5959 = vpop.f32.mrb[0].mxu0
        %v5960 = vpop.f32.mrb[0].mxu0
        %v5961 = vadd.f32 %v5800, %v5960
        %v5962 = vpop.f32.mrb[0].mxu0
        %5963 = vmatprep.mubr.bf16.mxu0 0
        %5964 = vmatmul.mubr.bf16.gmra.mrb[0].mxu0 %v5297
        %v5965 = vpop.f32.mrb[0].mxu0
        %v5966 = vadd.f32 %v5805, %v5965
        %v5967 = vpop.f32.mrb[0].mxu0
        %v5968 = vpop.f32.mrb[0].mxu0
        %v5969 = vadd.f32 %v5808, %v5968
        %v5970 = vpop.f32.mrb[0].mxu0
        %5971 = vmatprep.mubr.bf16.mxu0 0
        %5972 = vmatmul.mubr.bf16.gmra.mrb[0].mxu0 %v5342
        %v5973 = vpop.f32.mrb[0].mxu0
        %v5974 = vadd.f32 %v5813, %v5973
        %v5975 = vpop.f32.mrb[0].mxu0
        %v5976 = vpop.f32.mrb[0].mxu0
        %v5977 = vadd.f32 %v5816, %v5976
        %v5978 = vpop.f32.mrb[0].mxu0
        %5979 = vmatprep.mubr.bf16.mxu0 0
        %5980 = vmatmul.mubr.bf16.gmra.mrb[0].mxu0 %v5387
        %v5981 = vpop.f32.mrb[0].mxu0
        %v5982 = vadd.f32 %v5821, %v5981
        %v5983 = vpop.f32.mrb[0].mxu0
        %v5984 = vpop.f32.mrb[0].mxu0
        %v5985 = vadd.f32 %v5824, %v5984
        %v5986 = vpop.f32.mrb[0].mxu0
        %5987 = vmatprep.mubr.bf16.mxu0 0
        %5988 = vmatmul.mubr.bf16.gmra.mrb[0].mxu0 %v5432
        %v5989 = vpop.f32.mrb[0].mxu0
        %v5990 = vadd.f32 %v5829, %v5989
        %v5991 = vpop.f32.mrb[0].mxu0
        %v5992 = vpop.f32.mrb[0].mxu0
        %v5993 = vadd.f32 %v5832, %v5992
        %v5994 = vpop.f32.mrb[0].mxu0
        %5995 = vdwg.mxu0
        %s5996 = scalar_lea.vmem %s296, 16 [#allocation12]
        %5997 = vst [vmem:[%s5996] sm:$0xff] %v5870
        %5998 = vst [vmem:[%s5996 + $0x8] sm:$0xff] %v5873
        %5999 = vst [vmem:[%s5996 + $0x20] sm:$0xff] %v5878
        %6000 = vst [vmem:[%s5996 + $0x28] sm:$0xff] %v5881
        %6001 = vst [vmem:[%s5996 + $0x40] sm:$0xff] %v5886
        %6002 = vst [vmem:[%s5996 + $0x48] sm:$0xff] %v5889
        %6003 = vst [vmem:[%s5996 + $0x60] sm:$0xff] %v5894
        %6004 = vst [vmem:[%s5996 + $0x68] sm:$0xff] %v5897
        %6005 = vst [vmem:[%s5996 + $0x80] sm:$0xff] %v5902
        %6006 = vst [vmem:[%s5996 + $0x88] sm:$0xff] %v5905
        %6007 = vst [vmem:[%s5996 + $0xa0] sm:$0xff] %v5910
        %6008 = vst [vmem:[%s5996 + $0xa8] sm:$0xff] %v5913
        %6009 = vst [vmem:[%s5996 + $0xc0] sm:$0xff] %v5918
        %6010 = vst [vmem:[%s5996 + $0xc8] sm:$0xff] %v5921
        %6011 = vst [vmem:[%s5996 + $0xe0] sm:$0xff] %v5926
        %6012 = vst [vmem:[%s5996 + $0xe8] sm:$0xff] %v5929
        %6013 = vst [vmem:[%s5996 + $0x100] sm:$0xff] %v5934
        %6014 = vst [vmem:[%s5996 + $0x108] sm:$0xff] %v5937
        %6015 = vst [vmem:[%s5996 + $0x120] sm:$0xff] %v5942
        %6016 = vst [vmem:[%s5996 + $0x128] sm:$0xff] %v5945
        %6017 = vst [vmem:[%s5996 + $0x140] sm:$0xff] %v5950
        %6018 = vst [vmem:[%s5996 + $0x148] sm:$0xff] %v5953
        %6019 = vst [vmem:[%s5996 + $0x160] sm:$0xff] %v5958
        %6020 = vst [vmem:[%s5996 + $0x168] sm:$0xff] %v5961
        %6021 = vst [vmem:[%s5996 + $0x180] sm:$0xff] %v5966
        %6022 = vst [vmem:[%s5996 + $0x188] sm:$0xff] %v5969
        %6023 = vst [vmem:[%s5996 + $0x1a0] sm:$0xff] %v5974
        %6024 = vst [vmem:[%s5996 + $0x1a8] sm:$0xff] %v5977
        %6025 = vst [vmem:[%s5996 + $0x1c0] sm:$0xff] %v5982
        %6026 = vst [vmem:[%s5996 + $0x1c8] sm:$0xff] %v5985
        %6027 = vst [vmem:[%s5996 + $0x1e0] sm:$0xff] %v5990
        %6028 = vst [vmem:[%s5996 + $0x1e8] sm:$0xff] %v5993
        %s6029 = sand.u32 %s142, 1
        %s6030 = scalar_lea.sflag [#allocation5], %s6029
        %s6031 = sand.u32 %s142, 1
        %s6032 = smul.addr %s6031, 512
        %s6033 = scalar_lea.vmem [#allocation12], %s6032
        // Predicated region
        $region61: #{decoder_block_forward.1} parent=39 // pred_check
          %p6034 = pneg %p152
        $region62: #{decoder_block_forward.1} parent=39 // pred_check_branch
          %6036 = sbr.rel (%p6034) target = $region64
        $region63: #{decoder_block_forward.1} parent=39 // pred_region
          %s6038 = ssub.s32 8192, 8192
          %6039 = vsyncadd %s6030, %s6038
          %s6040 = smul.addr %s24, 64
          %s6041 = smul.addr %s6040, 128
          %s6042 = scalar_lea.hbm %s5, %s6041
          %s6043 = sshll.u32 %s6033, 4
          %s6044 = int_to_ptr.vmem [resolvable:$true] %s6043
          %6049 = dma.vmem_to_hbm [thread:$0]  %s6044, 8192, %s6042, %s6030, 128, 128, 8
        $region64: #{decoder_block_forward.1} parent=39 // pred_fallthru
          _
      $region40: #{decoder_block_forward.1} parent=5 // pred_fallthru
        _
      %p6050 = scmp.le.s32.totalorder 2, %s19
      // Predicated region
      $region65: #{decoder_block_forward.1} parent=5 // pred_check
        %p6051 = pneg %p6050
      $region66: #{decoder_block_forward.1} parent=5 // pred_check_branch
        %6053 = sbr.rel (%p6051) target = $region68
      $region67: #{decoder_block_forward.1} parent=5 // pred_region
        %s6054 = ssub.s32 %s19, 2
        // Predicated region
        $region69: #{decoder_block_forward.1} parent=67 // pred_check
          %p6055 = pneg %p158
        $region70: #{decoder_block_forward.1} parent=67 // pred_check_branch
          %6057 = sbr.rel (%p6055) target = $region72
        $region71: #{decoder_block_forward.1} parent=67 // pred_region
          %s6058 = sand.u32 %s143, 1
          %s6059 = scalar_lea.sflag [#allocation5], %s6058
          %s6060 = sand.u32 %s143, 1
          %s6061 = smul.addr %s6060, 512
          %s6062 = scalar_lea.vmem [#allocation12], %s6061
          %6063 = dma.done %s6059, 8192
        $region72: #{decoder_block_forward.1} parent=67 // pred_fallthru
          _
      $region68: #{decoder_block_forward.1} parent=5 // pred_fallthru
        _
    $region6: #{decoder_block_forward.1} parent=1 // loop_footer
      %s23 = sadd.s32 1, %s19
    $region7: #{decoder_block_forward.1} parent=1 // loop_footer_branch
      %18 = sbr.rel target = $region3
    $region8: #{decoder_block_forward.1} parent=1 // loop_exit
      _
    %6064 = vsyncpa [#allocation4], 1
    %s6065 = scalar_lea.sflag [#allocation4], 1
    %6066 = vsyncpa %s6065, 1
    %6067 = vsyncpa [#allocation7], 1
    %6068 = vsyncpa [#allocation10], 1
    %6069 = vsyncpa [#allocation5], 1
    %s6070 = scalar_lea.sflag [#allocation5], 1
    %6071 = vsyncpa %s6070, 1

</llo_original>
